<compile_context>
chip_gen: v5e
topology: v5e:2x2
jax: 0.10.0
libtpu: 0.0.40
codegen_flags: <defaults>
</compile_context>

<pallas_src>
import numpy as np
import jax
import jax.numpy as jnp
from jax import lax
from jax.experimental import pallas as pl
from jax.experimental.pallas import tpu as pltpu


def _round_up(a, m):
    return ((a + m - 1) // m) * m


# ----------------------------------------------------------------------------
# Static token-mask construction (matches get_token_mask_from_resolution_rectangle)
# ----------------------------------------------------------------------------
def get_token_mask_from_resolution_rectangle(resolution, filter_ratio=1.0):
    max_res = int(max(resolution) / 2 * filter_ratio)
    freqs = []
    for i, res in enumerate(resolution):
        if i == 0:
            freqs.append(res * np.fft.rfftfreq(res))
        else:
            freqs.append(res * np.fft.fftfreq(res))
    grids = np.meshgrid(*freqs, indexing="ij")  # torch.meshgrid default is 'ij'
    sq = sum(g ** 2 for g in grids)
    return sq <= max_res ** 2


# ----------------------------------------------------------------------------
# Pallas kernel: filter_generator + filter_reconstruction + spectral multiply
# ----------------------------------------------------------------------------
def _make_spectral_kernel(hidden_dim, padded_dim, ln_eps):
    D = int(hidden_dim)
    Dp = int(padded_dim)
    # NOTE: the module passes n_tokens as ComplexLN's eps -- kept on purpose.
    eps = float(ln_eps)
    inv_d = 1.0 / D
    inv_dm1 = 1.0 / max(D - 1, 1)
    TINY = 1e-30

    def kernel(xr_ref, xi_ref, filt_ref,
               lnw_ref, lnb_ref,
               w1_ref, b1_ref, modb_ref,
               w2_ref, b2_ref,
               or_ref, oi_ref):
        xr = xr_ref[...]                       # (tile_t, Dp) f32; padded channels are 0
        xi = xi_ref[...]

        # ---- ComplexLN over the true D channels (torch.std_mean, unbiased) ----
        # Sums over the padded slab equal sums over the real D channels (pads are 0).
        mr = jnp.sum(xr, axis=-1, keepdims=True) * inv_d
        mi = jnp.sum(xi, axis=-1, keepdims=True) * inv_d
        sum_sq = jnp.sum(xr * xr + xi * xi, axis=-1, keepdims=True)
        var = (sum_sq - D * (mr * mr + mi * mi)) * inv_dm1
        std = jnp.sqrt(jnp.maximum(var, 0.0))
        inv_denom = pl.reciprocal(eps + std, approx=True)      # EUP, not VALU divide
        scale = inv_denom * lnw_ref[0]         # LN weight is 0 on padded channels
        n = jnp.concatenate([(xr - mr) * scale, (xi - mi) * scale], axis=-1) + lnb_ref[0]

        # ---- ComplexLinearDDP #1: one fused (2Dp,2Dp) bf16 MXU matmul ----
        y = jnp.dot(n.astype(jnp.bfloat16), w1_ref[...],
                    preferred_element_type=jnp.float32) + b1_ref[0]
        yr = y[:, :Dp]
        yi = y[:, Dp:]

        # ---- ModReLU: polar(relu(|y| + b), angle(y)) via rsqrt ----
        # (exact-zero |y| yields 0 instead of (relu(b), 0); zero-angle selects dropped)
        mag2 = yr * yr + yi * yi
        inv_mag = lax.rsqrt(jnp.maximum(mag2, TINY))
        r = jnp.maximum(mag2 * inv_mag + modb_ref[0], 0.0)
        rc = r * inv_mag
        z = jnp.concatenate([rc * yr, rc * yi], axis=-1)

        # ---- ComplexLinearDDP #2 ----
        u = jnp.dot(z.astype(jnp.bfloat16), w2_ref[...],
                    preferred_element_type=jnp.float32) + b2_ref[0]
        ur = u[:, :Dp]
        ui = u[:, Dp:]

        # ---- filter_reconstruction + complex multiply ----
        # polar(sigmoid(|u|+mb), angle(u)+pb) with pb pre-expanded to (cos pb, sin pb)
        filt = filt_ref[...].astype(jnp.float32)   # (tile_t, 3*Dp) packed mb|cos|sin
        magb = filt[:, :Dp]
        cpb = filt[:, Dp:2 * Dp]
        spb = filt[:, 2 * Dp:]
        umag2 = ur * ur + ui * ui
        inv_umag = lax.rsqrt(jnp.maximum(umag2, TINY))
        sig = jax.nn.sigmoid(umag2 * inv_umag + magb)
        sc = sig * inv_umag
        ucos = sc * ur
        usin = sc * ui
        convr = ucos * cpb - usin * spb
        convi = ucos * spb + usin * cpb

        # Two aligned, lane-dense Dp-wide stores (no packed concat temporary).
        or_ref[...] = xr * convr - xi * convi
        oi_ref[...] = xr * convi + xi * convr

    return kernel


def _spectral_tile_plan(S, Dp, want_tile=1024, budget_bytes=40 << 20):
    """Pick a token tile and vmem limit that fit ~40 MiB (safe on v7x's 64 MiB)."""
    # TODO(synk): for very large hidden_dim on v7x, single-buffer the constant
    # weight blocks (pipeline_mode=pl.Buffered(1)) to reclaim the second buffer.
    w_bytes = 2 * ((2 * Dp) * (2 * Dp) * 2) * 2      # two bf16 weight blocks, 2 buffers

    def stream_bytes(t):
        xio = 4 * t * Dp * 4 * 2                      # xr, xi, out_r, out_i f32, 2 buffers
        flt = t * 3 * Dp * 2 * 2                      # bf16 filter slab, 2 buffers
        return xio + flt

    tile = max(8, min(_round_up(int(want_tile), 8), _round_up(S, 8)))
    while tile > 8 and 2 * (stream_bytes(tile) + w_bytes) > budget_bytes:
        tile = max(8, _round_up(tile // 2, 8))
    est = stream_bytes(tile) + w_bytes
    vmem_limit = int(min(max(2 * est + (8 << 20), 24 << 20), budget_bytes))
    return tile, vmem_limit


def spectral_filter(xr, xi, params, want_tile=1024):
    """xr, xi: (B, S, Dp) f32 real/imag slabs over ALL spectral tokens."""
    B, S, Dp = xr.shape
    D = params["hidden_dim"]
    filt = params["filt"]                              # (S, 3*Dp) bf16

    tile_t, vmem_limit = _spectral_tile_plan(S, Dp, want_tile)
    S_pad = _round_up(S, tile_t)
    if S_pad != S:
        pt = S_pad - S
        xr = jnp.pad(xr, ((0, 0), (0, pt), (0, 0)))
        xi = jnp.pad(xi, ((0, 0), (0, pt), (0, 0)))
        filt = jnp.pad(filt, ((0, pt), (0, 0)))
    n_tiles = S_pad // tile_t

    kernel = _make_spectral_kernel(D, Dp, params["ln_eps"])

    # Grid = (token_tiles, B), batch innermost: the filter slab (indexed by t only)
    # and the constant weight blocks stay resident across the inner B steps.
    x_spec = pl.BlockSpec((None, tile_t, Dp), lambda t, b: (b, t, 0))
    filt_spec = pl.BlockSpec((tile_t, 3 * Dp), lambda t, b: (t, 0))
    vecD_spec = pl.BlockSpec((1, Dp), lambda t, b: (0, 0))
    vec2D_spec = pl.BlockSpec((1, 2 * Dp), lambda t, b: (0, 0))
    mat_spec = pl.BlockSpec((2 * Dp, 2 * Dp), lambda t, b: (0, 0))

    out_r, out_i = pl.pallas_call(
        kernel,
        out_shape=(jax.ShapeDtypeStruct((B, S_pad, Dp), jnp.float32),
                   jax.ShapeDtypeStruct((B, S_pad, Dp), jnp.float32)),
        grid_spec=pltpu.PrefetchScalarGridSpec(
            num_scalar_prefetch=0,
            grid=(n_tiles, B),
            in_specs=[x_spec, x_spec, filt_spec,
                      vecD_spec, vec2D_spec,
                      mat_spec, vec2D_spec, vecD_spec,
                      mat_spec, vec2D_spec],
            out_specs=(x_spec, x_spec)),
        compiler_params=pltpu.CompilerParams(
            dimension_semantics=("parallel", "parallel"),
            vmem_limit_bytes=vmem_limit),
    )(xr, xi, filt,
      params["ln_w"], params["ln_b"],
      params["w1_block"], params["b1"], params["mod_b"],
      params["w2_block"], params["b2"])

    return out_r[:, :S], out_i[:, :S]


# ----------------------------------------------------------------------------
# Pallas kernel: output mixer (linear over the channel dim, lane-dense)
# ----------------------------------------------------------------------------
def _mixer_kernel(x_ref, w_ref, b_ref, o_ref):
    o_ref[...] = (jnp.dot(x_ref[...].astype(jnp.bfloat16), w_ref[...],
                          preferred_element_type=jnp.float32) + b_ref[0])


def output_mixer(x2d, w_t_bf16, b, D, Dp, tile_m=2048):
    M = x2d.shape[0]
    if Dp != D:
        x2d = jnp.pad(x2d, ((0, 0), (0, Dp - D)))
    tile_m = min(int(tile_m), _round_up(M, 8))
    M_pad = _round_up(M, tile_m)
    if M_pad != M:
        x2d = jnp.pad(x2d, ((0, M_pad - M), (0, 0)))

    est = 2 * (2 * tile_m * Dp * 4) + 2 * (Dp * Dp * 2) + (1 << 16)
    vmem_limit = int(min(max(2 * est + (8 << 20), 24 << 20), 40 << 20))

    out = pl.pallas_call(
        _mixer_kernel,
        out_shape=jax.ShapeDtypeStruct((M_pad, Dp), jnp.float32),
        grid_spec=pltpu.PrefetchScalarGridSpec(
            num_scalar_prefetch=0,
            grid=(M_pad // tile_m,),
            in_specs=[pl.BlockSpec((tile_m, Dp), lambda i: (i, 0)),
                      pl.BlockSpec((Dp, Dp), lambda i: (0, 0)),
                      pl.BlockSpec((1, Dp), lambda i: (0, 0))],
            out_specs=pl.BlockSpec((tile_m, Dp), lambda i: (i, 0))),
        compiler_params=pltpu.CompilerParams(
            dimension_semantics=("parallel",),
            vmem_limit_bytes=vmem_limit),
    )(x2d, w_t_bf16, b)
    return out[:M, :D]


# ----------------------------------------------------------------------------
# Full forward (FFTs as XLA glue; mask is baked into the dense filter params)
# ----------------------------------------------------------------------------
def ds_conv_spectral_forward(x, params):
    """x: (B, spatial..., hidden_dim) channels-last real input."""
    B = x.shape[0]
    D = params["hidden_dim"]
    Dp = params["padded_dim"]
    spatial_dims = tuple(range(1, x.ndim - 1))[::-1]          # e.g. (2, 1): rfft on axis 1

    x_ft = jnp.fft.rfftn(x, axes=spatial_dims, norm="ortho")  # (B, H//2+1, W, D) c64
    Hf, Wf = x_ft.shape[1], x_ft.shape[2]
    S = Hf * Wf

    # Dense token layout: unmasked tokens get conv == 0 (params scattered at init),
    # which reproduces the reference's zeros + masked scatter exactly, with no
    # gather/scatter/zeros traffic at runtime.
    xr = jnp.real(x_ft).reshape(B, S, D)
    xi = jnp.imag(x_ft).reshape(B, S, D)
    if Dp != D:
        xr = jnp.pad(xr, ((0, 0), (0, 0), (0, Dp - D)))
        xi = jnp.pad(xi, ((0, 0), (0, 0), (0, Dp - D)))

    out_r, out_i = spectral_filter(xr, xi, params)             # (B, S, Dp) each
    y = lax.complex(out_r[..., :D], out_i[..., :D]).reshape(B, Hf, Wf, D)
    xs = jnp.fft.irfftn(y, axes=spatial_dims, norm="ortho")    # (B, H, W, D) f32

    # TODO(synk): SigmaNormLinear is not defined in the provided source; a plain
    # Linear over the channel dim is used as the output mixer.
    out2d = output_mixer(xs.reshape(-1, D), params["mix_w_t"], params["mix_b"], D, Dp)
    return out2d.reshape(xs.shape)


# ----------------------------------------------------------------------------
# Deterministic parameter init (shapes per module __init__), stored pre-fused,
# zero-padded to the lane-dense channel width Dp = round_up(D, 128).
# ----------------------------------------------------------------------------
def init_params(key, hidden_dim, mask):
    D = int(hidden_dim)
    Dp = _round_up(D, 128)
    Hf, Wf = mask.shape
    S = Hf * Wf
    rows, cols = np.nonzero(mask)        # row-major token order == masked_select order
    T = int(rows.size)                    # n_tokens

    ks = jax.random.split(key, 13)
    scale = 1.0 / np.sqrt(D)

    # ComplexLN(hidden_dim, eps=n_tokens): weight 1 on real channels, 0 on padding.
    if Dp != D:
        ln_w = jnp.concatenate([jnp.ones((1, D), jnp.float32),
                                jnp.zeros((1, Dp - D), jnp.float32)], axis=1)
    else:
        ln_w = jnp.ones((1, D), jnp.float32)
    ln_b = jnp.zeros((1, 2 * Dp), jnp.float32)

    def cplx_block(wr, wi):
        # packed [nr | ni] @ Wb == complex (n @ W^T):  Wb = [[Wr^T, Wi^T], [-Wi^T, Wr^T]]
        wr_p = jnp.zeros((Dp, Dp), jnp.float32).at[:D, :D].set(wr)
        wi_p = jnp.zeros((Dp, Dp), jnp.float32).at[:D, :D].set(wi)
        top = jnp.concatenate([wr_p.T, wi_p.T], axis=1)
        bot = jnp.concatenate([-wi_p.T, wr_p.T], axis=1)
        return jnp.concatenate([top, bot], axis=0).astype(jnp.bfloat16)

    def cplx_bias(br, bi):
        out = jnp.zeros((1, 2 * Dp), jnp.float32)
        return out.at[:, :D].set(br).at[:, Dp:Dp + D].set(bi)

    def real_vec(v):
        return jnp.zeros((1, Dp), jnp.float32).at[:, :D].set(v)

    w1r = jax.random.normal(ks[0], (D, D), jnp.float32) * scale
    w1i = jax.random.normal(ks[1], (D, D), jnp.float32) * scale
    b1r = jax.random.normal(ks[2], (1, D), jnp.float32) * scale
    b1i = jax.random.normal(ks[3], (1, D), jnp.float32) * scale
    w2r = jax.random.normal(ks[4], (D, D), jnp.float32) * scale
    w2i = jax.random.normal(ks[5], (D, D), jnp.float32) * scale
    b2r = jax.random.normal(ks[6], (1, D), jnp.float32) * scale
    b2i = jax.random.normal(ks[7], (1, D), jnp.float32) * scale
    mod_b = 0.02 * jax.random.normal(ks[8], (1, D), jnp.float32)

    # temp_conv = randn(1, n_tokens, D) complex; mag_bias = |tc|, phase_bias = angle(tc).
    # Pack (mag_bias | cos(pb) | sin(pb)) into ONE bf16 slab scattered over the dense
    # spectral-token grid (one-time, static); unmasked tokens stay zero -> conv == 0.
    tc_r = jax.random.normal(ks[9], (T, D), jnp.float32)
    tc_i = jax.random.normal(ks[10], (T, D), jnp.float32)
    mag_bias = jnp.sqrt(tc_r * tc_r + tc_i * tc_i)
    safe = jnp.maximum(mag_bias, 1e-12)
    cos_pb = tc_r / safe
    sin_pb = tc_i / safe
    flat = jnp.asarray(rows * Wf + cols, dtype=jnp.int32)
    slab = jnp.zeros((S, 3 * Dp), jnp.float32)
    slab = slab.at[flat, 0:D].set(mag_bias)
    slab = slab.at[flat, Dp:Dp + D].set(cos_pb)
    slab = slab.at[flat, 2 * Dp:2 * Dp + D].set(sin_pb)
    filt = slab.astype(jnp.bfloat16)

    # Output mixer (plain Linear; see TODO above).
    mix_w = jax.random.normal(ks[11], (D, D), jnp.float32) * scale
    mix_b = jax.random.normal(ks[12], (1, D), jnp.float32) * scale
    mix_w_t = jnp.zeros((Dp, Dp), jnp.float32).at[:D, :D].set(mix_w.T).astype(jnp.bfloat16)

    return dict(
        hidden_dim=D, padded_dim=Dp,
        # NOTE: the module passes n_tokens as ComplexLN's eps -- reproduced on purpose.
        ln_eps=float(T),
        ln_w=ln_w, ln_b=ln_b,
        w1_block=cplx_block(w1r, w1i), b1=cplx_bias(b1r, b1i),
        mod_b=real_vec(mod_b),
        w2_block=cplx_block(w2r, w2i), b2=cplx_bias(b2r, b2i),
        filt=filt,
        mix_w_t=mix_w_t, mix_b=real_vec(mix_b),
    )


if __name__ == "__main__":
    B, H, W, D = 2, 16, 16, 32
    resolution = (H, W)

    mask = get_token_mask_from_resolution_rectangle(resolution, 1.0)   # (H//2+1, W)

    key = jax.random.PRNGKey(0)
    kx, kp = jax.random.split(key)
    x = jax.random.normal(kx, (B, H, W, D), jnp.float32)               # channels-last
    params = init_params(kp, D, mask)

    # Close over params so the static ln_eps stays a Python float under jit.
    fwd = jax.jit(lambda v: ds_conv_spectral_forward(v, params))
    out = fwd(x)
    jax.block_until_ready(out)
    assert out.shape == (B, H, W, D) and out.dtype == jnp.float32
    assert bool(jnp.all(jnp.isfinite(out)))
    print("KERNEL_OK")
</pallas_src>

<mosaic_0001>
module attributes {stable_mosaic.version = 11 : i64} {
  func.func @kernel(%arg0: i32, %arg1: i32, %arg2: memref<1x144x128xf32, #tpu.memory_space<vmem>>, %arg3: memref<1x144x128xf32, #tpu.memory_space<vmem>>, %arg4: memref<144x384xbf16, #tpu.memory_space<vmem>>, %arg5: memref<1x128xf32, #tpu.memory_space<vmem>>, %arg6: memref<1x256xf32, #tpu.memory_space<vmem>>, %arg7: memref<256x256xbf16, #tpu.memory_space<vmem>>, %arg8: memref<1x256xf32, #tpu.memory_space<vmem>>, %arg9: memref<1x128xf32, #tpu.memory_space<vmem>>, %arg10: memref<256x256xbf16, #tpu.memory_space<vmem>>, %arg11: memref<1x256xf32, #tpu.memory_space<vmem>>, %arg12: memref<1x144x128xf32, #tpu.memory_space<vmem>>, %arg13: memref<1x144x128xf32, #tpu.memory_space<vmem>>) attributes {dimension_semantics = [#tpu.dimension_semantics<parallel>, #tpu.dimension_semantics<parallel>], iteration_bounds = array<i64: 1, 2>, scalar_prefetch = 0 : i64, scratch_operands = 0 : i64, tpu.core_type = #tpu.core_type<tc>, window_params = [{transform_indices = @transform_0, window_bounds = array<i64: 1, 144, 128>}, {transform_indices = @transform_1, window_bounds = array<i64: 1, 144, 128>}, {transform_indices = @transform_2, window_bounds = array<i64: 144, 384>}, {pipeline_mode = #tpu.pipeline_mode<synchronous>, transform_indices = @transform_3, window_bounds = array<i64: 1, 128>}, {pipeline_mode = #tpu.pipeline_mode<synchronous>, transform_indices = @transform_4, window_bounds = array<i64: 1, 256>}, {pipeline_mode = #tpu.pipeline_mode<synchronous>, transform_indices = @transform_5, window_bounds = array<i64: 256, 256>}, {pipeline_mode = #tpu.pipeline_mode<synchronous>, transform_indices = @transform_6, window_bounds = array<i64: 1, 256>}, {pipeline_mode = #tpu.pipeline_mode<synchronous>, transform_indices = @transform_7, window_bounds = array<i64: 1, 128>}, {pipeline_mode = #tpu.pipeline_mode<synchronous>, transform_indices = @transform_8, window_bounds = array<i64: 256, 256>}, {pipeline_mode = #tpu.pipeline_mode<synchronous>, transform_indices = @transform_9, window_bounds = array<i64: 1, 256>}, {transform_indices = @transform_10, window_bounds = array<i64: 1, 144, 128>}, {transform_indices = @transform_11, window_bounds = array<i64: 1, 144, 128>}]} {
    %c0 = arith.constant 0 : index
    %c0_0 = arith.constant 0 : index
    %c0_1 = arith.constant 0 : index
    %0 = vector.load %arg2[%c0, %c0_0, %c0_1] : memref<1x144x128xf32, #tpu.memory_space<vmem>>, vector<1x144x128xf32>
    %1 = vector.shape_cast %0 : vector<1x144x128xf32> to vector<144x128xf32>
    %c0_2 = arith.constant 0 : index
    %c0_3 = arith.constant 0 : index
    %c0_4 = arith.constant 0 : index
    %2 = vector.load %arg3[%c0_2, %c0_3, %c0_4] : memref<1x144x128xf32, #tpu.memory_space<vmem>>, vector<1x144x128xf32>
    %3 = vector.shape_cast %2 : vector<1x144x128xf32> to vector<144x128xf32>
    %cst = arith.constant dense<0.000000e+00> : vector<144xf32>
    %4 = vector.multi_reduction <add>, %1, %cst [1] : vector<144x128xf32> to vector<144xf32>
    %5 = vector.shape_cast %4 : vector<144xf32> to vector<144x1xf32>
    %cst_5 = arith.constant 3.125000e-02 : f32
    %6 = vector.broadcast %cst_5 : f32 to vector<144x1xf32>
    %7 = arith.mulf %5, %6 : vector<144x1xf32>
    %cst_6 = arith.constant dense<0.000000e+00> : vector<144xf32>
    %8 = vector.multi_reduction <add>, %3, %cst_6 [1] : vector<144x128xf32> to vector<144xf32>
    %9 = vector.shape_cast %8 : vector<144xf32> to vector<144x1xf32>
    %cst_7 = arith.constant 3.125000e-02 : f32
    %10 = vector.broadcast %cst_7 : f32 to vector<144x1xf32>
    %11 = arith.mulf %9, %10 : vector<144x1xf32>
    %12 = arith.mulf %1, %1 : vector<144x128xf32>
    %13 = arith.mulf %3, %3 : vector<144x128xf32>
    %14 = arith.addf %12, %13 : vector<144x128xf32>
    %cst_8 = arith.constant dense<0.000000e+00> : vector<144xf32>
    %15 = vector.multi_reduction <add>, %14, %cst_8 [1] : vector<144x128xf32> to vector<144xf32>
    %16 = vector.shape_cast %15 : vector<144xf32> to vector<144x1xf32>
    %17 = arith.mulf %7, %7 : vector<144x1xf32>
    %18 = arith.mulf %11, %11 : vector<144x1xf32>
    %19 = arith.addf %17, %18 : vector<144x1xf32>
    %cst_9 = arith.constant 3.200000e+01 : f32
    %20 = vector.broadcast %cst_9 : f32 to vector<144x1xf32>
    %21 = arith.mulf %20, %19 : vector<144x1xf32>
    %22 = arith.subf %16, %21 : vector<144x1xf32>
    %cst_10 = arith.constant 0.0322580636 : f32
    %23 = vector.broadcast %cst_10 : f32 to vector<144x1xf32>
    %24 = arith.mulf %22, %23 : vector<144x1xf32>
    %cst_11 = arith.constant 0.000000e+00 : f32
    %25 = vector.broadcast %cst_11 : f32 to vector<144x1xf32>
    %26 = arith.maximumf %24, %25 : vector<144x1xf32>
    %27 = math.sqrt %26 : vector<144x1xf32>
    %cst_12 = arith.constant 1.060000e+02 : f32
    %28 = vector.broadcast %cst_12 : f32 to vector<144x1xf32>
    %29 = arith.addf %28, %27 : vector<144x1xf32>
    %30 = tpu.reciprocal %29 {approx = true} : vector<144x1xf32> -> vector<144x1xf32>
    %c0_13 = arith.constant 0 : index
    %c0_14 = arith.constant 0 : index
    %31 = vector.load %arg5[%c0_13, %c0_14] : memref<1x128xf32, #tpu.memory_space<vmem>>, vector<1x128xf32>
    %32 = vector.shape_cast %31 : vector<1x128xf32> to vector<128xf32>
    %33 = vector.shape_cast %32 : vector<128xf32> to vector<1x128xf32>
    %34 = vector.broadcast %30 : vector<144x1xf32> to vector<144x128xf32>
    %35 = vector.broadcast %33 : vector<1x128xf32> to vector<144x128xf32>
    %36 = arith.mulf %34, %35 : vector<144x128xf32>
    %37 = vector.broadcast %7 : vector<144x1xf32> to vector<144x128xf32>
    %38 = arith.subf %1, %37 : vector<144x128xf32>
    %39 = arith.mulf %38, %36 : vector<144x128xf32>
    %40 = vector.broadcast %11 : vector<144x1xf32> to vector<144x128xf32>
    %41 = arith.subf %3, %40 : vector<144x128xf32>
    %42 = arith.mulf %41, %36 : vector<144x128xf32>
    %43 = tpu.concatenate %39, %42 in 1 : vector<144x128xf32>, vector<144x128xf32> -> vector<144x256xf32>
    %c0_15 = arith.constant 0 : index
    %c0_16 = arith.constant 0 : index
    %44 = vector.load %arg6[%c0_15, %c0_16] : memref<1x256xf32, #tpu.memory_space<vmem>>, vector<1x256xf32>
    %45 = vector.shape_cast %44 : vector<1x256xf32> to vector<256xf32>
    %46 = vector.shape_cast %45 : vector<256xf32> to vector<1x256xf32>
    %47 = vector.broadcast %46 : vector<1x256xf32> to vector<144x256xf32>
    %48 = arith.addf %43, %47 : vector<144x256xf32>
    %49 = arith.truncf %48 : vector<144x256xf32> to vector<144x256xbf16>
    %c0_17 = arith.constant 0 : index
    %c0_18 = arith.constant 0 : index
    %50 = vector.load %arg7[%c0_17, %c0_18] : memref<256x256xbf16, #tpu.memory_space<vmem>>, vector<256x256xbf16>
    %cst_19 = arith.constant dense<0.000000e+00> : vector<144x256xf32>
    %51 = tpu.matmul %49, %50, %cst_19 {dimension_numbers = #tpu.dot_dimension_numbers<[1], [0], [0], [1], [0, 0, 1, 1], [], []>} : vector<144x256xbf16>, vector<256x256xbf16>, vector<144x256xf32> -> vector<144x256xf32>
    %c0_20 = arith.constant 0 : index
    %c0_21 = arith.constant 0 : index
    %52 = vector.load %arg8[%c0_20, %c0_21] : memref<1x256xf32, #tpu.memory_space<vmem>>, vector<1x256xf32>
    %53 = vector.shape_cast %52 : vector<1x256xf32> to vector<256xf32>
    %54 = vector.shape_cast %53 : vector<256xf32> to vector<1x256xf32>
    %55 = vector.broadcast %54 : vector<1x256xf32> to vector<144x256xf32>
    %56 = arith.addf %51, %55 : vector<144x256xf32>
    %57 = vector.extract_strided_slice %56 {offsets = [0, 0], sizes = [144, 128], strides = [1, 1]} : vector<144x256xf32> to vector<144x128xf32>
    %58 = vector.extract_strided_slice %56 {offsets = [0, 128], sizes = [144, 128], strides = [1, 1]} : vector<144x256xf32> to vector<144x128xf32>
    %59 = arith.mulf %57, %57 : vector<144x128xf32>
    %60 = arith.mulf %58, %58 : vector<144x128xf32>
    %61 = arith.addf %59, %60 : vector<144x128xf32>
    %cst_22 = arith.constant 1.000000e-30 : f32
    %62 = vector.broadcast %cst_22 : f32 to vector<144x128xf32>
    %63 = arith.maximumf %61, %62 : vector<144x128xf32>
    %64 = math.rsqrt %63 : vector<144x128xf32>
    %65 = arith.mulf %61, %64 : vector<144x128xf32>
    %c0_23 = arith.constant 0 : index
    %c0_24 = arith.constant 0 : index
    %66 = vector.load %arg9[%c0_23, %c0_24] : memref<1x128xf32, #tpu.memory_space<vmem>>, vector<1x128xf32>
    %67 = vector.shape_cast %66 : vector<1x128xf32> to vector<128xf32>
    %68 = vector.shape_cast %67 : vector<128xf32> to vector<1x128xf32>
    %69 = vector.broadcast %68 : vector<1x128xf32> to vector<144x128xf32>
    %70 = arith.addf %65, %69 : vector<144x128xf32>
    %cst_25 = arith.constant 0.000000e+00 : f32
    %71 = vector.broadcast %cst_25 : f32 to vector<144x128xf32>
    %72 = arith.maximumf %70, %71 : vector<144x128xf32>
    %73 = arith.mulf %72, %64 : vector<144x128xf32>
    %74 = arith.mulf %73, %57 : vector<144x128xf32>
    %75 = arith.mulf %73, %58 : vector<144x128xf32>
    %76 = tpu.concatenate %74, %75 in 1 : vector<144x128xf32>, vector<144x128xf32> -> vector<144x256xf32>
    %77 = arith.truncf %76 : vector<144x256xf32> to vector<144x256xbf16>
    %c0_26 = arith.constant 0 : index
    %c0_27 = arith.constant 0 : index
    %78 = vector.load %arg10[%c0_26, %c0_27] : memref<256x256xbf16, #tpu.memory_space<vmem>>, vector<256x256xbf16>
    %cst_28 = arith.constant dense<0.000000e+00> : vector<144x256xf32>
    %79 = tpu.matmul %77, %78, %cst_28 {dimension_numbers = #tpu.dot_dimension_numbers<[1], [0], [0], [1], [0, 0, 1, 1], [], []>} : vector<144x256xbf16>, vector<256x256xbf16>, vector<144x256xf32> -> vector<144x256xf32>
    %c0_29 = arith.constant 0 : index
    %c0_30 = arith.constant 0 : index
    %80 = vector.load %arg11[%c0_29, %c0_30] : memref<1x256xf32, #tpu.memory_space<vmem>>, vector<1x256xf32>
    %81 = vector.shape_cast %80 : vector<1x256xf32> to vector<256xf32>
    %82 = vector.shape_cast %81 : vector<256xf32> to vector<1x256xf32>
    %83 = vector.broadcast %82 : vector<1x256xf32> to vector<144x256xf32>
    %84 = arith.addf %79, %83 : vector<144x256xf32>
    %85 = vector.extract_strided_slice %84 {offsets = [0, 0], sizes = [144, 128], strides = [1, 1]} : vector<144x256xf32> to vector<144x128xf32>
    %86 = vector.extract_strided_slice %84 {offsets = [0, 128], sizes = [144, 128], strides = [1, 1]} : vector<144x256xf32> to vector<144x128xf32>
    %c0_31 = arith.constant 0 : index
    %c0_32 = arith.constant 0 : index
    %87 = vector.load %arg4[%c0_31, %c0_32] : memref<144x384xbf16, #tpu.memory_space<vmem>>, vector<144x384xbf16>
    %88 = arith.extf %87 : vector<144x384xbf16> to vector<144x384xf32>
    %89 = vector.extract_strided_slice %88 {offsets = [0, 0], sizes = [144, 128], strides = [1, 1]} : vector<144x384xf32> to vector<144x128xf32>
    %90 = vector.extract_strided_slice %88 {offsets = [0, 128], sizes = [144, 128], strides = [1, 1]} : vector<144x384xf32> to vector<144x128xf32>
    %91 = vector.extract_strided_slice %88 {offsets = [0, 256], sizes = [144, 128], strides = [1, 1]} : vector<144x384xf32> to vector<144x128xf32>
    %92 = arith.mulf %85, %85 : vector<144x128xf32>
    %93 = arith.mulf %86, %86 : vector<144x128xf32>
    %94 = arith.addf %92, %93 : vector<144x128xf32>
    %cst_33 = arith.constant 1.000000e-30 : f32
    %95 = vector.broadcast %cst_33 : f32 to vector<144x128xf32>
    %96 = arith.maximumf %94, %95 : vector<144x128xf32>
    %97 = math.rsqrt %96 : vector<144x128xf32>
    %98 = arith.mulf %94, %97 : vector<144x128xf32>
    %99 = arith.addf %98, %89 : vector<144x128xf32>
    %100 = arith.negf %99 : vector<144x128xf32>
    %101 = math.exp %100 : vector<144x128xf32>
    %cst_34 = arith.constant 1.000000e+00 : f32
    %102 = vector.broadcast %cst_34 : f32 to vector<144x128xf32>
    %103 = arith.addf %102, %101 : vector<144x128xf32>
    %104 = arith.divf %102, %103 : vector<144x128xf32>
    %105 = arith.mulf %104, %97 : vector<144x128xf32>
    %106 = arith.mulf %105, %85 : vector<144x128xf32>
    %107 = arith.mulf %105, %86 : vector<144x128xf32>
    %108 = arith.mulf %106, %90 : vector<144x128xf32>
    %109 = arith.mulf %107, %91 : vector<144x128xf32>
    %110 = arith.subf %108, %109 : vector<144x128xf32>
    %111 = arith.mulf %106, %91 : vector<144x128xf32>
    %112 = arith.mulf %107, %90 : vector<144x128xf32>
    %113 = arith.addf %111, %112 : vector<144x128xf32>
    %114 = arith.mulf %1, %110 : vector<144x128xf32>
    %115 = arith.mulf %3, %113 : vector<144x128xf32>
    %116 = arith.subf %114, %115 : vector<144x128xf32>
    %c0_35 = arith.constant 0 : index
    %c0_36 = arith.constant 0 : index
    %c0_37 = arith.constant 0 : index
    %117 = vector.load %arg12[%c0_35, %c0_36, %c0_37] : memref<1x144x128xf32, #tpu.memory_space<vmem>>, vector<1x144x128xf32>
    %118 = vector.shape_cast %117 : vector<1x144x128xf32> to vector<144x128xf32>
    %119 = vector.shape_cast %116 : vector<144x128xf32> to vector<1x144x128xf32>
    tpu.vector_store %arg12[%c0_35, %c0_36, %c0_37], %119 {strides = array<i32>} : memref<1x144x128xf32, #tpu.memory_space<vmem>>, vector<1x144x128xf32>,
    %120 = arith.mulf %1, %113 : vector<144x128xf32>
    %121 = arith.mulf %3, %110 : vector<144x128xf32>
    %122 = arith.addf %120, %121 : vector<144x128xf32>
    %c0_38 = arith.constant 0 : index
    %c0_39 = arith.constant 0 : index
    %c0_40 = arith.constant 0 : index
    %123 = vector.load %arg13[%c0_38, %c0_39, %c0_40] : memref<1x144x128xf32, #tpu.memory_space<vmem>>, vector<1x144x128xf32>
    %124 = vector.shape_cast %123 : vector<1x144x128xf32> to vector<144x128xf32>
    %125 = vector.shape_cast %122 : vector<144x128xf32> to vector<1x144x128xf32>
    tpu.vector_store %arg13[%c0_38, %c0_39, %c0_40], %125 {strides = array<i32>} : memref<1x144x128xf32, #tpu.memory_space<vmem>>, vector<1x144x128xf32>,
    return
  }
  func.func @transform_0(%arg0: i32, %arg1: i32) -> (i32, i32, i32) {
    %c0_i32 = arith.constant 0 : i32
    %c0_i32_0 = arith.constant 0 : i32
    return %arg1, %arg0, %c0_i32 : i32, i32, i32
  }
  func.func @transform_1(%arg0: i32, %arg1: i32) -> (i32, i32, i32) {
    %c0_i32 = arith.constant 0 : i32
    %c0_i32_0 = arith.constant 0 : i32
    return %arg1, %arg0, %c0_i32 : i32, i32, i32
  }
  func.func @transform_2(%arg0: i32, %arg1: i32) -> (i32, i32) {
    %c0_i32 = arith.constant 0 : i32
    %c0_i32_0 = arith.constant 0 : i32
    return %arg0, %c0_i32 : i32, i32
  }
  func.func @transform_3(%arg0: i32, %arg1: i32) -> (i32, i32) {
    %c0_i32 = arith.constant 0 : i32
    %c0_i32_0 = arith.constant 0 : i32
    %c0_i32_1 = arith.constant 0 : i32
    return %c0_i32, %c0_i32_0 : i32, i32
  }
  func.func @transform_4(%arg0: i32, %arg1: i32) -> (i32, i32) {
    %c0_i32 = arith.constant 0 : i32
    %c0_i32_0 = arith.constant 0 : i32
    %c0_i32_1 = arith.constant 0 : i32
    return %c0_i32, %c0_i32_0 : i32, i32
  }
  func.func @transform_5(%arg0: i32, %arg1: i32) -> (i32, i32) {
    %c0_i32 = arith.constant 0 : i32
    %c0_i32_0 = arith.constant 0 : i32
    %c0_i32_1 = arith.constant 0 : i32
    return %c0_i32, %c0_i32_0 : i32, i32
  }
  func.func @transform_6(%arg0: i32, %arg1: i32) -> (i32, i32) {
    %c0_i32 = arith.constant 0 : i32
    %c0_i32_0 = arith.constant 0 : i32
    %c0_i32_1 = arith.constant 0 : i32
    return %c0_i32, %c0_i32_0 : i32, i32
  }
  func.func @transform_7(%arg0: i32, %arg1: i32) -> (i32, i32) {
    %c0_i32 = arith.constant 0 : i32
    %c0_i32_0 = arith.constant 0 : i32
    %c0_i32_1 = arith.constant 0 : i32
    return %c0_i32, %c0_i32_0 : i32, i32
  }
  func.func @transform_8(%arg0: i32, %arg1: i32) -> (i32, i32) {
    %c0_i32 = arith.constant 0 : i32
    %c0_i32_0 = arith.constant 0 : i32
    %c0_i32_1 = arith.constant 0 : i32
    return %c0_i32, %c0_i32_0 : i32, i32
  }
  func.func @transform_9(%arg0: i32, %arg1: i32) -> (i32, i32) {
    %c0_i32 = arith.constant 0 : i32
    %c0_i32_0 = arith.constant 0 : i32
    %c0_i32_1 = arith.constant 0 : i32
    return %c0_i32, %c0_i32_0 : i32, i32
  }
  func.func @transform_10(%arg0: i32, %arg1: i32) -> (i32, i32, i32) {
    %c0_i32 = arith.constant 0 : i32
    %c0_i32_0 = arith.constant 0 : i32
    return %arg1, %arg0, %c0_i32 : i32, i32, i32
  }
  func.func @transform_11(%arg0: i32, %arg1: i32) -> (i32, i32, i32) {
    %c0_i32 = arith.constant 0 : i32
    %c0_i32_0 = arith.constant 0 : i32
    return %arg1, %arg0, %c0_i32 : i32, i32, i32
  }
}

module attributes {stable_mosaic.version = 11 : i64} {
  func.func @_mixer_kernel(%arg0: i32, %arg1: memref<512x128xf32, #tpu.memory_space<vmem>>, %arg2: memref<128x128xbf16, #tpu.memory_space<vmem>>, %arg3: memref<1x128xf32, #tpu.memory_space<vmem>>, %arg4: memref<512x128xf32, #tpu.memory_space<vmem>>) attributes {dimension_semantics = [#tpu.dimension_semantics<parallel>], iteration_bounds = array<i64: 1>, scalar_prefetch = 0 : i64, scratch_operands = 0 : i64, tpu.core_type = #tpu.core_type<tc>, window_params = [{transform_indices = @transform_0, window_bounds = array<i64: 512, 128>}, {pipeline_mode = #tpu.pipeline_mode<synchronous>, transform_indices = @transform_1, window_bounds = array<i64: 128, 128>}, {pipeline_mode = #tpu.pipeline_mode<synchronous>, transform_indices = @transform_2, window_bounds = array<i64: 1, 128>}, {transform_indices = @transform_3, window_bounds = array<i64: 512, 128>}]} {
    %c0 = arith.constant 0 : index
    %c0_0 = arith.constant 0 : index
    %0 = vector.load %arg1[%c0, %c0_0] : memref<512x128xf32, #tpu.memory_space<vmem>>, vector<512x128xf32>
    %1 = arith.truncf %0 : vector<512x128xf32> to vector<512x128xbf16>
    %c0_1 = arith.constant 0 : index
    %c0_2 = arith.constant 0 : index
    %2 = vector.load %arg2[%c0_1, %c0_2] : memref<128x128xbf16, #tpu.memory_space<vmem>>, vector<128x128xbf16>
    %cst = arith.constant dense<0.000000e+00> : vector<512x128xf32>
    %3 = tpu.matmul %1, %2, %cst {dimension_numbers = #tpu.dot_dimension_numbers<[1], [0], [0], [1], [0, 0, 1, 1], [], []>} : vector<512x128xbf16>, vector<128x128xbf16>, vector<512x128xf32> -> vector<512x128xf32>
    %c0_3 = arith.constant 0 : index
    %c0_4 = arith.constant 0 : index
    %4 = vector.load %arg3[%c0_3, %c0_4] : memref<1x128xf32, #tpu.memory_space<vmem>>, vector<1x128xf32>
    %5 = vector.shape_cast %4 : vector<1x128xf32> to vector<128xf32>
    %6 = vector.shape_cast %5 : vector<128xf32> to vector<1x128xf32>
    %7 = vector.broadcast %6 : vector<1x128xf32> to vector<512x128xf32>
    %8 = arith.addf %3, %7 : vector<512x128xf32>
    %c0_5 = arith.constant 0 : index
    %c0_6 = arith.constant 0 : index
    %9 = vector.load %arg4[%c0_5, %c0_6] : memref<512x128xf32, #tpu.memory_space<vmem>>, vector<512x128xf32>
    tpu.vector_store %arg4[%c0_5, %c0_6], %8 {strides = array<i32>} : memref<512x128xf32, #tpu.memory_space<vmem>>, vector<512x128xf32>,
    return
  }
  func.func @transform_0(%arg0: i32) -> (i32, i32) {
    %c0_i32 = arith.constant 0 : i32
    %c0_i32_0 = arith.constant 0 : i32
    return %arg0, %c0_i32 : i32, i32
  }
  func.func @transform_1(%arg0: i32) -> (i32, i32) {
    %c0_i32 = arith.constant 0 : i32
    %c0_i32_0 = arith.constant 0 : i32
    %c0_i32_1 = arith.constant 0 : i32
    return %c0_i32, %c0_i32_0 : i32, i32
  }
  func.func @transform_2(%arg0: i32) -> (i32, i32) {
    %c0_i32 = arith.constant 0 : i32
    %c0_i32_0 = arith.constant 0 : i32
    %c0_i32_1 = arith.constant 0 : i32
    return %c0_i32, %c0_i32_0 : i32, i32
  }
  func.func @transform_3(%arg0: i32) -> (i32, i32) {
    %c0_i32 = arith.constant 0 : i32
    %c0_i32_0 = arith.constant 0 : i32
    return %arg0, %c0_i32 : i32, i32
  }
}

</mosaic_0001>

<llo_original>
// kernel: reverse.1
$region0: #{reverse.1}
  #allocation0 [shape = 's32[1]{0}', space=sflag, size = 0x4, scoped, tag = 'scoped memory for reverse.1']
  %s0 = inlined_call_operand.vmem [shape: f32[2,32,16,7], index: 0, kind: input, shape index: {}]
  %s1 = inlined_call_operand.vmem [shape: f32[2,32,16,7], index: 1, kind: output, shape index: {}]
  %s2 = scalar_lea.vmem %s0, 96
  %v3 = vld [vmem:[%s2] sm:$0xff]
  %4 = vst [vmem:[%s1] sm:$0xff] %v3
  %s5 = scalar_lea.vmem %s0, 208
  %v6 = vld [vmem:[%s5] sm:$0xff]
  %s7 = scalar_lea.vmem %s1, 112
  %8 = vst [vmem:[%s7] sm:$0xff] %v6
  %s9 = scalar_lea.vmem %s0, 80
  %v10 = vld [vmem:[%s9] sm:$0xff]
  %s11 = scalar_lea.vmem %s1, 16
  %12 = vst [vmem:[%s11] sm:$0xff] %v10
  %s13 = scalar_lea.vmem %s0, 192
  %v14 = vld [vmem:[%s13] sm:$0xff]
  %s15 = scalar_lea.vmem %s1, 128
  %16 = vst [vmem:[%s15] sm:$0xff] %v14
  %s17 = scalar_lea.vmem %s0, 64
  %v18 = vld [vmem:[%s17] sm:$0xff]
  %s19 = scalar_lea.vmem %s1, 32
  %20 = vst [vmem:[%s19] sm:$0xff] %v18
  %s21 = scalar_lea.vmem %s0, 176
  %v22 = vld [vmem:[%s21] sm:$0xff]
  %s23 = scalar_lea.vmem %s1, 144
  %24 = vst [vmem:[%s23] sm:$0xff] %v22
  %s25 = scalar_lea.vmem %s0, 48
  %v26 = vld [vmem:[%s25] sm:$0xff]
  %s27 = scalar_lea.vmem %s1, 48
  %28 = vst [vmem:[%s27] sm:$0xff] %v26
  %s29 = scalar_lea.vmem %s0, 160
  %v30 = vld [vmem:[%s29] sm:$0xff]
  %s31 = scalar_lea.vmem %s1, 160
  %32 = vst [vmem:[%s31] sm:$0xff] %v30
  %s33 = scalar_lea.vmem %s0, 32
  %v34 = vld [vmem:[%s33] sm:$0xff]
  %s35 = scalar_lea.vmem %s1, 64
  %36 = vst [vmem:[%s35] sm:$0xff] %v34
  %s37 = scalar_lea.vmem %s0, 144
  %v38 = vld [vmem:[%s37] sm:$0xff]
  %s39 = scalar_lea.vmem %s1, 176
  %40 = vst [vmem:[%s39] sm:$0xff] %v38
  %s41 = scalar_lea.vmem %s0, 16
  %v42 = vld [vmem:[%s41] sm:$0xff]
  %s43 = scalar_lea.vmem %s1, 80
  %44 = vst [vmem:[%s43] sm:$0xff] %v42
  %s45 = scalar_lea.vmem %s0, 128
  %v46 = vld [vmem:[%s45] sm:$0xff]
  %s47 = scalar_lea.vmem %s1, 192
  %48 = vst [vmem:[%s47] sm:$0xff] %v46
  %v49 = vld [vmem:[%s0] sm:$0xff]
  %s50 = scalar_lea.vmem %s1, 96
  %51 = vst [vmem:[%s50] sm:$0xff] %v49
  %s52 = scalar_lea.vmem %s0, 112
  %v53 = vld [vmem:[%s52] sm:$0xff]
  %s54 = scalar_lea.vmem %s1, 208
  %55 = vst [vmem:[%s54] sm:$0xff] %v53
  %s56 = scalar_lea.vmem %s0, 104
  %v57 = vld [vmem:[%s56] sm:$0xff]
  %s58 = scalar_lea.vmem %s1, 8
  %59 = vst [vmem:[%s58] sm:$0xff] %v57
  %s60 = scalar_lea.vmem %s0, 216
  %v61 = vld [vmem:[%s60] sm:$0xff]
  %s62 = scalar_lea.vmem %s1, 120
  %63 = vst [vmem:[%s62] sm:$0xff] %v61
  %s64 = scalar_lea.vmem %s0, 88
  %v65 = vld [vmem:[%s64] sm:$0xff]
  %s66 = scalar_lea.vmem %s1, 24
  %67 = vst [vmem:[%s66] sm:$0xff] %v65
  %s68 = scalar_lea.vmem %s0, 200
  %v69 = vld [vmem:[%s68] sm:$0xff]
  %s70 = scalar_lea.vmem %s1, 136
  %71 = vst [vmem:[%s70] sm:$0xff] %v69
  %s72 = scalar_lea.vmem %s0, 72
  %v73 = vld [vmem:[%s72] sm:$0xff]
  %s74 = scalar_lea.vmem %s1, 40
  %75 = vst [vmem:[%s74] sm:$0xff] %v73
  %s76 = scalar_lea.vmem %s0, 184
  %v77 = vld [vmem:[%s76] sm:$0xff]
  %s78 = scalar_lea.vmem %s1, 152
  %79 = vst [vmem:[%s78] sm:$0xff] %v77
  %s80 = scalar_lea.vmem %s0, 56
  %v81 = vld [vmem:[%s80] sm:$0xff]
  %s82 = scalar_lea.vmem %s1, 56
  %83 = vst [vmem:[%s82] sm:$0xff] %v81
  %s84 = scalar_lea.vmem %s0, 168
  %v85 = vld [vmem:[%s84] sm:$0xff]
  %s86 = scalar_lea.vmem %s1, 168
  %87 = vst [vmem:[%s86] sm:$0xff] %v85
  %s88 = scalar_lea.vmem %s0, 40
  %v89 = vld [vmem:[%s88] sm:$0xff]
  %s90 = scalar_lea.vmem %s1, 72
  %91 = vst [vmem:[%s90] sm:$0xff] %v89
  %s92 = scalar_lea.vmem %s0, 152
  %v93 = vld [vmem:[%s92] sm:$0xff]
  %s94 = scalar_lea.vmem %s1, 184
  %95 = vst [vmem:[%s94] sm:$0xff] %v93
  %s96 = scalar_lea.vmem %s0, 24
  %v97 = vld [vmem:[%s96] sm:$0xff]
  %s98 = scalar_lea.vmem %s1, 88
  %99 = vst [vmem:[%s98] sm:$0xff] %v97
  %s100 = scalar_lea.vmem %s0, 136
  %v101 = vld [vmem:[%s100] sm:$0xff]
  %s102 = scalar_lea.vmem %s1, 200
  %103 = vst [vmem:[%s102] sm:$0xff] %v101
  %s104 = scalar_lea.vmem %s0, 8
  %v105 = vld [vmem:[%s104] sm:$0xff]
  %s106 = scalar_lea.vmem %s1, 104
  %107 = vst [vmem:[%s106] sm:$0xff] %v105
  %s108 = scalar_lea.vmem %s0, 120
  %v109 = vld [vmem:[%s108] sm:$0xff]
  %s110 = scalar_lea.vmem %s1, 216
  %111 = vst [vmem:[%s110] sm:$0xff] %v109

// kernel: _lambda_.2
$region0: #{_lambda_.2}
  #allocation0 [shape = 'u32[]', space=smem, size = 0x4, offset = 0x4, fixed_abs, tag = 'smem constant byte address 0x4 - core index']
  #allocation1 [shape = 'u32[72,128]{1,0:T(1,128)}', space=vmem, size = 0x9000, scoped, tag = 'internal scratch']
  %s0 = inlined_call_operand.vmem [shape: f32[2,144,128], index: 0, kind: input, shape index: {}]
  %s1 = inlined_call_operand.vmem [shape: f32[2,144,128], index: 1, kind: input, shape index: {}]
  %s2 = inlined_call_operand.vmem [shape: bf16[144,384], index: 2, kind: input, shape index: {}]
  %s3 = inlined_call_operand.vmem [shape: f32[1,128], index: 3, kind: input, shape index: {}]
  %s4 = inlined_call_operand.vmem [shape: f32[1,256], index: 4, kind: input, shape index: {}]
  %s5 = inlined_call_operand.vmem [shape: bf16[256,256], index: 5, kind: input, shape index: {}]
  %s6 = inlined_call_operand.vmem [shape: f32[1,256], index: 6, kind: input, shape index: {}]
  %s7 = inlined_call_operand.vmem [shape: f32[1,128], index: 7, kind: input, shape index: {}]
  %s8 = inlined_call_operand.vmem [shape: bf16[256,256], index: 8, kind: input, shape index: {}]
  %s9 = inlined_call_operand.vmem [shape: f32[1,256], index: 9, kind: input, shape index: {}]
  %s10 = inlined_call_operand.vmem [shape: f32[2,144,128], index: 10, kind: output, shape index: {0}]
  %s11 = inlined_call_operand.vmem [shape: f32[2,144,128], index: 11, kind: output, shape index: {1}]
  %12 = xla_tuple %s10, %s11
  %s13 = sld [smem:[#allocation0]]
  $region81: #{_lambda_.2} parent=0
    _
  %s15 = ssub.s32 1, %s13
  %s16 = scalar_select 0, %s15, %s13
  loop: start=0, step=1, limit=4
  $region2: #{_lambda_.2} parent=0 // loop_pre_header
    _
  $region3: #{_lambda_.2} parent=0 // loop_header
    %s18 = sphi 0, %s22
    %p19 = scmp.ge.s32.totalorder %s18, 4
    %s25 = sphi 0, %s37
    %s26 = sphi 0, %s33
    %s27 = sphi 0, %s25
    %s28 = sphi 0, %s26
    %s29 = sphi 0, %s27
    %s30 = sphi 0, %s28
    %s42 = sphi 0, %s44
    %s45 = sphi 0, %s42
    %s46 = sphi 0, %s45
    %s62 = sphi 0, %s46
    %s70 = sphi 0, %s72
    %s73 = sphi 0, %s70
    %s74 = sphi 0, %s73
    %s90 = sphi 0, %s74
    %s96 = sphi 0, %s98
    %s99 = sphi 0, %s96
    %s100 = sphi 0, %s99
    %s116 = sphi 0, %s100
    %s120 = sphi 0, %s120
    %s122 = sphi 0, %s120
    %s123 = sphi 0, %s122
    %s137 = sphi 0, %s123
    %s141 = sphi 0, %s141
    %s143 = sphi 0, %s141
    %s144 = sphi 0, %s143
    %s158 = sphi 0, %s144
    %s162 = sphi 0, %s162
    %s164 = sphi 0, %s162
    %s165 = sphi 0, %s164
    %s179 = sphi 0, %s165
    %s183 = sphi 0, %s183
    %s185 = sphi 0, %s183
    %s186 = sphi 0, %s185
    %s200 = sphi 0, %s186
    %s204 = sphi 0, %s204
    %s206 = sphi 0, %s204
    %s207 = sphi 0, %s206
    %s221 = sphi 0, %s207
    %s225 = sphi 0, %s225
    %s227 = sphi 0, %s225
    %s228 = sphi 0, %s227
    %s242 = sphi 0, %s228
    %s246 = sphi 0, %s246
    %s248 = sphi 0, %s246
    %s249 = sphi 0, %s248
    %s263 = sphi 0, %s249
    %s271 = sphi 0, %s273
    %s274 = sphi 0, %s271
    %s275 = sphi 0, %s274
    %s291 = sphi 0, %s275
    %s299 = sphi 0, %s301
    %s302 = sphi 0, %s299
    %s303 = sphi 0, %s302
    %s319 = sphi 0, %s303
  $region4: #{_lambda_.2} parent=0 // loop_header_branch
    %21 = sbr.rel (%p19) target = $region8
  $region5: #{_lambda_.2} parent=0 // loop_body
    %s23 = ssub.s32 %s18, 1
    %s24 = ssub.s32 %s18, 2
    %s31 = sadd.s32 1, %s26
    %p32 = scmp.ge.s32.totalorder %s31, 2
    %s33 = scalar_select %p32, 0, %s31
    %s34 = sadd.s32 1, %s25
    %s35 = scalar_select %p32, %s34, %s25
    %p36 = scmp.ge.s32.totalorder %s35, 1
    %s37 = scalar_select %p36, 0, %s35
    %s38 = ssub.s32 %s26, %s33
    %s39 = ssub.s32 %s25, %s37
    %s40 = sor.u32 %s38, %s39
    %p41 = scmp.eq.s32.totalorder %s40, 0
    %s43 = sadd.s32 %s42, 1
    %s44 = scalar_select %p41, %s42, %s43
    %p47 = pneg %p41
    %p48 = scmp.eq.s32.totalorder %s18, 1
    %p49 = por %p47, %p48
    %p50 = scmp.ne.s32.totalorder %s42, %s45
    %p51 = scmp.eq.s32.totalorder %s18, 0
    %p52 = por %p50, %p51
    %p53 = scmp.ne.s32.totalorder %s42, %s45
    %p54 = scmp.eq.s32.totalorder %s23, 1
    %p55 = por %p53, %p54
    %p56 = scmp.ne.s32.totalorder %s45, %s46
    %p57 = scmp.eq.s32.totalorder %s23, 0
    %p58 = por %p56, %p57
    %p59 = scmp.ne.s32.totalorder %s45, %s46
    %p60 = scmp.eq.s32.totalorder %s24, 1
    %p61 = por %p59, %p60
    %p63 = scmp.ne.s32.totalorder %s46, %s62
    %p64 = scmp.eq.s32.totalorder %s24, 0
    %p65 = por %p63, %p64
    %s66 = ssub.s32 %s26, %s33
    %s67 = ssub.s32 %s25, %s37
    %s68 = sor.u32 %s66, %s67
    %p69 = scmp.eq.s32.totalorder %s68, 0
    %s71 = sadd.s32 %s70, 1
    %s72 = scalar_select %p69, %s70, %s71
    %p75 = pneg %p69
    %p76 = scmp.eq.s32.totalorder %s18, 1
    %p77 = por %p75, %p76
    %p78 = scmp.ne.s32.totalorder %s70, %s73
    %p79 = scmp.eq.s32.totalorder %s18, 0
    %p80 = por %p78, %p79
    %p81 = scmp.ne.s32.totalorder %s70, %s73
    %p82 = scmp.eq.s32.totalorder %s23, 1
    %p83 = por %p81, %p82
    %p84 = scmp.ne.s32.totalorder %s73, %s74
    %p85 = scmp.eq.s32.totalorder %s23, 0
    %p86 = por %p84, %p85
    %p87 = scmp.ne.s32.totalorder %s73, %s74
    %p88 = scmp.eq.s32.totalorder %s24, 1
    %p89 = por %p87, %p88
    %p91 = scmp.ne.s32.totalorder %s74, %s90
    %p92 = scmp.eq.s32.totalorder %s24, 0
    %p93 = por %p91, %p92
    %s94 = ssub.s32 %s25, %s37
    %p95 = scmp.eq.s32.totalorder %s94, 0
    %s97 = sadd.s32 %s96, 1
    %s98 = scalar_select %p95, %s96, %s97
    %p101 = pneg %p95
    %p102 = scmp.eq.s32.totalorder %s18, 1
    %p103 = por %p101, %p102
    %p104 = scmp.ne.s32.totalorder %s96, %s99
    %p105 = scmp.eq.s32.totalorder %s18, 0
    %p106 = por %p104, %p105
    %p107 = scmp.ne.s32.totalorder %s96, %s99
    %p108 = scmp.eq.s32.totalorder %s23, 1
    %p109 = por %p107, %p108
    %p110 = scmp.ne.s32.totalorder %s99, %s100
    %p111 = scmp.eq.s32.totalorder %s23, 0
    %p112 = por %p110, %p111
    %p113 = scmp.ne.s32.totalorder %s99, %s100
    %p114 = scmp.eq.s32.totalorder %s24, 1
    %p115 = por %p113, %p114
    %p117 = scmp.ne.s32.totalorder %s100, %s116
    %p118 = scmp.eq.s32.totalorder %s24, 0
    %p119 = por %p117, %p118
    %s121 = sadd.s32 %s120, 1
    %p124 = scmp.eq.s32.totalorder %s18, 1
    %p125 = scmp.ne.s32.totalorder %s120, %s122
    %p126 = scmp.eq.s32.totalorder %s18, 0
    %p127 = por %p125, %p126
    %p128 = scmp.ne.s32.totalorder %s120, %s122
    %p129 = scmp.eq.s32.totalorder %s23, 1
    %p130 = por %p128, %p129
    %p131 = scmp.ne.s32.totalorder %s122, %s123
    %p132 = scmp.eq.s32.totalorder %s23, 0
    %p133 = por %p131, %p132
    %p134 = scmp.ne.s32.totalorder %s122, %s123
    %p135 = scmp.eq.s32.totalorder %s24, 1
    %p136 = por %p134, %p135
    %p138 = scmp.ne.s32.totalorder %s123, %s137
    %p139 = scmp.eq.s32.totalorder %s24, 0
    %p140 = por %p138, %p139
    %s142 = sadd.s32 %s141, 1
    %p145 = scmp.eq.s32.totalorder %s18, 1
    %p146 = scmp.ne.s32.totalorder %s141, %s143
    %p147 = scmp.eq.s32.totalorder %s18, 0
    %p148 = por %p146, %p147
    %p149 = scmp.ne.s32.totalorder %s141, %s143
    %p150 = scmp.eq.s32.totalorder %s23, 1
    %p151 = por %p149, %p150
    %p152 = scmp.ne.s32.totalorder %s143, %s144
    %p153 = scmp.eq.s32.totalorder %s23, 0
    %p154 = por %p152, %p153
    %p155 = scmp.ne.s32.totalorder %s143, %s144
    %p156 = scmp.eq.s32.totalorder %s24, 1
    %p157 = por %p155, %p156
    %p159 = scmp.ne.s32.totalorder %s144, %s158
    %p160 = scmp.eq.s32.totalorder %s24, 0
    %p161 = por %p159, %p160
    %s163 = sadd.s32 %s162, 1
    %p166 = scmp.eq.s32.totalorder %s18, 1
    %p167 = scmp.ne.s32.totalorder %s162, %s164
    %p168 = scmp.eq.s32.totalorder %s18, 0
    %p169 = por %p167, %p168
    %p170 = scmp.ne.s32.totalorder %s162, %s164
    %p171 = scmp.eq.s32.totalorder %s23, 1
    %p172 = por %p170, %p171
    %p173 = scmp.ne.s32.totalorder %s164, %s165
    %p174 = scmp.eq.s32.totalorder %s23, 0
    %p175 = por %p173, %p174
    %p176 = scmp.ne.s32.totalorder %s164, %s165
    %p177 = scmp.eq.s32.totalorder %s24, 1
    %p178 = por %p176, %p177
    %p180 = scmp.ne.s32.totalorder %s165, %s179
    %p181 = scmp.eq.s32.totalorder %s24, 0
    %p182 = por %p180, %p181
    %s184 = sadd.s32 %s183, 1
    %p187 = scmp.eq.s32.totalorder %s18, 1
    %p188 = scmp.ne.s32.totalorder %s183, %s185
    %p189 = scmp.eq.s32.totalorder %s18, 0
    %p190 = por %p188, %p189
    %p191 = scmp.ne.s32.totalorder %s183, %s185
    %p192 = scmp.eq.s32.totalorder %s23, 1
    %p193 = por %p191, %p192
    %p194 = scmp.ne.s32.totalorder %s185, %s186
    %p195 = scmp.eq.s32.totalorder %s23, 0
    %p196 = por %p194, %p195
    %p197 = scmp.ne.s32.totalorder %s185, %s186
    %p198 = scmp.eq.s32.totalorder %s24, 1
    %p199 = por %p197, %p198
    %p201 = scmp.ne.s32.totalorder %s186, %s200
    %p202 = scmp.eq.s32.totalorder %s24, 0
    %p203 = por %p201, %p202
    %s205 = sadd.s32 %s204, 1
    %p208 = scmp.eq.s32.totalorder %s18, 1
    %p209 = scmp.ne.s32.totalorder %s204, %s206
    %p210 = scmp.eq.s32.totalorder %s18, 0
    %p211 = por %p209, %p210
    %p212 = scmp.ne.s32.totalorder %s204, %s206
    %p213 = scmp.eq.s32.totalorder %s23, 1
    %p214 = por %p212, %p213
    %p215 = scmp.ne.s32.totalorder %s206, %s207
    %p216 = scmp.eq.s32.totalorder %s23, 0
    %p217 = por %p215, %p216
    %p218 = scmp.ne.s32.totalorder %s206, %s207
    %p219 = scmp.eq.s32.totalorder %s24, 1
    %p220 = por %p218, %p219
    %p222 = scmp.ne.s32.totalorder %s207, %s221
    %p223 = scmp.eq.s32.totalorder %s24, 0
    %p224 = por %p222, %p223
    %s226 = sadd.s32 %s225, 1
    %p229 = scmp.eq.s32.totalorder %s18, 1
    %p230 = scmp.ne.s32.totalorder %s225, %s227
    %p231 = scmp.eq.s32.totalorder %s18, 0
    %p232 = por %p230, %p231
    %p233 = scmp.ne.s32.totalorder %s225, %s227
    %p234 = scmp.eq.s32.totalorder %s23, 1
    %p235 = por %p233, %p234
    %p236 = scmp.ne.s32.totalorder %s227, %s228
    %p237 = scmp.eq.s32.totalorder %s23, 0
    %p238 = por %p236, %p237
    %p239 = scmp.ne.s32.totalorder %s227, %s228
    %p240 = scmp.eq.s32.totalorder %s24, 1
    %p241 = por %p239, %p240
    %p243 = scmp.ne.s32.totalorder %s228, %s242
    %p244 = scmp.eq.s32.totalorder %s24, 0
    %p245 = por %p243, %p244
    %s247 = sadd.s32 %s246, 1
    %p250 = scmp.eq.s32.totalorder %s18, 1
    %p251 = scmp.ne.s32.totalorder %s246, %s248
    %p252 = scmp.eq.s32.totalorder %s18, 0
    %p253 = por %p251, %p252
    %p254 = scmp.ne.s32.totalorder %s246, %s248
    %p255 = scmp.eq.s32.totalorder %s23, 1
    %p256 = por %p254, %p255
    %p257 = scmp.ne.s32.totalorder %s248, %s249
    %p258 = scmp.eq.s32.totalorder %s23, 0
    %p259 = por %p257, %p258
    %p260 = scmp.ne.s32.totalorder %s248, %s249
    %p261 = scmp.eq.s32.totalorder %s24, 1
    %p262 = por %p260, %p261
    %p264 = scmp.ne.s32.totalorder %s249, %s263
    %p265 = scmp.eq.s32.totalorder %s24, 0
    %p266 = por %p264, %p265
    %s267 = ssub.s32 %s26, %s33
    %s268 = ssub.s32 %s25, %s37
    %s269 = sor.u32 %s267, %s268
    %p270 = scmp.eq.s32.totalorder %s269, 0
    %s272 = sadd.s32 %s271, 1
    %s273 = scalar_select %p270, %s271, %s272
    %p276 = pneg %p270
    %p277 = scmp.eq.s32.totalorder %s18, 1
    %p278 = por %p276, %p277
    %p279 = scmp.ne.s32.totalorder %s271, %s274
    %p280 = scmp.eq.s32.totalorder %s18, 0
    %p281 = por %p279, %p280
    %p282 = scmp.ne.s32.totalorder %s271, %s274
    %p283 = scmp.eq.s32.totalorder %s23, 1
    %p284 = por %p282, %p283
    %p285 = scmp.ne.s32.totalorder %s274, %s275
    %p286 = scmp.eq.s32.totalorder %s23, 0
    %p287 = por %p285, %p286
    %p288 = scmp.ne.s32.totalorder %s274, %s275
    %p289 = scmp.eq.s32.totalorder %s24, 1
    %p290 = por %p288, %p289
    %p292 = scmp.ne.s32.totalorder %s275, %s291
    %p293 = scmp.eq.s32.totalorder %s24, 0
    %p294 = por %p292, %p293
    %s295 = ssub.s32 %s26, %s33
    %s296 = ssub.s32 %s25, %s37
    %s297 = sor.u32 %s295, %s296
    %p298 = scmp.eq.s32.totalorder %s297, 0
    %s300 = sadd.s32 %s299, 1
    %s301 = scalar_select %p298, %s299, %s300
    %p304 = pneg %p298
    %p305 = scmp.eq.s32.totalorder %s18, 1
    %p306 = por %p304, %p305
    %p307 = scmp.ne.s32.totalorder %s299, %s302
    %p308 = scmp.eq.s32.totalorder %s18, 0
    %p309 = por %p307, %p308
    %p310 = scmp.ne.s32.totalorder %s299, %s302
    %p311 = scmp.eq.s32.totalorder %s23, 1
    %p312 = por %p310, %p311
    %p313 = scmp.ne.s32.totalorder %s302, %s303
    %p314 = scmp.eq.s32.totalorder %s23, 0
    %p315 = por %p313, %p314
    %p316 = scmp.ne.s32.totalorder %s302, %s303
    %p317 = scmp.eq.s32.totalorder %s24, 1
    %p318 = por %p316, %p317
    %p320 = scmp.ne.s32.totalorder %s303, %s319
    %p321 = scmp.eq.s32.totalorder %s24, 0
    %p322 = por %p320, %p321
    %p323 = scmp.le.s32.totalorder 1, %s18
    %p324 = scmp.lt.s32.totalorder %s18, 3
    %p325 = pnand %p323, %p324
    %p326 = pneg %p325
    // Predicated region
    $region9: #{_lambda_.2} parent=5 // pred_check
      _
    $region10: #{_lambda_.2} parent=5 // pred_check_branch
      %328 = sbr.rel (%p325) target = $region12
    $region11: #{_lambda_.2} parent=5 // pred_region
      %s329 = ssub.s32 %s18, 1
      // Predicated region
      $region13: #{_lambda_.2} parent=11 // pred_check
        %p330 = pneg %p112
      $region14: #{_lambda_.2} parent=11 // pred_check_branch
        %332 = sbr.rel (%p330) target = $region16
      $region15: #{_lambda_.2} parent=11 // pred_region
        %s333 = smul.u32 18, %s27
        %p334 = scmp.lt.s32.totalorder %s333, 17
        %s335 = scalar_select %p334, %s333, 17
        %s336 = smul.addr %s335, 3
        %s337 = smul.addr %s336, 4
        %s338 = scalar_lea.vmem %s2, %s337
        %s339 = smul.u32 18, %s27
      $region16: #{_lambda_.2} parent=11 // pred_fallthru
        _
      // Predicated region
      $region17: #{_lambda_.2} parent=11 // pred_check
        %p340 = pneg %p133
      $region18: #{_lambda_.2} parent=11 // pred_check_branch
        %342 = sbr.rel (%p340) target = $region20
      $region19: #{_lambda_.2} parent=11 // pred_region
        _
      $region20: #{_lambda_.2} parent=11 // pred_fallthru
        _
      // Predicated region
      $region21: #{_lambda_.2} parent=11 // pred_check
        %p343 = pneg %p154
      $region22: #{_lambda_.2} parent=11 // pred_check_branch
        %345 = sbr.rel (%p343) target = $region24
      $region23: #{_lambda_.2} parent=11 // pred_region
        _
      $region24: #{_lambda_.2} parent=11 // pred_fallthru
        _
      // Predicated region
      $region25: #{_lambda_.2} parent=11 // pred_check
        %p346 = pneg %p175
      $region26: #{_lambda_.2} parent=11 // pred_check_branch
        %348 = sbr.rel (%p346) target = $region28
      $region27: #{_lambda_.2} parent=11 // pred_region
        _
      $region28: #{_lambda_.2} parent=11 // pred_fallthru
        _
      // Predicated region
      $region29: #{_lambda_.2} parent=11 // pred_check
        %p349 = pneg %p196
      $region30: #{_lambda_.2} parent=11 // pred_check_branch
        %351 = sbr.rel (%p349) target = $region32
      $region31: #{_lambda_.2} parent=11 // pred_region
        _
      $region32: #{_lambda_.2} parent=11 // pred_fallthru
        _
      // Predicated region
      $region33: #{_lambda_.2} parent=11 // pred_check
        %p352 = pneg %p217
      $region34: #{_lambda_.2} parent=11 // pred_check_branch
        %354 = sbr.rel (%p352) target = $region36
      $region35: #{_lambda_.2} parent=11 // pred_region
        _
      $region36: #{_lambda_.2} parent=11 // pred_fallthru
        _
      // Predicated region
      $region37: #{_lambda_.2} parent=11 // pred_check
        %p355 = pneg %p238
      $region38: #{_lambda_.2} parent=11 // pred_check_branch
        %357 = sbr.rel (%p355) target = $region40
      $region39: #{_lambda_.2} parent=11 // pred_region
        _
      $region40: #{_lambda_.2} parent=11 // pred_fallthru
        _
      // Predicated region
      $region41: #{_lambda_.2} parent=11 // pred_check
        %p358 = pneg %p259
      $region42: #{_lambda_.2} parent=11 // pred_check_branch
        %360 = sbr.rel (%p358) target = $region44
      $region43: #{_lambda_.2} parent=11 // pred_region
        _
      $region44: #{_lambda_.2} parent=11 // pred_fallthru
        _
    $region12: #{_lambda_.2} parent=5 // pred_fallthru
      _
    %p361 = scmp.lt.s32.totalorder %s18, 2
    // Predicated region
    $region45: #{_lambda_.2} parent=5 // pred_check
      %p362 = pneg %p361
    $region46: #{_lambda_.2} parent=5 // pred_check_branch
      %364 = sbr.rel (%p362) target = $region48
    $region47: #{_lambda_.2} parent=5 // pred_region
      // Predicated region
      $region49: #{_lambda_.2} parent=47 // pred_check
        %p365 = pneg %p52
      $region50: #{_lambda_.2} parent=47 // pred_check_branch
        %367 = sbr.rel (%p365) target = $region52
      $region51: #{_lambda_.2} parent=47 // pred_region
        %s368 = smul.u32 18, %s25
        %p369 = scmp.lt.s32.totalorder %s26, 1
        %s370 = scalar_select %p369, %s26, 1
        %p371 = scmp.lt.s32.totalorder %s368, 17
        %s372 = scalar_select %p371, %s368, 17
        %s373 = smul.addr %s370, 18
        %s374 = sadd.s32 %s372, %s373
        %s375 = smul.addr %s374, 8
        %s376 = scalar_lea.vmem %s0, %s375
        %s377 = smul.u32 18, %s25
      $region52: #{_lambda_.2} parent=47 // pred_fallthru
        _
      // Predicated region
      $region53: #{_lambda_.2} parent=47 // pred_check
        %p378 = pneg %p80
      $region54: #{_lambda_.2} parent=47 // pred_check_branch
        %380 = sbr.rel (%p378) target = $region56
      $region55: #{_lambda_.2} parent=47 // pred_region
        %s381 = smul.u32 18, %s25
        %p382 = scmp.lt.s32.totalorder %s26, 1
        %s383 = scalar_select %p382, %s26, 1
        %p384 = scmp.lt.s32.totalorder %s381, 17
        %s385 = scalar_select %p384, %s381, 17
        %s386 = smul.addr %s383, 18
        %s387 = sadd.s32 %s385, %s386
        %s388 = smul.addr %s387, 8
        %s389 = scalar_lea.vmem %s1, %s388
        %s390 = smul.u32 18, %s25
      $region56: #{_lambda_.2} parent=47 // pred_fallthru
        _
    $region48: #{_lambda_.2} parent=5 // pred_fallthru
      _
    %p391 = scmp.le.s32.totalorder 1, %s18
    %p392 = scmp.lt.s32.totalorder %s18, 3
    %p393 = pnand %p391, %p392
    %p394 = pneg %p393
    // Predicated region
    $region57: #{_lambda_.2} parent=5 // pred_check
      _
    $region58: #{_lambda_.2} parent=5 // pred_check_branch
      %396 = sbr.rel (%p393) target = $region60
    $region59: #{_lambda_.2} parent=5 // pred_region
      %s397 = ssub.s32 %s18, 1
      %s398 = smul.u32 18, %s27
      %p399 = scmp.lt.s32.totalorder %s28, 1
      %s400 = scalar_select %p399, %s28, 1
      %p401 = scmp.lt.s32.totalorder %s398, 17
      %s402 = scalar_select %p401, %s398, 17
      %s403 = smul.addr %s400, 18
      %s404 = sadd.s32 %s402, %s403
      %s405 = smul.addr %s404, 8
      %s406 = scalar_lea.vmem %s0, %s405
      %p407 = pneg %p58
      %p408 = pneg %p55
      %s409 = smul.u32 18, %s27
      %p410 = scmp.lt.s32.totalorder %s28, 1
      %s411 = scalar_select %p410, %s28, 1
      %p412 = scmp.lt.s32.totalorder %s409, 17
      %s413 = scalar_select %p412, %s409, 17
      %s414 = smul.addr %s411, 18
      %s415 = sadd.s32 %s413, %s414
      %s416 = smul.addr %s415, 8
      %s417 = scalar_lea.vmem %s1, %s416
      %p418 = pneg %p86
      %p419 = pneg %p83
      %s420 = smul.u32 18, %s27
      %p421 = scmp.lt.s32.totalorder %s420, 17
      %s422 = scalar_select %p421, %s420, 17
      %s423 = smul.addr %s422, 3
      %s424 = smul.addr %s423, 4
      %s425 = scalar_lea.vmem %s2, %s424
      %p426 = pneg %p112
      %p427 = pneg %p109
      %p428 = pneg %p133
      %p429 = pneg %p130
      %p430 = pneg %p154
      %p431 = pneg %p151
      %p432 = pneg %p175
      %p433 = pneg %p172
      %p434 = pneg %p196
      %p435 = pneg %p193
      %p436 = pneg %p217
      %p437 = pneg %p214
      %p438 = pneg %p238
      %p439 = pneg %p235
      %p440 = pneg %p259
      %p441 = pneg %p256
      %p442 = pneg %p287
      %p443 = pneg %p284
      %s444 = smul.u32 18, %s27
      %p445 = scmp.lt.s32.totalorder %s28, 1
      %s446 = scalar_select %p445, %s28, 1
      %p447 = scmp.lt.s32.totalorder %s444, 17
      %s448 = scalar_select %p447, %s444, 17
      %s449 = smul.addr %s446, 18
      %s450 = sadd.s32 %s448, %s449
      %s451 = smul.addr %s450, 8
      %s452 = scalar_lea.vmem %s10, %s451
      %p453 = pneg %p315
      %p454 = pneg %p312
      %s455 = smul.u32 18, %s27
      %p456 = scmp.lt.s32.totalorder %s28, 1
      %s457 = scalar_select %p456, %s28, 1
      %p458 = scmp.lt.s32.totalorder %s455, 17
      %s459 = scalar_select %p458, %s455, 17
      %s460 = smul.addr %s457, 18
      %s461 = sadd.s32 %s459, %s460
      %s462 = smul.addr %s461, 8
      %s463 = scalar_lea.vmem %s11, %s462
      %s464 = smul.u32 18, %s27
      %p465 = scmp.lt.s32.totalorder %s28, 1
      %s466 = scalar_select %p465, %s28, 1
      %p467 = scmp.lt.s32.totalorder %s464, 17
      %s468 = scalar_select %p467, %s464, 17
      %s469 = smul.addr %s466, 18
      %s470 = sadd.s32 %s468, %s469
      %s471 = smul.addr %s470, 8
      %s472 = scalar_lea.vmem %s0, %s471
      %s473 = smul.u32 18, %s27
      %s474 = smul.u32 18, %s27
      %p475 = scmp.lt.s32.totalorder %s28, 1
      %s476 = scalar_select %p475, %s28, 1
      %p477 = scmp.lt.s32.totalorder %s474, 17
      %s478 = scalar_select %p477, %s474, 17
      %s479 = smul.addr %s476, 18
      %s480 = sadd.s32 %s478, %s479
      %s481 = smul.addr %s480, 8
      %s482 = scalar_lea.vmem %s1, %s481
      %s483 = smul.u32 18, %s27
      %s484 = smul.u32 18, %s27
      %p485 = scmp.lt.s32.totalorder %s484, 17
      %s486 = scalar_select %p485, %s484, 17
      %s487 = smul.addr %s486, 3
      %s488 = smul.addr %s487, 4
      %s489 = scalar_lea.vmem %s2, %s488
      %s490 = smul.u32 18, %s27
      %s491 = smul.u32 18, %s27
      %p492 = scmp.lt.s32.totalorder %s28, 1
      %s493 = scalar_select %p492, %s28, 1
      %p494 = scmp.lt.s32.totalorder %s491, 17
      %s495 = scalar_select %p494, %s491, 17
      %s496 = smul.addr %s493, 18
      %s497 = sadd.s32 %s495, %s496
      %s498 = smul.addr %s497, 8
      %s499 = scalar_lea.vmem %s10, %s498
      %s500 = smul.u32 18, %s27
      %s501 = smul.u32 18, %s27
      %p502 = scmp.lt.s32.totalorder %s28, 1
      %s503 = scalar_select %p502, %s28, 1
      %p504 = scmp.lt.s32.totalorder %s501, 17
      %s505 = scalar_select %p504, %s501, 17
      %s506 = smul.addr %s503, 18
      %s507 = sadd.s32 %s505, %s506
      %s508 = smul.addr %s507, 8
      %s509 = scalar_lea.vmem %s11, %s508
      %s510 = smul.u32 18, %s27
      %v511 = vld [vmem:[%s472] sm:$0xff]
      %v512 = vld [vmem:[%s472 + $0x8] sm:$0xff]
      %v513 = vld [vmem:[%s472 + $0x10] sm:$0xff]
      %v514 = vld [vmem:[%s472 + $0x18] sm:$0xff]
      %v515 = vld [vmem:[%s472 + $0x20] sm:$0xff]
      %v516 = vld [vmem:[%s472 + $0x28] sm:$0xff]
      %v517 = vld [vmem:[%s472 + $0x30] sm:$0xff]
      %v518 = vld [vmem:[%s472 + $0x38] sm:$0xff]
      %v519 = vld [vmem:[%s472 + $0x40] sm:$0xff]
      %v520 = vld [vmem:[%s472 + $0x48] sm:$0xff]
      %v521 = vld [vmem:[%s472 + $0x50] sm:$0xff]
      %v522 = vld [vmem:[%s472 + $0x58] sm:$0xff]
      %v523 = vld [vmem:[%s472 + $0x60] sm:$0xff]
      %v524 = vld [vmem:[%s472 + $0x68] sm:$0xff]
      %v525 = vld [vmem:[%s472 + $0x70] sm:$0xff]
      %v526 = vld [vmem:[%s472 + $0x78] sm:$0xff]
      %v527 = vld [vmem:[%s472 + $0x80] sm:$0xff]
      %v528 = vld [vmem:[%s472 + $0x88] sm:$0xff]
      %v529 = vld [vmem:[%s482] sm:$0xff]
      %v530 = vld [vmem:[%s482 + $0x8] sm:$0xff]
      %v531 = vld [vmem:[%s482 + $0x10] sm:$0xff]
      %v532 = vld [vmem:[%s482 + $0x18] sm:$0xff]
      %v533 = vld [vmem:[%s482 + $0x20] sm:$0xff]
      %v534 = vld [vmem:[%s482 + $0x28] sm:$0xff]
      %v535 = vld [vmem:[%s482 + $0x30] sm:$0xff]
      %v536 = vld [vmem:[%s482 + $0x38] sm:$0xff]
      %v537 = vld [vmem:[%s482 + $0x40] sm:$0xff]
      %v538 = vld [vmem:[%s482 + $0x48] sm:$0xff]
      %v539 = vld [vmem:[%s482 + $0x50] sm:$0xff]
      %v540 = vld [vmem:[%s482 + $0x58] sm:$0xff]
      %v541 = vld [vmem:[%s482 + $0x60] sm:$0xff]
      %v542 = vld [vmem:[%s482 + $0x68] sm:$0xff]
      %v543 = vld [vmem:[%s482 + $0x70] sm:$0xff]
      %v544 = vld [vmem:[%s482 + $0x78] sm:$0xff]
      %v545 = vld [vmem:[%s482 + $0x80] sm:$0xff]
      %v546 = vld [vmem:[%s482 + $0x88] sm:$0xff]
      %547 = vadd.xlane.f32.xlu0 %v511
      %v548 = vpop.xlane.xlu0 %547
      %549 = vadd.xlane.f32.xlu0 %v512
      %v550 = vpop.xlane.xlu0 %549
      %551 = vadd.xlane.f32.xlu0 %v513
      %v552 = vpop.xlane.xlu0 %551
      %553 = vadd.xlane.f32.xlu0 %v514
      %v554 = vpop.xlane.xlu0 %553
      %555 = vadd.xlane.f32.xlu0 %v515
      %v556 = vpop.xlane.xlu0 %555
      %557 = vadd.xlane.f32.xlu0 %v516
      %v558 = vpop.xlane.xlu0 %557
      %559 = vadd.xlane.f32.xlu0 %v517
      %v560 = vpop.xlane.xlu0 %559
      %561 = vadd.xlane.f32.xlu0 %v518
      %v562 = vpop.xlane.xlu0 %561
      %563 = vadd.xlane.f32.xlu0 %v519
      %v564 = vpop.xlane.xlu0 %563
      %565 = vadd.xlane.f32.xlu0 %v520
      %v566 = vpop.xlane.xlu0 %565
      %567 = vadd.xlane.f32.xlu0 %v521
      %v568 = vpop.xlane.xlu0 %567
      %569 = vadd.xlane.f32.xlu0 %v522
      %v570 = vpop.xlane.xlu0 %569
      %571 = vadd.xlane.f32.xlu0 %v523
      %v572 = vpop.xlane.xlu0 %571
      %573 = vadd.xlane.f32.xlu0 %v524
      %v574 = vpop.xlane.xlu0 %573
      %575 = vadd.xlane.f32.xlu0 %v525
      %v576 = vpop.xlane.xlu0 %575
      %577 = vadd.xlane.f32.xlu0 %v526
      %v578 = vpop.xlane.xlu0 %577
      %579 = vadd.xlane.f32.xlu0 %v527
      %v580 = vpop.xlane.xlu0 %579
      %581 = vadd.xlane.f32.xlu0 %v528
      %v582 = vpop.xlane.xlu0 %581
      %v583 = vmul.f32 %v548, 0.03125
      %v584 = vmul.f32 %v550, 0.03125
      %v585 = vmul.f32 %v552, 0.03125
      %v586 = vmul.f32 %v554, 0.03125
      %v587 = vmul.f32 %v556, 0.03125
      %v588 = vmul.f32 %v558, 0.03125
      %v589 = vmul.f32 %v560, 0.03125
      %v590 = vmul.f32 %v562, 0.03125
      %v591 = vmul.f32 %v564, 0.03125
      %v592 = vmul.f32 %v566, 0.03125
      %v593 = vmul.f32 %v568, 0.03125
      %v594 = vmul.f32 %v570, 0.03125
      %v595 = vmul.f32 %v572, 0.03125
      %v596 = vmul.f32 %v574, 0.03125
      %v597 = vmul.f32 %v576, 0.03125
      %v598 = vmul.f32 %v578, 0.03125
      %v599 = vmul.f32 %v580, 0.03125
      %v600 = vmul.f32 %v582, 0.03125
      %601 = vadd.xlane.f32.xlu0 %v529
      %v602 = vpop.xlane.xlu0 %601
      %603 = vadd.xlane.f32.xlu0 %v530
      %v604 = vpop.xlane.xlu0 %603
      %605 = vadd.xlane.f32.xlu0 %v531
      %v606 = vpop.xlane.xlu0 %605
      %607 = vadd.xlane.f32.xlu0 %v532
      %v608 = vpop.xlane.xlu0 %607
      %609 = vadd.xlane.f32.xlu0 %v533
      %v610 = vpop.xlane.xlu0 %609
      %611 = vadd.xlane.f32.xlu0 %v534
      %v612 = vpop.xlane.xlu0 %611
      %613 = vadd.xlane.f32.xlu0 %v535
      %v614 = vpop.xlane.xlu0 %613
      %615 = vadd.xlane.f32.xlu0 %v536
      %v616 = vpop.xlane.xlu0 %615
      %617 = vadd.xlane.f32.xlu0 %v537
      %v618 = vpop.xlane.xlu0 %617
      %619 = vadd.xlane.f32.xlu0 %v538
      %v620 = vpop.xlane.xlu0 %619
      %621 = vadd.xlane.f32.xlu0 %v539
      %v622 = vpop.xlane.xlu0 %621
      %623 = vadd.xlane.f32.xlu0 %v540
      %v624 = vpop.xlane.xlu0 %623
      %625 = vadd.xlane.f32.xlu0 %v541
      %v626 = vpop.xlane.xlu0 %625
      %627 = vadd.xlane.f32.xlu0 %v542
      %v628 = vpop.xlane.xlu0 %627
      %629 = vadd.xlane.f32.xlu0 %v543
      %v630 = vpop.xlane.xlu0 %629
      %631 = vadd.xlane.f32.xlu0 %v544
      %v632 = vpop.xlane.xlu0 %631
      %633 = vadd.xlane.f32.xlu0 %v545
      %v634 = vpop.xlane.xlu0 %633
      %635 = vadd.xlane.f32.xlu0 %v546
      %v636 = vpop.xlane.xlu0 %635
      %v637 = vmul.f32 %v602, 0.03125
      %v638 = vmul.f32 %v604, 0.03125
      %v639 = vmul.f32 %v606, 0.03125
      %v640 = vmul.f32 %v608, 0.03125
      %v641 = vmul.f32 %v610, 0.03125
      %v642 = vmul.f32 %v612, 0.03125
      %v643 = vmul.f32 %v614, 0.03125
      %v644 = vmul.f32 %v616, 0.03125
      %v645 = vmul.f32 %v618, 0.03125
      %v646 = vmul.f32 %v620, 0.03125
      %v647 = vmul.f32 %v622, 0.03125
      %v648 = vmul.f32 %v624, 0.03125
      %v649 = vmul.f32 %v626, 0.03125
      %v650 = vmul.f32 %v628, 0.03125
      %v651 = vmul.f32 %v630, 0.03125
      %v652 = vmul.f32 %v632, 0.03125
      %v653 = vmul.f32 %v634, 0.03125
      %v654 = vmul.f32 %v636, 0.03125
      %v655 = vmul.f32 %v511, %v511
      %v656 = vmul.f32 %v512, %v512
      %v657 = vmul.f32 %v513, %v513
      %v658 = vmul.f32 %v514, %v514
      %v659 = vmul.f32 %v515, %v515
      %v660 = vmul.f32 %v516, %v516
      %v661 = vmul.f32 %v517, %v517
      %v662 = vmul.f32 %v518, %v518
      %v663 = vmul.f32 %v519, %v519
      %v664 = vmul.f32 %v520, %v520
      %v665 = vmul.f32 %v521, %v521
      %v666 = vmul.f32 %v522, %v522
      %v667 = vmul.f32 %v523, %v523
      %v668 = vmul.f32 %v524, %v524
      %v669 = vmul.f32 %v525, %v525
      %v670 = vmul.f32 %v526, %v526
      %v671 = vmul.f32 %v527, %v527
      %v672 = vmul.f32 %v528, %v528
      %v673 = vmul.f32 %v529, %v529
      %v674 = vmul.f32 %v530, %v530
      %v675 = vmul.f32 %v531, %v531
      %v676 = vmul.f32 %v532, %v532
      %v677 = vmul.f32 %v533, %v533
      %v678 = vmul.f32 %v534, %v534
      %v679 = vmul.f32 %v535, %v535
      %v680 = vmul.f32 %v536, %v536
      %v681 = vmul.f32 %v537, %v537
      %v682 = vmul.f32 %v538, %v538
      %v683 = vmul.f32 %v539, %v539
      %v684 = vmul.f32 %v540, %v540
      %v685 = vmul.f32 %v541, %v541
      %v686 = vmul.f32 %v542, %v542
      %v687 = vmul.f32 %v543, %v543
      %v688 = vmul.f32 %v544, %v544
      %v689 = vmul.f32 %v545, %v545
      %v690 = vmul.f32 %v546, %v546
      %v691 = vadd.f32 %v655, %v673
      %v692 = vadd.f32 %v656, %v674
      %v693 = vadd.f32 %v657, %v675
      %v694 = vadd.f32 %v658, %v676
      %v695 = vadd.f32 %v659, %v677
      %v696 = vadd.f32 %v660, %v678
      %v697 = vadd.f32 %v661, %v679
      %v698 = vadd.f32 %v662, %v680
      %v699 = vadd.f32 %v663, %v681
      %v700 = vadd.f32 %v664, %v682
      %v701 = vadd.f32 %v665, %v683
      %v702 = vadd.f32 %v666, %v684
      %v703 = vadd.f32 %v667, %v685
      %v704 = vadd.f32 %v668, %v686
      %v705 = vadd.f32 %v669, %v687
      %v706 = vadd.f32 %v670, %v688
      %v707 = vadd.f32 %v671, %v689
      %v708 = vadd.f32 %v672, %v690
      %709 = vadd.xlane.f32.xlu0 %v691
      %v710 = vpop.xlane.xlu0 %709
      %711 = vadd.xlane.f32.xlu0 %v692
      %v712 = vpop.xlane.xlu0 %711
      %713 = vadd.xlane.f32.xlu0 %v693
      %v714 = vpop.xlane.xlu0 %713
      %715 = vadd.xlane.f32.xlu0 %v694
      %v716 = vpop.xlane.xlu0 %715
      %717 = vadd.xlane.f32.xlu0 %v695
      %v718 = vpop.xlane.xlu0 %717
      %719 = vadd.xlane.f32.xlu0 %v696
      %v720 = vpop.xlane.xlu0 %719
      %721 = vadd.xlane.f32.xlu0 %v697
      %v722 = vpop.xlane.xlu0 %721
      %723 = vadd.xlane.f32.xlu0 %v698
      %v724 = vpop.xlane.xlu0 %723
      %725 = vadd.xlane.f32.xlu0 %v699
      %v726 = vpop.xlane.xlu0 %725
      %727 = vadd.xlane.f32.xlu0 %v700
      %v728 = vpop.xlane.xlu0 %727
      %729 = vadd.xlane.f32.xlu0 %v701
      %v730 = vpop.xlane.xlu0 %729
      %731 = vadd.xlane.f32.xlu0 %v702
      %v732 = vpop.xlane.xlu0 %731
      %733 = vadd.xlane.f32.xlu0 %v703
      %v734 = vpop.xlane.xlu0 %733
      %735 = vadd.xlane.f32.xlu0 %v704
      %v736 = vpop.xlane.xlu0 %735
      %737 = vadd.xlane.f32.xlu0 %v705
      %v738 = vpop.xlane.xlu0 %737
      %739 = vadd.xlane.f32.xlu0 %v706
      %v740 = vpop.xlane.xlu0 %739
      %741 = vadd.xlane.f32.xlu0 %v707
      %v742 = vpop.xlane.xlu0 %741
      %743 = vadd.xlane.f32.xlu0 %v708
      %v744 = vpop.xlane.xlu0 %743
      %v745 = vmul.f32 %v583, %v583
      %v746 = vmul.f32 %v584, %v584
      %v747 = vmul.f32 %v585, %v585
      %v748 = vmul.f32 %v586, %v586
      %v749 = vmul.f32 %v587, %v587
      %v750 = vmul.f32 %v588, %v588
      %v751 = vmul.f32 %v589, %v589
      %v752 = vmul.f32 %v590, %v590
      %v753 = vmul.f32 %v591, %v591
      %v754 = vmul.f32 %v592, %v592
      %v755 = vmul.f32 %v593, %v593
      %v756 = vmul.f32 %v594, %v594
      %v757 = vmul.f32 %v595, %v595
      %v758 = vmul.f32 %v596, %v596
      %v759 = vmul.f32 %v597, %v597
      %v760 = vmul.f32 %v598, %v598
      %v761 = vmul.f32 %v599, %v599
      %v762 = vmul.f32 %v600, %v600
      %v763 = vmul.f32 %v637, %v637
      %v764 = vmul.f32 %v638, %v638
      %v765 = vmul.f32 %v639, %v639
      %v766 = vmul.f32 %v640, %v640
      %v767 = vmul.f32 %v641, %v641
      %v768 = vmul.f32 %v642, %v642
      %v769 = vmul.f32 %v643, %v643
      %v770 = vmul.f32 %v644, %v644
      %v771 = vmul.f32 %v645, %v645
      %v772 = vmul.f32 %v646, %v646
      %v773 = vmul.f32 %v647, %v647
      %v774 = vmul.f32 %v648, %v648
      %v775 = vmul.f32 %v649, %v649
      %v776 = vmul.f32 %v650, %v650
      %v777 = vmul.f32 %v651, %v651
      %v778 = vmul.f32 %v652, %v652
      %v779 = vmul.f32 %v653, %v653
      %v780 = vmul.f32 %v654, %v654
      %v781 = vadd.f32 %v745, %v763
      %v782 = vadd.f32 %v746, %v764
      %v783 = vadd.f32 %v747, %v765
      %v784 = vadd.f32 %v748, %v766
      %v785 = vadd.f32 %v749, %v767
      %v786 = vadd.f32 %v750, %v768
      %v787 = vadd.f32 %v751, %v769
      %v788 = vadd.f32 %v752, %v770
      %v789 = vadd.f32 %v753, %v771
      %v790 = vadd.f32 %v754, %v772
      %v791 = vadd.f32 %v755, %v773
      %v792 = vadd.f32 %v756, %v774
      %v793 = vadd.f32 %v757, %v775
      %v794 = vadd.f32 %v758, %v776
      %v795 = vadd.f32 %v759, %v777
      %v796 = vadd.f32 %v760, %v778
      %v797 = vadd.f32 %v761, %v779
      %v798 = vadd.f32 %v762, %v780
      %v799 = vmul.f32 %v781, 32.0
      %v800 = vmul.f32 %v782, 32.0
      %v801 = vmul.f32 %v783, 32.0
      %v802 = vmul.f32 %v784, 32.0
      %v803 = vmul.f32 %v785, 32.0
      %v804 = vmul.f32 %v786, 32.0
      %v805 = vmul.f32 %v787, 32.0
      %v806 = vmul.f32 %v788, 32.0
      %v807 = vmul.f32 %v789, 32.0
      %v808 = vmul.f32 %v790, 32.0
      %v809 = vmul.f32 %v791, 32.0
      %v810 = vmul.f32 %v792, 32.0
      %v811 = vmul.f32 %v793, 32.0
      %v812 = vmul.f32 %v794, 32.0
      %v813 = vmul.f32 %v795, 32.0
      %v814 = vmul.f32 %v796, 32.0
      %v815 = vmul.f32 %v797, 32.0
      %v816 = vmul.f32 %v798, 32.0
      %v817 = vsub.f32 %v710, %v799
      %v818 = vsub.f32 %v712, %v800
      %v819 = vsub.f32 %v714, %v801
      %v820 = vsub.f32 %v716, %v802
      %v821 = vsub.f32 %v718, %v803
      %v822 = vsub.f32 %v720, %v804
      %v823 = vsub.f32 %v722, %v805
      %v824 = vsub.f32 %v724, %v806
      %v825 = vsub.f32 %v726, %v807
      %v826 = vsub.f32 %v728, %v808
      %v827 = vsub.f32 %v730, %v809
      %v828 = vsub.f32 %v732, %v810
      %v829 = vsub.f32 %v734, %v811
      %v830 = vsub.f32 %v736, %v812
      %v831 = vsub.f32 %v738, %v813
      %v832 = vsub.f32 %v740, %v814
      %v833 = vsub.f32 %v742, %v815
      %v834 = vsub.f32 %v744, %v816
      %v835 = vmul.f32 %v817, 0.032258064
      %v836 = vmul.f32 %v818, 0.032258064
      %v837 = vmul.f32 %v819, 0.032258064
      %v838 = vmul.f32 %v820, 0.032258064
      %v839 = vmul.f32 %v821, 0.032258064
      %v840 = vmul.f32 %v822, 0.032258064
      %v841 = vmul.f32 %v823, 0.032258064
      %v842 = vmul.f32 %v824, 0.032258064
      %v843 = vmul.f32 %v825, 0.032258064
      %v844 = vmul.f32 %v826, 0.032258064
      %v845 = vmul.f32 %v827, 0.032258064
      %v846 = vmul.f32 %v828, 0.032258064
      %v847 = vmul.f32 %v829, 0.032258064
      %v848 = vmul.f32 %v830, 0.032258064
      %v849 = vmul.f32 %v831, 0.032258064
      %v850 = vmul.f32 %v832, 0.032258064
      %v851 = vmul.f32 %v833, 0.032258064
      %v852 = vmul.f32 %v834, 0.032258064
      %v853 = vmax.f32 %v835, 0.0
      %v854 = vmax.f32 %v836, 0.0
      %v855 = vmax.f32 %v837, 0.0
      %v856 = vmax.f32 %v838, 0.0
      %v857 = vmax.f32 %v839, 0.0
      %v858 = vmax.f32 %v840, 0.0
      %v859 = vmax.f32 %v841, 0.0
      %v860 = vmax.f32 %v842, 0.0
      %v861 = vmax.f32 %v843, 0.0
      %v862 = vmax.f32 %v844, 0.0
      %v863 = vmax.f32 %v845, 0.0
      %v864 = vmax.f32 %v846, 0.0
      %v865 = vmax.f32 %v847, 0.0
      %v866 = vmax.f32 %v848, 0.0
      %v867 = vmax.f32 %v849, 0.0
      %v868 = vmax.f32 %v850, 0.0
      %v869 = vmax.f32 %v851, 0.0
      %v870 = vmax.f32 %v852, 0.0
      %v871 = vrsqrt.pop %v853
      %v872 = vmul.f32 %v871, %v853
      %v873 = vmul.f32 %v872, %v871
      %v874 = vmul.f32 0.5, %v873
      %v875 = vsub.f32 1.5, %v874
      %v876 = vmul.f32 %v871, %v875
      %v877 = vmul.f32 %v853, %v876
      %vm878 = vcmp.eq.f32.partialorder %v853, inf
      %v879 = vsel %vm878, %v853, %v877
      %vm880 = vcmp.eq.f32.partialorder %v853, 0.0
      %v881 = vand.u32 %v853, 2147483648
      %v882 = vsel %vm880, %v881, %v879
      %v883 = vrsqrt.pop %v854
      %v884 = vmul.f32 %v883, %v854
      %v885 = vmul.f32 %v884, %v883
      %v886 = vmul.f32 0.5, %v885
      %v887 = vsub.f32 1.5, %v886
      %v888 = vmul.f32 %v883, %v887
      %v889 = vmul.f32 %v854, %v888
      %vm890 = vcmp.eq.f32.partialorder %v854, inf
      %v891 = vsel %vm890, %v854, %v889
      %vm892 = vcmp.eq.f32.partialorder %v854, 0.0
      %v893 = vand.u32 %v854, 2147483648
      %v894 = vsel %vm892, %v893, %v891
      %v895 = vrsqrt.pop %v855
      %v896 = vmul.f32 %v895, %v855
      %v897 = vmul.f32 %v896, %v895
      %v898 = vmul.f32 0.5, %v897
      %v899 = vsub.f32 1.5, %v898
      %v900 = vmul.f32 %v895, %v899
      %v901 = vmul.f32 %v855, %v900
      %vm902 = vcmp.eq.f32.partialorder %v855, inf
      %v903 = vsel %vm902, %v855, %v901
      %vm904 = vcmp.eq.f32.partialorder %v855, 0.0
      %v905 = vand.u32 %v855, 2147483648
      %v906 = vsel %vm904, %v905, %v903
      %v907 = vrsqrt.pop %v856
      %v908 = vmul.f32 %v907, %v856
      %v909 = vmul.f32 %v908, %v907
      %v910 = vmul.f32 0.5, %v909
      %v911 = vsub.f32 1.5, %v910
      %v912 = vmul.f32 %v907, %v911
      %v913 = vmul.f32 %v856, %v912
      %vm914 = vcmp.eq.f32.partialorder %v856, inf
      %v915 = vsel %vm914, %v856, %v913
      %vm916 = vcmp.eq.f32.partialorder %v856, 0.0
      %v917 = vand.u32 %v856, 2147483648
      %v918 = vsel %vm916, %v917, %v915
      %v919 = vrsqrt.pop %v857
      %v920 = vmul.f32 %v919, %v857
      %v921 = vmul.f32 %v920, %v919
      %v922 = vmul.f32 0.5, %v921
      %v923 = vsub.f32 1.5, %v922
      %v924 = vmul.f32 %v919, %v923
      %v925 = vmul.f32 %v857, %v924
      %vm926 = vcmp.eq.f32.partialorder %v857, inf
      %v927 = vsel %vm926, %v857, %v925
      %vm928 = vcmp.eq.f32.partialorder %v857, 0.0
      %v929 = vand.u32 %v857, 2147483648
      %v930 = vsel %vm928, %v929, %v927
      %v931 = vrsqrt.pop %v858
      %v932 = vmul.f32 %v931, %v858
      %v933 = vmul.f32 %v932, %v931
      %v934 = vmul.f32 0.5, %v933
      %v935 = vsub.f32 1.5, %v934
      %v936 = vmul.f32 %v931, %v935
      %v937 = vmul.f32 %v858, %v936
      %vm938 = vcmp.eq.f32.partialorder %v858, inf
      %v939 = vsel %vm938, %v858, %v937
      %vm940 = vcmp.eq.f32.partialorder %v858, 0.0
      %v941 = vand.u32 %v858, 2147483648
      %v942 = vsel %vm940, %v941, %v939
      %v943 = vrsqrt.pop %v859
      %v944 = vmul.f32 %v943, %v859
      %v945 = vmul.f32 %v944, %v943
      %v946 = vmul.f32 0.5, %v945
      %v947 = vsub.f32 1.5, %v946
      %v948 = vmul.f32 %v943, %v947
      %v949 = vmul.f32 %v859, %v948
      %vm950 = vcmp.eq.f32.partialorder %v859, inf
      %v951 = vsel %vm950, %v859, %v949
      %vm952 = vcmp.eq.f32.partialorder %v859, 0.0
      %v953 = vand.u32 %v859, 2147483648
      %v954 = vsel %vm952, %v953, %v951
      %v955 = vrsqrt.pop %v860
      %v956 = vmul.f32 %v955, %v860
      %v957 = vmul.f32 %v956, %v955
      %v958 = vmul.f32 0.5, %v957
      %v959 = vsub.f32 1.5, %v958
      %v960 = vmul.f32 %v955, %v959
      %v961 = vmul.f32 %v860, %v960
      %vm962 = vcmp.eq.f32.partialorder %v860, inf
      %v963 = vsel %vm962, %v860, %v961
      %vm964 = vcmp.eq.f32.partialorder %v860, 0.0
      %v965 = vand.u32 %v860, 2147483648
      %v966 = vsel %vm964, %v965, %v963
      %v967 = vrsqrt.pop %v861
      %v968 = vmul.f32 %v967, %v861
      %v969 = vmul.f32 %v968, %v967
      %v970 = vmul.f32 0.5, %v969
      %v971 = vsub.f32 1.5, %v970
      %v972 = vmul.f32 %v967, %v971
      %v973 = vmul.f32 %v861, %v972
      %vm974 = vcmp.eq.f32.partialorder %v861, inf
      %v975 = vsel %vm974, %v861, %v973
      %vm976 = vcmp.eq.f32.partialorder %v861, 0.0
      %v977 = vand.u32 %v861, 2147483648
      %v978 = vsel %vm976, %v977, %v975
      %v979 = vrsqrt.pop %v862
      %v980 = vmul.f32 %v979, %v862
      %v981 = vmul.f32 %v980, %v979
      %v982 = vmul.f32 0.5, %v981
      %v983 = vsub.f32 1.5, %v982
      %v984 = vmul.f32 %v979, %v983
      %v985 = vmul.f32 %v862, %v984
      %vm986 = vcmp.eq.f32.partialorder %v862, inf
      %v987 = vsel %vm986, %v862, %v985
      %vm988 = vcmp.eq.f32.partialorder %v862, 0.0
      %v989 = vand.u32 %v862, 2147483648
      %v990 = vsel %vm988, %v989, %v987
      %v991 = vrsqrt.pop %v863
      %v992 = vmul.f32 %v991, %v863
      %v993 = vmul.f32 %v992, %v991
      %v994 = vmul.f32 0.5, %v993
      %v995 = vsub.f32 1.5, %v994
      %v996 = vmul.f32 %v991, %v995
      %v997 = vmul.f32 %v863, %v996
      %vm998 = vcmp.eq.f32.partialorder %v863, inf
      %v999 = vsel %vm998, %v863, %v997
      %vm1000 = vcmp.eq.f32.partialorder %v863, 0.0
      %v1001 = vand.u32 %v863, 2147483648
      %v1002 = vsel %vm1000, %v1001, %v999
      %v1003 = vrsqrt.pop %v864
      %v1004 = vmul.f32 %v1003, %v864
      %v1005 = vmul.f32 %v1004, %v1003
      %v1006 = vmul.f32 0.5, %v1005
      %v1007 = vsub.f32 1.5, %v1006
      %v1008 = vmul.f32 %v1003, %v1007
      %v1009 = vmul.f32 %v864, %v1008
      %vm1010 = vcmp.eq.f32.partialorder %v864, inf
      %v1011 = vsel %vm1010, %v864, %v1009
      %vm1012 = vcmp.eq.f32.partialorder %v864, 0.0
      %v1013 = vand.u32 %v864, 2147483648
      %v1014 = vsel %vm1012, %v1013, %v1011
      %v1015 = vrsqrt.pop %v865
      %v1016 = vmul.f32 %v1015, %v865
      %v1017 = vmul.f32 %v1016, %v1015
      %v1018 = vmul.f32 0.5, %v1017
      %v1019 = vsub.f32 1.5, %v1018
      %v1020 = vmul.f32 %v1015, %v1019
      %v1021 = vmul.f32 %v865, %v1020
      %vm1022 = vcmp.eq.f32.partialorder %v865, inf
      %v1023 = vsel %vm1022, %v865, %v1021
      %vm1024 = vcmp.eq.f32.partialorder %v865, 0.0
      %v1025 = vand.u32 %v865, 2147483648
      %v1026 = vsel %vm1024, %v1025, %v1023
      %v1027 = vrsqrt.pop %v866
      %v1028 = vmul.f32 %v1027, %v866
      %v1029 = vmul.f32 %v1028, %v1027
      %v1030 = vmul.f32 0.5, %v1029
      %v1031 = vsub.f32 1.5, %v1030
      %v1032 = vmul.f32 %v1027, %v1031
      %v1033 = vmul.f32 %v866, %v1032
      %vm1034 = vcmp.eq.f32.partialorder %v866, inf
      %v1035 = vsel %vm1034, %v866, %v1033
      %vm1036 = vcmp.eq.f32.partialorder %v866, 0.0
      %v1037 = vand.u32 %v866, 2147483648
      %v1038 = vsel %vm1036, %v1037, %v1035
      %v1039 = vrsqrt.pop %v867
      %v1040 = vmul.f32 %v1039, %v867
      %v1041 = vmul.f32 %v1040, %v1039
      %v1042 = vmul.f32 0.5, %v1041
      %v1043 = vsub.f32 1.5, %v1042
      %v1044 = vmul.f32 %v1039, %v1043
      %v1045 = vmul.f32 %v867, %v1044
      %vm1046 = vcmp.eq.f32.partialorder %v867, inf
      %v1047 = vsel %vm1046, %v867, %v1045
      %vm1048 = vcmp.eq.f32.partialorder %v867, 0.0
      %v1049 = vand.u32 %v867, 2147483648
      %v1050 = vsel %vm1048, %v1049, %v1047
      %v1051 = vrsqrt.pop %v868
      %v1052 = vmul.f32 %v1051, %v868
      %v1053 = vmul.f32 %v1052, %v1051
      %v1054 = vmul.f32 0.5, %v1053
      %v1055 = vsub.f32 1.5, %v1054
      %v1056 = vmul.f32 %v1051, %v1055
      %v1057 = vmul.f32 %v868, %v1056
      %vm1058 = vcmp.eq.f32.partialorder %v868, inf
      %v1059 = vsel %vm1058, %v868, %v1057
      %vm1060 = vcmp.eq.f32.partialorder %v868, 0.0
      %v1061 = vand.u32 %v868, 2147483648
      %v1062 = vsel %vm1060, %v1061, %v1059
      %v1063 = vrsqrt.pop %v869
      %v1064 = vmul.f32 %v1063, %v869
      %v1065 = vmul.f32 %v1064, %v1063
      %v1066 = vmul.f32 0.5, %v1065
      %v1067 = vsub.f32 1.5, %v1066
      %v1068 = vmul.f32 %v1063, %v1067
      %v1069 = vmul.f32 %v869, %v1068
      %vm1070 = vcmp.eq.f32.partialorder %v869, inf
      %v1071 = vsel %vm1070, %v869, %v1069
      %vm1072 = vcmp.eq.f32.partialorder %v869, 0.0
      %v1073 = vand.u32 %v869, 2147483648
      %v1074 = vsel %vm1072, %v1073, %v1071
      %v1075 = vrsqrt.pop %v870
      %v1076 = vmul.f32 %v1075, %v870
      %v1077 = vmul.f32 %v1076, %v1075
      %v1078 = vmul.f32 0.5, %v1077
      %v1079 = vsub.f32 1.5, %v1078
      %v1080 = vmul.f32 %v1075, %v1079
      %v1081 = vmul.f32 %v870, %v1080
      %vm1082 = vcmp.eq.f32.partialorder %v870, inf
      %v1083 = vsel %vm1082, %v870, %v1081
      %vm1084 = vcmp.eq.f32.partialorder %v870, 0.0
      %v1085 = vand.u32 %v870, 2147483648
      %v1086 = vsel %vm1084, %v1085, %v1083
      %v1087 = vadd.f32 %v882, 106.0
      %v1088 = vadd.f32 %v894, 106.0
      %v1089 = vadd.f32 %v906, 106.0
      %v1090 = vadd.f32 %v918, 106.0
      %v1091 = vadd.f32 %v930, 106.0
      %v1092 = vadd.f32 %v942, 106.0
      %v1093 = vadd.f32 %v954, 106.0
      %v1094 = vadd.f32 %v966, 106.0
      %v1095 = vadd.f32 %v978, 106.0
      %v1096 = vadd.f32 %v990, 106.0
      %v1097 = vadd.f32 %v1002, 106.0
      %v1098 = vadd.f32 %v1014, 106.0
      %v1099 = vadd.f32 %v1026, 106.0
      %v1100 = vadd.f32 %v1038, 106.0
      %v1101 = vadd.f32 %v1050, 106.0
      %v1102 = vadd.f32 %v1062, 106.0
      %v1103 = vadd.f32 %v1074, 106.0
      %v1104 = vadd.f32 %v1086, 106.0
      %v1105 = vrcp.pop %v1087
      %v1106 = vrcp.pop %v1088
      %v1107 = vrcp.pop %v1089
      %v1108 = vrcp.pop %v1090
      %v1109 = vrcp.pop %v1091
      %v1110 = vrcp.pop %v1092
      %v1111 = vrcp.pop %v1093
      %v1112 = vrcp.pop %v1094
      %v1113 = vrcp.pop %v1095
      %v1114 = vrcp.pop %v1096
      %v1115 = vrcp.pop %v1097
      %v1116 = vrcp.pop %v1098
      %v1117 = vrcp.pop %v1099
      %v1118 = vrcp.pop %v1100
      %v1119 = vrcp.pop %v1101
      %v1120 = vrcp.pop %v1102
      %v1121 = vrcp.pop %v1103
      %v1122 = vrcp.pop %v1104
      %v1123 = vld [vmem:[%s3] sm:$0x1]
      %v1125 = vperm.slane %v1123, 0
      %v1127 = vmul.f32 %v1105, %v1125
      %v1128 = vmul.f32 %v1106, %v1125
      %v1129 = vmul.f32 %v1107, %v1125
      %v1130 = vmul.f32 %v1108, %v1125
      %v1131 = vmul.f32 %v1109, %v1125
      %v1132 = vmul.f32 %v1110, %v1125
      %v1133 = vmul.f32 %v1111, %v1125
      %v1134 = vmul.f32 %v1112, %v1125
      %v1135 = vmul.f32 %v1113, %v1125
      %v1136 = vmul.f32 %v1114, %v1125
      %v1137 = vmul.f32 %v1115, %v1125
      %v1138 = vmul.f32 %v1116, %v1125
      %v1139 = vmul.f32 %v1117, %v1125
      %v1140 = vmul.f32 %v1118, %v1125
      %v1141 = vmul.f32 %v1119, %v1125
      %v1142 = vmul.f32 %v1120, %v1125
      %v1143 = vmul.f32 %v1121, %v1125
      %v1144 = vmul.f32 %v1122, %v1125
      %v1145 = vsub.f32 %v511, %v583
      %v1146 = vsub.f32 %v512, %v584
      %v1147 = vsub.f32 %v513, %v585
      %v1148 = vsub.f32 %v514, %v586
      %v1149 = vsub.f32 %v515, %v587
      %v1150 = vsub.f32 %v516, %v588
      %v1151 = vsub.f32 %v517, %v589
      %v1152 = vsub.f32 %v518, %v590
      %v1153 = vsub.f32 %v519, %v591
      %v1154 = vsub.f32 %v520, %v592
      %v1155 = vsub.f32 %v521, %v593
      %v1156 = vsub.f32 %v522, %v594
      %v1157 = vsub.f32 %v523, %v595
      %v1158 = vsub.f32 %v524, %v596
      %v1159 = vsub.f32 %v525, %v597
      %v1160 = vsub.f32 %v526, %v598
      %v1161 = vsub.f32 %v527, %v599
      %v1162 = vsub.f32 %v528, %v600
      %v1163 = vmul.f32 %v1145, %v1127
      %v1164 = vmul.f32 %v1146, %v1128
      %v1165 = vmul.f32 %v1147, %v1129
      %v1166 = vmul.f32 %v1148, %v1130
      %v1167 = vmul.f32 %v1149, %v1131
      %v1168 = vmul.f32 %v1150, %v1132
      %v1169 = vmul.f32 %v1151, %v1133
      %v1170 = vmul.f32 %v1152, %v1134
      %v1171 = vmul.f32 %v1153, %v1135
      %v1172 = vmul.f32 %v1154, %v1136
      %v1173 = vmul.f32 %v1155, %v1137
      %v1174 = vmul.f32 %v1156, %v1138
      %v1175 = vmul.f32 %v1157, %v1139
      %v1176 = vmul.f32 %v1158, %v1140
      %v1177 = vmul.f32 %v1159, %v1141
      %v1178 = vmul.f32 %v1160, %v1142
      %v1179 = vmul.f32 %v1161, %v1143
      %v1180 = vmul.f32 %v1162, %v1144
      %v1181 = vsub.f32 %v529, %v637
      %v1182 = vsub.f32 %v530, %v638
      %v1183 = vsub.f32 %v531, %v639
      %v1184 = vsub.f32 %v532, %v640
      %v1185 = vsub.f32 %v533, %v641
      %v1186 = vsub.f32 %v534, %v642
      %v1187 = vsub.f32 %v535, %v643
      %v1188 = vsub.f32 %v536, %v644
      %v1189 = vsub.f32 %v537, %v645
      %v1190 = vsub.f32 %v538, %v646
      %v1191 = vsub.f32 %v539, %v647
      %v1192 = vsub.f32 %v540, %v648
      %v1193 = vsub.f32 %v541, %v649
      %v1194 = vsub.f32 %v542, %v650
      %v1195 = vsub.f32 %v543, %v651
      %v1196 = vsub.f32 %v544, %v652
      %v1197 = vsub.f32 %v545, %v653
      %v1198 = vsub.f32 %v546, %v654
      %v1199 = vmul.f32 %v1181, %v1127
      %v1200 = vmul.f32 %v1182, %v1128
      %v1201 = vmul.f32 %v1183, %v1129
      %v1202 = vmul.f32 %v1184, %v1130
      %v1203 = vmul.f32 %v1185, %v1131
      %v1204 = vmul.f32 %v1186, %v1132
      %v1205 = vmul.f32 %v1187, %v1133
      %v1206 = vmul.f32 %v1188, %v1134
      %v1207 = vmul.f32 %v1189, %v1135
      %v1208 = vmul.f32 %v1190, %v1136
      %v1209 = vmul.f32 %v1191, %v1137
      %v1210 = vmul.f32 %v1192, %v1138
      %v1211 = vmul.f32 %v1193, %v1139
      %v1212 = vmul.f32 %v1194, %v1140
      %v1213 = vmul.f32 %v1195, %v1141
      %v1214 = vmul.f32 %v1196, %v1142
      %v1215 = vmul.f32 %v1197, %v1143
      %v1216 = vmul.f32 %v1198, %v1144
      %v1217 = vld [vmem:[%s4] sm:$0x3]
      %v1219 = vperm.slane %v1217, 0
      %v1220 = vperm.slane %v1217, 1
      %v1223 = vadd.f32 %v1163, %v1219
      %v1224 = vadd.f32 %v1199, %v1220
      %v1225 = vadd.f32 %v1164, %v1219
      %v1226 = vadd.f32 %v1200, %v1220
      %v1227 = vadd.f32 %v1165, %v1219
      %v1228 = vadd.f32 %v1201, %v1220
      %v1229 = vadd.f32 %v1166, %v1219
      %v1230 = vadd.f32 %v1202, %v1220
      %v1231 = vadd.f32 %v1167, %v1219
      %v1232 = vadd.f32 %v1203, %v1220
      %v1233 = vadd.f32 %v1168, %v1219
      %v1234 = vadd.f32 %v1204, %v1220
      %v1235 = vadd.f32 %v1169, %v1219
      %v1236 = vadd.f32 %v1205, %v1220
      %v1237 = vadd.f32 %v1170, %v1219
      %v1238 = vadd.f32 %v1206, %v1220
      %v1239 = vadd.f32 %v1171, %v1219
      %v1240 = vadd.f32 %v1207, %v1220
      %v1241 = vadd.f32 %v1172, %v1219
      %v1242 = vadd.f32 %v1208, %v1220
      %v1243 = vadd.f32 %v1173, %v1219
      %v1244 = vadd.f32 %v1209, %v1220
      %v1245 = vadd.f32 %v1174, %v1219
      %v1246 = vadd.f32 %v1210, %v1220
      %v1247 = vadd.f32 %v1175, %v1219
      %v1248 = vadd.f32 %v1211, %v1220
      %v1249 = vadd.f32 %v1176, %v1219
      %v1250 = vadd.f32 %v1212, %v1220
      %v1251 = vadd.f32 %v1177, %v1219
      %v1252 = vadd.f32 %v1213, %v1220
      %v1253 = vadd.f32 %v1178, %v1219
      %v1254 = vadd.f32 %v1214, %v1220
      %v1255 = vadd.f32 %v1179, %v1219
      %v1256 = vadd.f32 %v1215, %v1220
      %v1257 = vadd.f32 %v1180, %v1219
      %v1258 = vadd.f32 %v1216, %v1220
      %v1259 = vpack.c.bf16 %v1225, %v1223
      %v1260 = vpack.c.bf16 %v1226, %v1224
      %v1261 = vpack.c.bf16 %v1229, %v1227
      %v1262 = vpack.c.bf16 %v1230, %v1228
      %v1263 = vpack.c.bf16 %v1233, %v1231
      %v1264 = vpack.c.bf16 %v1234, %v1232
      %v1265 = vpack.c.bf16 %v1237, %v1235
      %v1266 = vpack.c.bf16 %v1238, %v1236
      %v1267 = vpack.c.bf16 %v1241, %v1239
      %v1268 = vpack.c.bf16 %v1242, %v1240
      %v1269 = vpack.c.bf16 %v1245, %v1243
      %v1270 = vpack.c.bf16 %v1246, %v1244
      %v1271 = vpack.c.bf16 %v1249, %v1247
      %v1272 = vpack.c.bf16 %v1250, %v1248
      %v1273 = vpack.c.bf16 %v1253, %v1251
      %v1274 = vpack.c.bf16 %v1254, %v1252
      %v1275 = vpack.c.bf16 %v1257, %v1255
      %v1276 = vpack.c.bf16 %v1258, %v1256
      %v1277 = vld [vmem:[%s5] sm:$0xff]
      %v1278 = vld [vmem:[%s5 + $0x8] sm:$0xff]
      %v1279 = vld [vmem:[%s5 + $0x10] sm:$0xff]
      %v1280 = vld [vmem:[%s5 + $0x18] sm:$0xff]
      %v1281 = vld [vmem:[%s5 + $0x20] sm:$0xff]
      %v1282 = vld [vmem:[%s5 + $0x28] sm:$0xff]
      %v1283 = vld [vmem:[%s5 + $0x30] sm:$0xff]
      %v1284 = vld [vmem:[%s5 + $0x38] sm:$0xff]
      %v1285 = vld [vmem:[%s5 + $0x40] sm:$0xff]
      %v1286 = vld [vmem:[%s5 + $0x48] sm:$0xff]
      %v1287 = vld [vmem:[%s5 + $0x50] sm:$0xff]
      %v1288 = vld [vmem:[%s5 + $0x58] sm:$0xff]
      %v1289 = vld [vmem:[%s5 + $0x60] sm:$0xff]
      %v1290 = vld [vmem:[%s5 + $0x68] sm:$0xff]
      %v1291 = vld [vmem:[%s5 + $0x70] sm:$0xff]
      %v1292 = vld [vmem:[%s5 + $0x78] sm:$0xff]
      %v1293 = vld [vmem:[%s5 + $0x80] sm:$0xff]
      %v1294 = vld [vmem:[%s5 + $0x88] sm:$0xff]
      %v1295 = vld [vmem:[%s5 + $0x90] sm:$0xff]
      %v1296 = vld [vmem:[%s5 + $0x98] sm:$0xff]
      %v1297 = vld [vmem:[%s5 + $0xa0] sm:$0xff]
      %v1298 = vld [vmem:[%s5 + $0xa8] sm:$0xff]
      %v1299 = vld [vmem:[%s5 + $0xb0] sm:$0xff]
      %v1300 = vld [vmem:[%s5 + $0xb8] sm:$0xff]
      %v1301 = vld [vmem:[%s5 + $0xc0] sm:$0xff]
      %v1302 = vld [vmem:[%s5 + $0xc8] sm:$0xff]
      %v1303 = vld [vmem:[%s5 + $0xd0] sm:$0xff]
      %v1304 = vld [vmem:[%s5 + $0xd8] sm:$0xff]
      %v1305 = vld [vmem:[%s5 + $0xe0] sm:$0xff]
      %v1306 = vld [vmem:[%s5 + $0xe8] sm:$0xff]
      %v1307 = vld [vmem:[%s5 + $0xf0] sm:$0xff]
      %v1308 = vld [vmem:[%s5 + $0xf8] sm:$0xff]
      %v1309 = vld [vmem:[%s6] sm:$0x3]
      %v1311 = vperm.slane %v1309, 0
      %v1312 = vperm.slane %v1309, 1
      %v1347 = vunpack.c.l.b16 %v1277
      %v1348 = vunpack.c.h.b16 %v1277
      %v1349 = vunpack.c.l.b16 %v1278
      %v1350 = vunpack.c.h.b16 %v1278
      %v1351 = vunpack.c.l.b16 %v1279
      %v1352 = vunpack.c.h.b16 %v1279
      %v1353 = vunpack.c.l.b16 %v1280
      %v1354 = vunpack.c.h.b16 %v1280
      %v1355 = vunpack.c.l.b16 %v1281
      %v1356 = vunpack.c.h.b16 %v1281
      %v1357 = vunpack.c.l.b16 %v1282
      %v1358 = vunpack.c.h.b16 %v1282
      %v1359 = vunpack.c.l.b16 %v1283
      %v1360 = vunpack.c.h.b16 %v1283
      %v1361 = vunpack.c.l.b16 %v1284
      %v1362 = vunpack.c.h.b16 %v1284
      %v1363 = vunpack.c.l.b16 %v1285
      %v1364 = vunpack.c.h.b16 %v1285
      %v1365 = vunpack.c.l.b16 %v1286
      %v1366 = vunpack.c.h.b16 %v1286
      %v1367 = vunpack.c.l.b16 %v1287
      %v1368 = vunpack.c.h.b16 %v1287
      %v1369 = vunpack.c.l.b16 %v1288
      %v1370 = vunpack.c.h.b16 %v1288
      %v1371 = vunpack.c.l.b16 %v1289
      %v1372 = vunpack.c.h.b16 %v1289
      %v1373 = vunpack.c.l.b16 %v1290
      %v1374 = vunpack.c.h.b16 %v1290
      %v1375 = vunpack.c.l.b16 %v1291
      %v1376 = vunpack.c.h.b16 %v1291
      %v1377 = vunpack.c.l.b16 %v1292
      %v1378 = vunpack.c.h.b16 %v1292
      %v1379 = vunpack.c.l.b16 %v1293
      %v1380 = vunpack.c.h.b16 %v1293
      %v1381 = vunpack.c.l.b16 %v1294
      %v1382 = vunpack.c.h.b16 %v1294
      %v1383 = vunpack.c.l.b16 %v1295
      %v1384 = vunpack.c.h.b16 %v1295
      %v1385 = vunpack.c.l.b16 %v1296
      %v1386 = vunpack.c.h.b16 %v1296
      %v1387 = vunpack.c.l.b16 %v1297
      %v1388 = vunpack.c.h.b16 %v1297
      %v1389 = vunpack.c.l.b16 %v1298
      %v1390 = vunpack.c.h.b16 %v1298
      %v1391 = vunpack.c.l.b16 %v1299
      %v1392 = vunpack.c.h.b16 %v1299
      %v1393 = vunpack.c.l.b16 %v1300
      %v1394 = vunpack.c.h.b16 %v1300
      %v1395 = vunpack.c.l.b16 %v1301
      %v1396 = vunpack.c.h.b16 %v1301
      %v1397 = vunpack.c.l.b16 %v1302
      %v1398 = vunpack.c.h.b16 %v1302
      %v1399 = vunpack.c.l.b16 %v1303
      %v1400 = vunpack.c.h.b16 %v1303
      %v1401 = vunpack.c.l.b16 %v1304
      %v1402 = vunpack.c.h.b16 %v1304
      %v1403 = vunpack.c.l.b16 %v1305
      %v1404 = vunpack.c.h.b16 %v1305
      %v1405 = vunpack.c.l.b16 %v1306
      %v1406 = vunpack.c.h.b16 %v1306
      %v1407 = vunpack.c.l.b16 %v1307
      %v1408 = vunpack.c.h.b16 %v1307
      %v1409 = vunpack.c.l.b16 %v1308
      %v1410 = vunpack.c.h.b16 %v1308
      %v1411 = vpack.c.b16 %v1349, %v1347
      %v1412 = vpack.c.b16 %v1350, %v1348
      %v1413 = vpack.c.b16 %v1353, %v1351
      %v1414 = vpack.c.b16 %v1354, %v1352
      %v1415 = vpack.c.b16 %v1357, %v1355
      %v1416 = vpack.c.b16 %v1358, %v1356
      %v1417 = vpack.c.b16 %v1361, %v1359
      %v1418 = vpack.c.b16 %v1362, %v1360
      %v1419 = vpack.c.b16 %v1365, %v1363
      %v1420 = vpack.c.b16 %v1366, %v1364
      %v1421 = vpack.c.b16 %v1369, %v1367
      %v1422 = vpack.c.b16 %v1370, %v1368
      %v1423 = vpack.c.b16 %v1373, %v1371
      %v1424 = vpack.c.b16 %v1374, %v1372
      %v1425 = vpack.c.b16 %v1377, %v1375
      %v1426 = vpack.c.b16 %v1378, %v1376
      %v1427 = vpack.c.b16 %v1381, %v1379
      %v1428 = vpack.c.b16 %v1382, %v1380
      %v1429 = vpack.c.b16 %v1385, %v1383
      %v1430 = vpack.c.b16 %v1386, %v1384
      %v1431 = vpack.c.b16 %v1389, %v1387
      %v1432 = vpack.c.b16 %v1390, %v1388
      %v1433 = vpack.c.b16 %v1393, %v1391
      %v1434 = vpack.c.b16 %v1394, %v1392
      %v1435 = vpack.c.b16 %v1397, %v1395
      %v1436 = vpack.c.b16 %v1398, %v1396
      %v1437 = vpack.c.b16 %v1401, %v1399
      %v1438 = vpack.c.b16 %v1402, %v1400
      %v1439 = vpack.c.b16 %v1405, %v1403
      %v1440 = vpack.c.b16 %v1406, %v1404
      %v1441 = vpack.c.b16 %v1409, %v1407
      %v1442 = vpack.c.b16 %v1410, %v1408
      %1475 = vmatpush.bf16.msra.mxu0 %v1425
      %1476 = vmatpush.bf16.msra.mxu0 %v1423
      %1477 = vmatpush.bf16.msra.mxu0 %v1421
      %1478 = vmatpush.bf16.msra.mxu0 %v1419
      %1479 = vmatpush.bf16.msra.mxu0 %v1417
      %1480 = vmatpush.bf16.msra.mxu0 %v1415
      %1481 = vmatpush.bf16.msra.mxu0 %v1413
      %1482 = vmatpush.bf16.msra.mxu0 %v1411
      %1483 = vmatmul.bf16.gmra.mxu0 %v1259
      %v1484 = vpop.f32.mrf.mxu0
      %v1485 = vadd.f32 %v1311, %v1484
      %v1486 = vpop.f32.mrf.mxu0
      %v1487 = vadd.f32 %v1311, %v1486
      %1488 = vmatmul.bf16.gmra.mxu0 %v1261
      %v1489 = vpop.f32.mrf.mxu0
      %v1490 = vadd.f32 %v1311, %v1489
      %v1491 = vpop.f32.mrf.mxu0
      %v1492 = vadd.f32 %v1311, %v1491
      %1493 = vmatmul.bf16.gmra.mxu0 %v1263
      %v1494 = vpop.f32.mrf.mxu0
      %v1495 = vadd.f32 %v1311, %v1494
      %v1496 = vpop.f32.mrf.mxu0
      %v1497 = vadd.f32 %v1311, %v1496
      %1498 = vmatmul.bf16.gmra.mxu0 %v1265
      %v1499 = vpop.f32.mrf.mxu0
      %v1500 = vadd.f32 %v1311, %v1499
      %v1501 = vpop.f32.mrf.mxu0
      %v1502 = vadd.f32 %v1311, %v1501
      %1503 = vmatmul.bf16.gmra.mxu0 %v1267
      %v1504 = vpop.f32.mrf.mxu0
      %v1505 = vadd.f32 %v1311, %v1504
      %v1506 = vpop.f32.mrf.mxu0
      %v1507 = vadd.f32 %v1311, %v1506
      %1508 = vmatmul.bf16.gmra.mxu0 %v1269
      %v1509 = vpop.f32.mrf.mxu0
      %v1510 = vadd.f32 %v1311, %v1509
      %v1511 = vpop.f32.mrf.mxu0
      %v1512 = vadd.f32 %v1311, %v1511
      %1513 = vmatmul.bf16.gmra.mxu0 %v1271
      %v1514 = vpop.f32.mrf.mxu0
      %v1515 = vadd.f32 %v1311, %v1514
      %v1516 = vpop.f32.mrf.mxu0
      %v1517 = vadd.f32 %v1311, %v1516
      %1518 = vmatmul.bf16.gmra.mxu0 %v1273
      %v1519 = vpop.f32.mrf.mxu0
      %v1520 = vadd.f32 %v1311, %v1519
      %v1521 = vpop.f32.mrf.mxu0
      %v1522 = vadd.f32 %v1311, %v1521
      %1523 = vmatmul.bf16.gmra.mxu0 %v1275
      %v1524 = vpop.f32.mrf.mxu0
      %v1525 = vadd.f32 %v1311, %v1524
      %v1526 = vpop.f32.mrf.mxu0
      %v1527 = vadd.f32 %v1311, %v1526
      %1528 = vdwg.mxu0
      %1529 = vmatpush.bf16.msra.mxu0 %v1441
      %1530 = vmatpush.bf16.msra.mxu0 %v1439
      %1531 = vmatpush.bf16.msra.mxu0 %v1437
      %1532 = vmatpush.bf16.msra.mxu0 %v1435
      %1533 = vmatpush.bf16.msra.mxu0 %v1433
      %1534 = vmatpush.bf16.msra.mxu0 %v1431
      %1535 = vmatpush.bf16.msra.mxu0 %v1429
      %1536 = vmatpush.bf16.msra.mxu0 %v1427
      %1537 = vmatmul.bf16.gmra.mxu0 %v1260
      %v1538 = vpop.f32.mrf.mxu0
      %v1539 = vadd.f32 %v1485, %v1538
      %v1540 = vpop.f32.mrf.mxu0
      %v1541 = vadd.f32 %v1487, %v1540
      %1542 = vmatmul.bf16.gmra.mxu0 %v1262
      %v1543 = vpop.f32.mrf.mxu0
      %v1544 = vadd.f32 %v1490, %v1543
      %v1545 = vpop.f32.mrf.mxu0
      %v1546 = vadd.f32 %v1492, %v1545
      %1547 = vmatmul.bf16.gmra.mxu0 %v1264
      %v1548 = vpop.f32.mrf.mxu0
      %v1549 = vadd.f32 %v1495, %v1548
      %v1550 = vpop.f32.mrf.mxu0
      %v1551 = vadd.f32 %v1497, %v1550
      %1552 = vmatmul.bf16.gmra.mxu0 %v1266
      %v1553 = vpop.f32.mrf.mxu0
      %v1554 = vadd.f32 %v1500, %v1553
      %v1555 = vpop.f32.mrf.mxu0
      %v1556 = vadd.f32 %v1502, %v1555
      %1557 = vmatmul.bf16.gmra.mxu0 %v1268
      %v1558 = vpop.f32.mrf.mxu0
      %v1559 = vadd.f32 %v1505, %v1558
      %v1560 = vpop.f32.mrf.mxu0
      %v1561 = vadd.f32 %v1507, %v1560
      %1562 = vmatmul.bf16.gmra.mxu0 %v1270
      %v1563 = vpop.f32.mrf.mxu0
      %v1564 = vadd.f32 %v1510, %v1563
      %v1565 = vpop.f32.mrf.mxu0
      %v1566 = vadd.f32 %v1512, %v1565
      %1567 = vmatmul.bf16.gmra.mxu0 %v1272
      %v1568 = vpop.f32.mrf.mxu0
      %v1569 = vadd.f32 %v1515, %v1568
      %v1570 = vpop.f32.mrf.mxu0
      %v1571 = vadd.f32 %v1517, %v1570
      %1572 = vmatmul.bf16.gmra.mxu0 %v1274
      %v1573 = vpop.f32.mrf.mxu0
      %v1574 = vadd.f32 %v1520, %v1573
      %v1575 = vpop.f32.mrf.mxu0
      %v1576 = vadd.f32 %v1522, %v1575
      %1577 = vmatmul.bf16.gmra.mxu0 %v1276
      %v1578 = vpop.f32.mrf.mxu0
      %v1579 = vadd.f32 %v1525, %v1578
      %v1580 = vpop.f32.mrf.mxu0
      %v1581 = vadd.f32 %v1527, %v1580
      %1582 = vdwg.mxu0
      %1583 = vmatpush.bf16.msra.mxu0 %v1426
      %1584 = vmatpush.bf16.msra.mxu0 %v1424
      %1585 = vmatpush.bf16.msra.mxu0 %v1422
      %1586 = vmatpush.bf16.msra.mxu0 %v1420
      %1587 = vmatpush.bf16.msra.mxu0 %v1418
      %1588 = vmatpush.bf16.msra.mxu0 %v1416
      %1589 = vmatpush.bf16.msra.mxu0 %v1414
      %1590 = vmatpush.bf16.msra.mxu0 %v1412
      %1591 = vmatmul.bf16.gmra.mxu0 %v1259
      %v1592 = vpop.f32.mrf.mxu0
      %v1593 = vadd.f32 %v1312, %v1592
      %v1594 = vpop.f32.mrf.mxu0
      %v1595 = vadd.f32 %v1312, %v1594
      %1596 = vmatmul.bf16.gmra.mxu0 %v1261
      %v1597 = vpop.f32.mrf.mxu0
      %v1598 = vadd.f32 %v1312, %v1597
      %v1599 = vpop.f32.mrf.mxu0
      %v1600 = vadd.f32 %v1312, %v1599
      %1601 = vmatmul.bf16.gmra.mxu0 %v1263
      %v1602 = vpop.f32.mrf.mxu0
      %v1603 = vadd.f32 %v1312, %v1602
      %v1604 = vpop.f32.mrf.mxu0
      %v1605 = vadd.f32 %v1312, %v1604
      %1606 = vmatmul.bf16.gmra.mxu0 %v1265
      %v1607 = vpop.f32.mrf.mxu0
      %v1608 = vadd.f32 %v1312, %v1607
      %v1609 = vpop.f32.mrf.mxu0
      %v1610 = vadd.f32 %v1312, %v1609
      %1611 = vmatmul.bf16.gmra.mxu0 %v1267
      %v1612 = vpop.f32.mrf.mxu0
      %v1613 = vadd.f32 %v1312, %v1612
      %v1614 = vpop.f32.mrf.mxu0
      %v1615 = vadd.f32 %v1312, %v1614
      %1616 = vmatmul.bf16.gmra.mxu0 %v1269
      %v1617 = vpop.f32.mrf.mxu0
      %v1618 = vadd.f32 %v1312, %v1617
      %v1619 = vpop.f32.mrf.mxu0
      %v1620 = vadd.f32 %v1312, %v1619
      %1621 = vmatmul.bf16.gmra.mxu0 %v1271
      %v1622 = vpop.f32.mrf.mxu0
      %v1623 = vadd.f32 %v1312, %v1622
      %v1624 = vpop.f32.mrf.mxu0
      %v1625 = vadd.f32 %v1312, %v1624
      %1626 = vmatmul.bf16.gmra.mxu0 %v1273
      %v1627 = vpop.f32.mrf.mxu0
      %v1628 = vadd.f32 %v1312, %v1627
      %v1629 = vpop.f32.mrf.mxu0
      %v1630 = vadd.f32 %v1312, %v1629
      %1631 = vmatmul.bf16.gmra.mxu0 %v1275
      %v1632 = vpop.f32.mrf.mxu0
      %v1633 = vadd.f32 %v1312, %v1632
      %v1634 = vpop.f32.mrf.mxu0
      %v1635 = vadd.f32 %v1312, %v1634
      %1636 = vdwg.mxu0
      %1637 = vmatpush.bf16.msra.mxu0 %v1442
      %1638 = vmatpush.bf16.msra.mxu0 %v1440
      %1639 = vmatpush.bf16.msra.mxu0 %v1438
      %1640 = vmatpush.bf16.msra.mxu0 %v1436
      %1641 = vmatpush.bf16.msra.mxu0 %v1434
      %1642 = vmatpush.bf16.msra.mxu0 %v1432
      %1643 = vmatpush.bf16.msra.mxu0 %v1430
      %1644 = vmatpush.bf16.msra.mxu0 %v1428
      %1645 = vmatmul.bf16.gmra.mxu0 %v1260
      %v1646 = vpop.f32.mrf.mxu0
      %v1647 = vadd.f32 %v1593, %v1646
      %v1648 = vpop.f32.mrf.mxu0
      %v1649 = vadd.f32 %v1595, %v1648
      %1650 = vmatmul.bf16.gmra.mxu0 %v1262
      %v1651 = vpop.f32.mrf.mxu0
      %v1652 = vadd.f32 %v1598, %v1651
      %v1653 = vpop.f32.mrf.mxu0
      %v1654 = vadd.f32 %v1600, %v1653
      %1655 = vmatmul.bf16.gmra.mxu0 %v1264
      %v1656 = vpop.f32.mrf.mxu0
      %v1657 = vadd.f32 %v1603, %v1656
      %v1658 = vpop.f32.mrf.mxu0
      %v1659 = vadd.f32 %v1605, %v1658
      %1660 = vmatmul.bf16.gmra.mxu0 %v1266
      %v1661 = vpop.f32.mrf.mxu0
      %v1662 = vadd.f32 %v1608, %v1661
      %v1663 = vpop.f32.mrf.mxu0
      %v1664 = vadd.f32 %v1610, %v1663
      %1665 = vmatmul.bf16.gmra.mxu0 %v1268
      %v1666 = vpop.f32.mrf.mxu0
      %v1667 = vadd.f32 %v1613, %v1666
      %v1668 = vpop.f32.mrf.mxu0
      %v1669 = vadd.f32 %v1615, %v1668
      %1670 = vmatmul.bf16.gmra.mxu0 %v1270
      %v1671 = vpop.f32.mrf.mxu0
      %v1672 = vadd.f32 %v1618, %v1671
      %v1673 = vpop.f32.mrf.mxu0
      %v1674 = vadd.f32 %v1620, %v1673
      %1675 = vmatmul.bf16.gmra.mxu0 %v1272
      %v1676 = vpop.f32.mrf.mxu0
      %v1677 = vadd.f32 %v1623, %v1676
      %v1678 = vpop.f32.mrf.mxu0
      %v1679 = vadd.f32 %v1625, %v1678
      %1680 = vmatmul.bf16.gmra.mxu0 %v1274
      %v1681 = vpop.f32.mrf.mxu0
      %v1682 = vadd.f32 %v1628, %v1681
      %v1683 = vpop.f32.mrf.mxu0
      %v1684 = vadd.f32 %v1630, %v1683
      %1685 = vmatmul.bf16.gmra.mxu0 %v1276
      %v1686 = vpop.f32.mrf.mxu0
      %v1687 = vadd.f32 %v1633, %v1686
      %v1688 = vpop.f32.mrf.mxu0
      %v1689 = vadd.f32 %v1635, %v1688
      %1690 = vdwg.mxu0
      %v1691 = vmul.f32 %v1539, %v1539
      %v1692 = vmul.f32 %v1541, %v1541
      %v1693 = vmul.f32 %v1544, %v1544
      %v1694 = vmul.f32 %v1546, %v1546
      %v1695 = vmul.f32 %v1549, %v1549
      %v1696 = vmul.f32 %v1551, %v1551
      %v1697 = vmul.f32 %v1554, %v1554
      %v1698 = vmul.f32 %v1556, %v1556
      %v1699 = vmul.f32 %v1559, %v1559
      %v1700 = vmul.f32 %v1561, %v1561
      %v1701 = vmul.f32 %v1564, %v1564
      %v1702 = vmul.f32 %v1566, %v1566
      %v1703 = vmul.f32 %v1569, %v1569
      %v1704 = vmul.f32 %v1571, %v1571
      %v1705 = vmul.f32 %v1574, %v1574
      %v1706 = vmul.f32 %v1576, %v1576
      %v1707 = vmul.f32 %v1579, %v1579
      %v1708 = vmul.f32 %v1581, %v1581
      %v1709 = vmul.f32 %v1647, %v1647
      %v1710 = vmul.f32 %v1649, %v1649
      %v1711 = vmul.f32 %v1652, %v1652
      %v1712 = vmul.f32 %v1654, %v1654
      %v1713 = vmul.f32 %v1657, %v1657
      %v1714 = vmul.f32 %v1659, %v1659
      %v1715 = vmul.f32 %v1662, %v1662
      %v1716 = vmul.f32 %v1664, %v1664
      %v1717 = vmul.f32 %v1667, %v1667
      %v1718 = vmul.f32 %v1669, %v1669
      %v1719 = vmul.f32 %v1672, %v1672
      %v1720 = vmul.f32 %v1674, %v1674
      %v1721 = vmul.f32 %v1677, %v1677
      %v1722 = vmul.f32 %v1679, %v1679
      %v1723 = vmul.f32 %v1682, %v1682
      %v1724 = vmul.f32 %v1684, %v1684
      %v1725 = vmul.f32 %v1687, %v1687
      %v1726 = vmul.f32 %v1689, %v1689
      %v1727 = vadd.f32 %v1691, %v1709
      %v1728 = vadd.f32 %v1692, %v1710
      %v1729 = vadd.f32 %v1693, %v1711
      %v1730 = vadd.f32 %v1694, %v1712
      %v1731 = vadd.f32 %v1695, %v1713
      %v1732 = vadd.f32 %v1696, %v1714
      %v1733 = vadd.f32 %v1697, %v1715
      %v1734 = vadd.f32 %v1698, %v1716
      %v1735 = vadd.f32 %v1699, %v1717
      %v1736 = vadd.f32 %v1700, %v1718
      %v1737 = vadd.f32 %v1701, %v1719
      %v1738 = vadd.f32 %v1702, %v1720
      %v1739 = vadd.f32 %v1703, %v1721
      %v1740 = vadd.f32 %v1704, %v1722
      %v1741 = vadd.f32 %v1705, %v1723
      %v1742 = vadd.f32 %v1706, %v1724
      %v1743 = vadd.f32 %v1707, %v1725
      %v1744 = vadd.f32 %v1708, %v1726
      %v1745 = vmax.f32 %v1727, 1e-30
      %v1746 = vmax.f32 %v1728, 1e-30
      %v1747 = vmax.f32 %v1729, 1e-30
      %v1748 = vmax.f32 %v1730, 1e-30
      %v1749 = vmax.f32 %v1731, 1e-30
      %v1750 = vmax.f32 %v1732, 1e-30
      %v1751 = vmax.f32 %v1733, 1e-30
      %v1752 = vmax.f32 %v1734, 1e-30
      %v1753 = vmax.f32 %v1735, 1e-30
      %v1754 = vmax.f32 %v1736, 1e-30
      %v1755 = vmax.f32 %v1737, 1e-30
      %v1756 = vmax.f32 %v1738, 1e-30
      %v1757 = vmax.f32 %v1739, 1e-30
      %v1758 = vmax.f32 %v1740, 1e-30
      %v1759 = vmax.f32 %v1741, 1e-30
      %v1760 = vmax.f32 %v1742, 1e-30
      %v1761 = vmax.f32 %v1743, 1e-30
      %v1762 = vmax.f32 %v1744, 1e-30
      %v1763 = vrsqrt.pop %v1745
      %v1764 = vmul.f32 %v1763, %v1745
      %v1765 = vmul.f32 %v1764, %v1763
      %v1766 = vmul.f32 0.5, %v1765
      %v1767 = vsub.f32 1.5, %v1766
      %v1768 = vmul.f32 %v1763, %v1767
      %vm1769 = vweird.f32 %v1745
      %vm1770 = vweird.f32 %v1763
      %vm1771 = vmor %vm1769, %vm1770
      %v1772 = vsel %vm1771, %v1763, %v1768
      %v1773 = vrsqrt.pop %v1746
      %v1774 = vmul.f32 %v1773, %v1746
      %v1775 = vmul.f32 %v1774, %v1773
      %v1776 = vmul.f32 0.5, %v1775
      %v1777 = vsub.f32 1.5, %v1776
      %v1778 = vmul.f32 %v1773, %v1777
      %vm1779 = vweird.f32 %v1746
      %vm1780 = vweird.f32 %v1773
      %vm1781 = vmor %vm1779, %vm1780
      %v1782 = vsel %vm1781, %v1773, %v1778
      %v1783 = vrsqrt.pop %v1747
      %v1784 = vmul.f32 %v1783, %v1747
      %v1785 = vmul.f32 %v1784, %v1783
      %v1786 = vmul.f32 0.5, %v1785
      %v1787 = vsub.f32 1.5, %v1786
      %v1788 = vmul.f32 %v1783, %v1787
      %vm1789 = vweird.f32 %v1747
      %vm1790 = vweird.f32 %v1783
      %vm1791 = vmor %vm1789, %vm1790
      %v1792 = vsel %vm1791, %v1783, %v1788
      %v1793 = vrsqrt.pop %v1748
      %v1794 = vmul.f32 %v1793, %v1748
      %v1795 = vmul.f32 %v1794, %v1793
      %v1796 = vmul.f32 0.5, %v1795
      %v1797 = vsub.f32 1.5, %v1796
      %v1798 = vmul.f32 %v1793, %v1797
      %vm1799 = vweird.f32 %v1748
      %vm1800 = vweird.f32 %v1793
      %vm1801 = vmor %vm1799, %vm1800
      %v1802 = vsel %vm1801, %v1793, %v1798
      %v1803 = vrsqrt.pop %v1749
      %v1804 = vmul.f32 %v1803, %v1749
      %v1805 = vmul.f32 %v1804, %v1803
      %v1806 = vmul.f32 0.5, %v1805
      %v1807 = vsub.f32 1.5, %v1806
      %v1808 = vmul.f32 %v1803, %v1807
      %vm1809 = vweird.f32 %v1749
      %vm1810 = vweird.f32 %v1803
      %vm1811 = vmor %vm1809, %vm1810
      %v1812 = vsel %vm1811, %v1803, %v1808
      %v1813 = vrsqrt.pop %v1750
      %v1814 = vmul.f32 %v1813, %v1750
      %v1815 = vmul.f32 %v1814, %v1813
      %v1816 = vmul.f32 0.5, %v1815
      %v1817 = vsub.f32 1.5, %v1816
      %v1818 = vmul.f32 %v1813, %v1817
      %vm1819 = vweird.f32 %v1750
      %vm1820 = vweird.f32 %v1813
      %vm1821 = vmor %vm1819, %vm1820
      %v1822 = vsel %vm1821, %v1813, %v1818
      %v1823 = vrsqrt.pop %v1751
      %v1824 = vmul.f32 %v1823, %v1751
      %v1825 = vmul.f32 %v1824, %v1823
      %v1826 = vmul.f32 0.5, %v1825
      %v1827 = vsub.f32 1.5, %v1826
      %v1828 = vmul.f32 %v1823, %v1827
      %vm1829 = vweird.f32 %v1751
      %vm1830 = vweird.f32 %v1823
      %vm1831 = vmor %vm1829, %vm1830
      %v1832 = vsel %vm1831, %v1823, %v1828
      %v1833 = vrsqrt.pop %v1752
      %v1834 = vmul.f32 %v1833, %v1752
      %v1835 = vmul.f32 %v1834, %v1833
      %v1836 = vmul.f32 0.5, %v1835
      %v1837 = vsub.f32 1.5, %v1836
      %v1838 = vmul.f32 %v1833, %v1837
      %vm1839 = vweird.f32 %v1752
      %vm1840 = vweird.f32 %v1833
      %vm1841 = vmor %vm1839, %vm1840
      %v1842 = vsel %vm1841, %v1833, %v1838
      %v1843 = vrsqrt.pop %v1753
      %v1844 = vmul.f32 %v1843, %v1753
      %v1845 = vmul.f32 %v1844, %v1843
      %v1846 = vmul.f32 0.5, %v1845
      %v1847 = vsub.f32 1.5, %v1846
      %v1848 = vmul.f32 %v1843, %v1847
      %vm1849 = vweird.f32 %v1753
      %vm1850 = vweird.f32 %v1843
      %vm1851 = vmor %vm1849, %vm1850
      %v1852 = vsel %vm1851, %v1843, %v1848
      %v1853 = vrsqrt.pop %v1754
      %v1854 = vmul.f32 %v1853, %v1754
      %v1855 = vmul.f32 %v1854, %v1853
      %v1856 = vmul.f32 0.5, %v1855
      %v1857 = vsub.f32 1.5, %v1856
      %v1858 = vmul.f32 %v1853, %v1857
      %vm1859 = vweird.f32 %v1754
      %vm1860 = vweird.f32 %v1853
      %vm1861 = vmor %vm1859, %vm1860
      %v1862 = vsel %vm1861, %v1853, %v1858
      %v1863 = vrsqrt.pop %v1755
      %v1864 = vmul.f32 %v1863, %v1755
      %v1865 = vmul.f32 %v1864, %v1863
      %v1866 = vmul.f32 0.5, %v1865
      %v1867 = vsub.f32 1.5, %v1866
      %v1868 = vmul.f32 %v1863, %v1867
      %vm1869 = vweird.f32 %v1755
      %vm1870 = vweird.f32 %v1863
      %vm1871 = vmor %vm1869, %vm1870
      %v1872 = vsel %vm1871, %v1863, %v1868
      %v1873 = vrsqrt.pop %v1756
      %v1874 = vmul.f32 %v1873, %v1756
      %v1875 = vmul.f32 %v1874, %v1873
      %v1876 = vmul.f32 0.5, %v1875
      %v1877 = vsub.f32 1.5, %v1876
      %v1878 = vmul.f32 %v1873, %v1877
      %vm1879 = vweird.f32 %v1756
      %vm1880 = vweird.f32 %v1873
      %vm1881 = vmor %vm1879, %vm1880
      %v1882 = vsel %vm1881, %v1873, %v1878
      %v1883 = vrsqrt.pop %v1757
      %v1884 = vmul.f32 %v1883, %v1757
      %v1885 = vmul.f32 %v1884, %v1883
      %v1886 = vmul.f32 0.5, %v1885
      %v1887 = vsub.f32 1.5, %v1886
      %v1888 = vmul.f32 %v1883, %v1887
      %vm1889 = vweird.f32 %v1757
      %vm1890 = vweird.f32 %v1883
      %vm1891 = vmor %vm1889, %vm1890
      %v1892 = vsel %vm1891, %v1883, %v1888
      %v1893 = vrsqrt.pop %v1758
      %v1894 = vmul.f32 %v1893, %v1758
      %v1895 = vmul.f32 %v1894, %v1893
      %v1896 = vmul.f32 0.5, %v1895
      %v1897 = vsub.f32 1.5, %v1896
      %v1898 = vmul.f32 %v1893, %v1897
      %vm1899 = vweird.f32 %v1758
      %vm1900 = vweird.f32 %v1893
      %vm1901 = vmor %vm1899, %vm1900
      %v1902 = vsel %vm1901, %v1893, %v1898
      %v1903 = vrsqrt.pop %v1759
      %v1904 = vmul.f32 %v1903, %v1759
      %v1905 = vmul.f32 %v1904, %v1903
      %v1906 = vmul.f32 0.5, %v1905
      %v1907 = vsub.f32 1.5, %v1906
      %v1908 = vmul.f32 %v1903, %v1907
      %vm1909 = vweird.f32 %v1759
      %vm1910 = vweird.f32 %v1903
      %vm1911 = vmor %vm1909, %vm1910
      %v1912 = vsel %vm1911, %v1903, %v1908
      %v1913 = vrsqrt.pop %v1760
      %v1914 = vmul.f32 %v1913, %v1760
      %v1915 = vmul.f32 %v1914, %v1913
      %v1916 = vmul.f32 0.5, %v1915
      %v1917 = vsub.f32 1.5, %v1916
      %v1918 = vmul.f32 %v1913, %v1917
      %vm1919 = vweird.f32 %v1760
      %vm1920 = vweird.f32 %v1913
      %vm1921 = vmor %vm1919, %vm1920
      %v1922 = vsel %vm1921, %v1913, %v1918
      %v1923 = vrsqrt.pop %v1761
      %v1924 = vmul.f32 %v1923, %v1761
      %v1925 = vmul.f32 %v1924, %v1923
      %v1926 = vmul.f32 0.5, %v1925
      %v1927 = vsub.f32 1.5, %v1926
      %v1928 = vmul.f32 %v1923, %v1927
      %vm1929 = vweird.f32 %v1761
      %vm1930 = vweird.f32 %v1923
      %vm1931 = vmor %vm1929, %vm1930
      %v1932 = vsel %vm1931, %v1923, %v1928
      %v1933 = vrsqrt.pop %v1762
      %v1934 = vmul.f32 %v1933, %v1762
      %v1935 = vmul.f32 %v1934, %v1933
      %v1936 = vmul.f32 0.5, %v1935
      %v1937 = vsub.f32 1.5, %v1936
      %v1938 = vmul.f32 %v1933, %v1937
      %vm1939 = vweird.f32 %v1762
      %vm1940 = vweird.f32 %v1933
      %vm1941 = vmor %vm1939, %vm1940
      %v1942 = vsel %vm1941, %v1933, %v1938
      %v1943 = vmul.f32 %v1727, %v1772
      %v1944 = vmul.f32 %v1728, %v1782
      %v1945 = vmul.f32 %v1729, %v1792
      %v1946 = vmul.f32 %v1730, %v1802
      %v1947 = vmul.f32 %v1731, %v1812
      %v1948 = vmul.f32 %v1732, %v1822
      %v1949 = vmul.f32 %v1733, %v1832
      %v1950 = vmul.f32 %v1734, %v1842
      %v1951 = vmul.f32 %v1735, %v1852
      %v1952 = vmul.f32 %v1736, %v1862
      %v1953 = vmul.f32 %v1737, %v1872
      %v1954 = vmul.f32 %v1738, %v1882
      %v1955 = vmul.f32 %v1739, %v1892
      %v1956 = vmul.f32 %v1740, %v1902
      %v1957 = vmul.f32 %v1741, %v1912
      %v1958 = vmul.f32 %v1742, %v1922
      %v1959 = vmul.f32 %v1743, %v1932
      %v1960 = vmul.f32 %v1744, %v1942
      %v1961 = vld [vmem:[%s7] sm:$0x1]
      %v1963 = vperm.slane %v1961, 0
      %v1965 = vadd.f32 %v1943, %v1963
      %v1966 = vadd.f32 %v1944, %v1963
      %v1967 = vadd.f32 %v1945, %v1963
      %v1968 = vadd.f32 %v1946, %v1963
      %v1969 = vadd.f32 %v1947, %v1963
      %v1970 = vadd.f32 %v1948, %v1963
      %v1971 = vadd.f32 %v1949, %v1963
      %v1972 = vadd.f32 %v1950, %v1963
      %v1973 = vadd.f32 %v1951, %v1963
      %v1974 = vadd.f32 %v1952, %v1963
      %v1975 = vadd.f32 %v1953, %v1963
      %v1976 = vadd.f32 %v1954, %v1963
      %v1977 = vadd.f32 %v1955, %v1963
      %v1978 = vadd.f32 %v1956, %v1963
      %v1979 = vadd.f32 %v1957, %v1963
      %v1980 = vadd.f32 %v1958, %v1963
      %v1981 = vadd.f32 %v1959, %v1963
      %v1982 = vadd.f32 %v1960, %v1963
      %v1983 = vmax.f32 %v1965, 0.0
      %v1984 = vmax.f32 %v1966, 0.0
      %v1985 = vmax.f32 %v1967, 0.0
      %v1986 = vmax.f32 %v1968, 0.0
      %v1987 = vmax.f32 %v1969, 0.0
      %v1988 = vmax.f32 %v1970, 0.0
      %v1989 = vmax.f32 %v1971, 0.0
      %v1990 = vmax.f32 %v1972, 0.0
      %v1991 = vmax.f32 %v1973, 0.0
      %v1992 = vmax.f32 %v1974, 0.0
      %v1993 = vmax.f32 %v1975, 0.0
      %v1994 = vmax.f32 %v1976, 0.0
      %v1995 = vmax.f32 %v1977, 0.0
      %v1996 = vmax.f32 %v1978, 0.0
      %v1997 = vmax.f32 %v1979, 0.0
      %v1998 = vmax.f32 %v1980, 0.0
      %v1999 = vmax.f32 %v1981, 0.0
      %v2000 = vmax.f32 %v1982, 0.0
      %v2001 = vmul.f32 %v1983, %v1772
      %v2002 = vmul.f32 %v1984, %v1782
      %v2003 = vmul.f32 %v1985, %v1792
      %v2004 = vmul.f32 %v1986, %v1802
      %v2005 = vmul.f32 %v1987, %v1812
      %v2006 = vmul.f32 %v1988, %v1822
      %v2007 = vmul.f32 %v1989, %v1832
      %v2008 = vmul.f32 %v1990, %v1842
      %v2009 = vmul.f32 %v1991, %v1852
      %v2010 = vmul.f32 %v1992, %v1862
      %v2011 = vmul.f32 %v1993, %v1872
      %v2012 = vmul.f32 %v1994, %v1882
      %v2013 = vmul.f32 %v1995, %v1892
      %v2014 = vmul.f32 %v1996, %v1902
      %v2015 = vmul.f32 %v1997, %v1912
      %v2016 = vmul.f32 %v1998, %v1922
      %v2017 = vmul.f32 %v1999, %v1932
      %v2018 = vmul.f32 %v2000, %v1942
      %v2019 = vmul.f32 %v2001, %v1539
      %v2020 = vmul.f32 %v2002, %v1541
      %v2021 = vmul.f32 %v2003, %v1544
      %v2022 = vmul.f32 %v2004, %v1546
      %v2023 = vmul.f32 %v2005, %v1549
      %v2024 = vmul.f32 %v2006, %v1551
      %v2025 = vmul.f32 %v2007, %v1554
      %v2026 = vmul.f32 %v2008, %v1556
      %v2027 = vmul.f32 %v2009, %v1559
      %v2028 = vmul.f32 %v2010, %v1561
      %v2029 = vmul.f32 %v2011, %v1564
      %v2030 = vmul.f32 %v2012, %v1566
      %v2031 = vmul.f32 %v2013, %v1569
      %v2032 = vmul.f32 %v2014, %v1571
      %v2033 = vmul.f32 %v2015, %v1574
      %v2034 = vmul.f32 %v2016, %v1576
      %v2035 = vmul.f32 %v2017, %v1579
      %v2036 = vmul.f32 %v2018, %v1581
      %v2037 = vmul.f32 %v2001, %v1647
      %v2038 = vmul.f32 %v2002, %v1649
      %v2039 = vmul.f32 %v2003, %v1652
      %v2040 = vmul.f32 %v2004, %v1654
      %v2041 = vmul.f32 %v2005, %v1657
      %v2042 = vmul.f32 %v2006, %v1659
      %v2043 = vmul.f32 %v2007, %v1662
      %v2044 = vmul.f32 %v2008, %v1664
      %v2045 = vmul.f32 %v2009, %v1667
      %v2046 = vmul.f32 %v2010, %v1669
      %v2047 = vmul.f32 %v2011, %v1672
      %v2048 = vmul.f32 %v2012, %v1674
      %v2049 = vmul.f32 %v2013, %v1677
      %v2050 = vmul.f32 %v2014, %v1679
      %v2051 = vmul.f32 %v2015, %v1682
      %v2052 = vmul.f32 %v2016, %v1684
      %v2053 = vmul.f32 %v2017, %v1687
      %v2054 = vmul.f32 %v2018, %v1689
      %v2055 = vpack.c.bf16 %v2020, %v2019
      %v2056 = vpack.c.bf16 %v2038, %v2037
      %v2057 = vpack.c.bf16 %v2022, %v2021
      %v2058 = vpack.c.bf16 %v2040, %v2039
      %v2059 = vpack.c.bf16 %v2024, %v2023
      %v2060 = vpack.c.bf16 %v2042, %v2041
      %v2061 = vpack.c.bf16 %v2026, %v2025
      %v2062 = vpack.c.bf16 %v2044, %v2043
      %v2063 = vpack.c.bf16 %v2028, %v2027
      %v2064 = vpack.c.bf16 %v2046, %v2045
      %v2065 = vpack.c.bf16 %v2030, %v2029
      %v2066 = vpack.c.bf16 %v2048, %v2047
      %v2067 = vpack.c.bf16 %v2032, %v2031
      %v2068 = vpack.c.bf16 %v2050, %v2049
      %v2069 = vpack.c.bf16 %v2034, %v2033
      %v2070 = vpack.c.bf16 %v2052, %v2051
      %v2071 = vpack.c.bf16 %v2036, %v2035
      %v2072 = vpack.c.bf16 %v2054, %v2053
      %v2073 = vld [vmem:[%s8] sm:$0xff]
      %v2074 = vld [vmem:[%s8 + $0x8] sm:$0xff]
      %v2075 = vld [vmem:[%s8 + $0x10] sm:$0xff]
      %v2076 = vld [vmem:[%s8 + $0x18] sm:$0xff]
      %v2077 = vld [vmem:[%s8 + $0x20] sm:$0xff]
      %v2078 = vld [vmem:[%s8 + $0x28] sm:$0xff]
      %v2079 = vld [vmem:[%s8 + $0x30] sm:$0xff]
      %v2080 = vld [vmem:[%s8 + $0x38] sm:$0xff]
      %v2081 = vld [vmem:[%s8 + $0x40] sm:$0xff]
      %v2082 = vld [vmem:[%s8 + $0x48] sm:$0xff]
      %v2083 = vld [vmem:[%s8 + $0x50] sm:$0xff]
      %v2084 = vld [vmem:[%s8 + $0x58] sm:$0xff]
      %v2085 = vld [vmem:[%s8 + $0x60] sm:$0xff]
      %v2086 = vld [vmem:[%s8 + $0x68] sm:$0xff]
      %v2087 = vld [vmem:[%s8 + $0x70] sm:$0xff]
      %v2088 = vld [vmem:[%s8 + $0x78] sm:$0xff]
      %v2089 = vld [vmem:[%s8 + $0x80] sm:$0xff]
      %v2090 = vld [vmem:[%s8 + $0x88] sm:$0xff]
      %v2091 = vld [vmem:[%s8 + $0x90] sm:$0xff]
      %v2092 = vld [vmem:[%s8 + $0x98] sm:$0xff]
      %v2093 = vld [vmem:[%s8 + $0xa0] sm:$0xff]
      %v2094 = vld [vmem:[%s8 + $0xa8] sm:$0xff]
      %v2095 = vld [vmem:[%s8 + $0xb0] sm:$0xff]
      %v2096 = vld [vmem:[%s8 + $0xb8] sm:$0xff]
      %v2097 = vld [vmem:[%s8 + $0xc0] sm:$0xff]
      %v2098 = vld [vmem:[%s8 + $0xc8] sm:$0xff]
      %v2099 = vld [vmem:[%s8 + $0xd0] sm:$0xff]
      %v2100 = vld [vmem:[%s8 + $0xd8] sm:$0xff]
      %v2101 = vld [vmem:[%s8 + $0xe0] sm:$0xff]
      %v2102 = vld [vmem:[%s8 + $0xe8] sm:$0xff]
      %v2103 = vld [vmem:[%s8 + $0xf0] sm:$0xff]
      %v2104 = vld [vmem:[%s8 + $0xf8] sm:$0xff]
      %v2105 = vld [vmem:[%s9] sm:$0x3]
      %v2107 = vperm.slane %v2105, 0
      %v2108 = vperm.slane %v2105, 1
      %v2143 = vunpack.c.l.b16 %v2073
      %v2144 = vunpack.c.h.b16 %v2073
      %v2145 = vunpack.c.l.b16 %v2074
      %v2146 = vunpack.c.h.b16 %v2074
      %v2147 = vunpack.c.l.b16 %v2075
      %v2148 = vunpack.c.h.b16 %v2075
      %v2149 = vunpack.c.l.b16 %v2076
      %v2150 = vunpack.c.h.b16 %v2076
      %v2151 = vunpack.c.l.b16 %v2077
      %v2152 = vunpack.c.h.b16 %v2077
      %v2153 = vunpack.c.l.b16 %v2078
      %v2154 = vunpack.c.h.b16 %v2078
      %v2155 = vunpack.c.l.b16 %v2079
      %v2156 = vunpack.c.h.b16 %v2079
      %v2157 = vunpack.c.l.b16 %v2080
      %v2158 = vunpack.c.h.b16 %v2080
      %v2159 = vunpack.c.l.b16 %v2081
      %v2160 = vunpack.c.h.b16 %v2081
      %v2161 = vunpack.c.l.b16 %v2082
      %v2162 = vunpack.c.h.b16 %v2082
      %v2163 = vunpack.c.l.b16 %v2083
      %v2164 = vunpack.c.h.b16 %v2083
      %v2165 = vunpack.c.l.b16 %v2084
      %v2166 = vunpack.c.h.b16 %v2084
      %v2167 = vunpack.c.l.b16 %v2085
      %v2168 = vunpack.c.h.b16 %v2085
      %v2169 = vunpack.c.l.b16 %v2086
      %v2170 = vunpack.c.h.b16 %v2086
      %v2171 = vunpack.c.l.b16 %v2087
      %v2172 = vunpack.c.h.b16 %v2087
      %v2173 = vunpack.c.l.b16 %v2088
      %v2174 = vunpack.c.h.b16 %v2088
      %v2175 = vunpack.c.l.b16 %v2089
      %v2176 = vunpack.c.h.b16 %v2089
      %v2177 = vunpack.c.l.b16 %v2090
      %v2178 = vunpack.c.h.b16 %v2090
      %v2179 = vunpack.c.l.b16 %v2091
      %v2180 = vunpack.c.h.b16 %v2091
      %v2181 = vunpack.c.l.b16 %v2092
      %v2182 = vunpack.c.h.b16 %v2092
      %v2183 = vunpack.c.l.b16 %v2093
      %v2184 = vunpack.c.h.b16 %v2093
      %v2185 = vunpack.c.l.b16 %v2094
      %v2186 = vunpack.c.h.b16 %v2094
      %v2187 = vunpack.c.l.b16 %v2095
      %v2188 = vunpack.c.h.b16 %v2095
      %v2189 = vunpack.c.l.b16 %v2096
      %v2190 = vunpack.c.h.b16 %v2096
      %v2191 = vunpack.c.l.b16 %v2097
      %v2192 = vunpack.c.h.b16 %v2097
      %v2193 = vunpack.c.l.b16 %v2098
      %v2194 = vunpack.c.h.b16 %v2098
      %v2195 = vunpack.c.l.b16 %v2099
      %v2196 = vunpack.c.h.b16 %v2099
      %v2197 = vunpack.c.l.b16 %v2100
      %v2198 = vunpack.c.h.b16 %v2100
      %v2199 = vunpack.c.l.b16 %v2101
      %v2200 = vunpack.c.h.b16 %v2101
      %v2201 = vunpack.c.l.b16 %v2102
      %v2202 = vunpack.c.h.b16 %v2102
      %v2203 = vunpack.c.l.b16 %v2103
      %v2204 = vunpack.c.h.b16 %v2103
      %v2205 = vunpack.c.l.b16 %v2104
      %v2206 = vunpack.c.h.b16 %v2104
      %v2207 = vpack.c.b16 %v2145, %v2143
      %v2208 = vpack.c.b16 %v2146, %v2144
      %v2209 = vpack.c.b16 %v2149, %v2147
      %v2210 = vpack.c.b16 %v2150, %v2148
      %v2211 = vpack.c.b16 %v2153, %v2151
      %v2212 = vpack.c.b16 %v2154, %v2152
      %v2213 = vpack.c.b16 %v2157, %v2155
      %v2214 = vpack.c.b16 %v2158, %v2156
      %v2215 = vpack.c.b16 %v2161, %v2159
      %v2216 = vpack.c.b16 %v2162, %v2160
      %v2217 = vpack.c.b16 %v2165, %v2163
      %v2218 = vpack.c.b16 %v2166, %v2164
      %v2219 = vpack.c.b16 %v2169, %v2167
      %v2220 = vpack.c.b16 %v2170, %v2168
      %v2221 = vpack.c.b16 %v2173, %v2171
      %v2222 = vpack.c.b16 %v2174, %v2172
      %v2223 = vpack.c.b16 %v2177, %v2175
      %v2224 = vpack.c.b16 %v2178, %v2176
      %v2225 = vpack.c.b16 %v2181, %v2179
      %v2226 = vpack.c.b16 %v2182, %v2180
      %v2227 = vpack.c.b16 %v2185, %v2183
      %v2228 = vpack.c.b16 %v2186, %v2184
      %v2229 = vpack.c.b16 %v2189, %v2187
      %v2230 = vpack.c.b16 %v2190, %v2188
      %v2231 = vpack.c.b16 %v2193, %v2191
      %v2232 = vpack.c.b16 %v2194, %v2192
      %v2233 = vpack.c.b16 %v2197, %v2195
      %v2234 = vpack.c.b16 %v2198, %v2196
      %v2235 = vpack.c.b16 %v2201, %v2199
      %v2236 = vpack.c.b16 %v2202, %v2200
      %v2237 = vpack.c.b16 %v2205, %v2203
      %v2238 = vpack.c.b16 %v2206, %v2204
      %2271 = vmatpush.bf16.msra.mxu0 %v2221
      %2272 = vmatpush.bf16.msra.mxu0 %v2219
      %2273 = vmatpush.bf16.msra.mxu0 %v2217
      %2274 = vmatpush.bf16.msra.mxu0 %v2215
      %2275 = vmatpush.bf16.msra.mxu0 %v2213
      %2276 = vmatpush.bf16.msra.mxu0 %v2211
      %2277 = vmatpush.bf16.msra.mxu0 %v2209
      %2278 = vmatpush.bf16.msra.mxu0 %v2207
      %2279 = vmatmul.bf16.gmra.mxu0 %v2055
      %v2280 = vpop.f32.mrf.mxu0
      %v2281 = vadd.f32 %v2107, %v2280
      %v2282 = vpop.f32.mrf.mxu0
      %v2283 = vadd.f32 %v2107, %v2282
      %2284 = vmatmul.bf16.gmra.mxu0 %v2057
      %v2285 = vpop.f32.mrf.mxu0
      %v2286 = vadd.f32 %v2107, %v2285
      %v2287 = vpop.f32.mrf.mxu0
      %v2288 = vadd.f32 %v2107, %v2287
      %2289 = vmatmul.bf16.gmra.mxu0 %v2059
      %v2290 = vpop.f32.mrf.mxu0
      %v2291 = vadd.f32 %v2107, %v2290
      %v2292 = vpop.f32.mrf.mxu0
      %v2293 = vadd.f32 %v2107, %v2292
      %2294 = vmatmul.bf16.gmra.mxu0 %v2061
      %v2295 = vpop.f32.mrf.mxu0
      %v2296 = vadd.f32 %v2107, %v2295
      %v2297 = vpop.f32.mrf.mxu0
      %v2298 = vadd.f32 %v2107, %v2297
      %2299 = vmatmul.bf16.gmra.mxu0 %v2063
      %v2300 = vpop.f32.mrf.mxu0
      %v2301 = vadd.f32 %v2107, %v2300
      %v2302 = vpop.f32.mrf.mxu0
      %v2303 = vadd.f32 %v2107, %v2302
      %2304 = vmatmul.bf16.gmra.mxu0 %v2065
      %v2305 = vpop.f32.mrf.mxu0
      %v2306 = vadd.f32 %v2107, %v2305
      %v2307 = vpop.f32.mrf.mxu0
      %v2308 = vadd.f32 %v2107, %v2307
      %2309 = vmatmul.bf16.gmra.mxu0 %v2067
      %v2310 = vpop.f32.mrf.mxu0
      %v2311 = vadd.f32 %v2107, %v2310
      %v2312 = vpop.f32.mrf.mxu0
      %v2313 = vadd.f32 %v2107, %v2312
      %2314 = vmatmul.bf16.gmra.mxu0 %v2069
      %v2315 = vpop.f32.mrf.mxu0
      %v2316 = vadd.f32 %v2107, %v2315
      %v2317 = vpop.f32.mrf.mxu0
      %v2318 = vadd.f32 %v2107, %v2317
      %2319 = vmatmul.bf16.gmra.mxu0 %v2071
      %v2320 = vpop.f32.mrf.mxu0
      %v2321 = vadd.f32 %v2107, %v2320
      %v2322 = vpop.f32.mrf.mxu0
      %v2323 = vadd.f32 %v2107, %v2322
      %2324 = vdwg.mxu0
      %2325 = vmatpush.bf16.msra.mxu0 %v2237
      %2326 = vmatpush.bf16.msra.mxu0 %v2235
      %2327 = vmatpush.bf16.msra.mxu0 %v2233
      %2328 = vmatpush.bf16.msra.mxu0 %v2231
      %2329 = vmatpush.bf16.msra.mxu0 %v2229
      %2330 = vmatpush.bf16.msra.mxu0 %v2227
      %2331 = vmatpush.bf16.msra.mxu0 %v2225
      %2332 = vmatpush.bf16.msra.mxu0 %v2223
      %2333 = vmatmul.bf16.gmra.mxu0 %v2056
      %v2334 = vpop.f32.mrf.mxu0
      %v2335 = vadd.f32 %v2281, %v2334
      %v2336 = vpop.f32.mrf.mxu0
      %v2337 = vadd.f32 %v2283, %v2336
      %2338 = vmatmul.bf16.gmra.mxu0 %v2058
      %v2339 = vpop.f32.mrf.mxu0
      %v2340 = vadd.f32 %v2286, %v2339
      %v2341 = vpop.f32.mrf.mxu0
      %v2342 = vadd.f32 %v2288, %v2341
      %2343 = vmatmul.bf16.gmra.mxu0 %v2060
      %v2344 = vpop.f32.mrf.mxu0
      %v2345 = vadd.f32 %v2291, %v2344
      %v2346 = vpop.f32.mrf.mxu0
      %v2347 = vadd.f32 %v2293, %v2346
      %2348 = vmatmul.bf16.gmra.mxu0 %v2062
      %v2349 = vpop.f32.mrf.mxu0
      %v2350 = vadd.f32 %v2296, %v2349
      %v2351 = vpop.f32.mrf.mxu0
      %v2352 = vadd.f32 %v2298, %v2351
      %2353 = vmatmul.bf16.gmra.mxu0 %v2064
      %v2354 = vpop.f32.mrf.mxu0
      %v2355 = vadd.f32 %v2301, %v2354
      %v2356 = vpop.f32.mrf.mxu0
      %v2357 = vadd.f32 %v2303, %v2356
      %2358 = vmatmul.bf16.gmra.mxu0 %v2066
      %v2359 = vpop.f32.mrf.mxu0
      %v2360 = vadd.f32 %v2306, %v2359
      %v2361 = vpop.f32.mrf.mxu0
      %v2362 = vadd.f32 %v2308, %v2361
      %2363 = vmatmul.bf16.gmra.mxu0 %v2068
      %v2364 = vpop.f32.mrf.mxu0
      %v2365 = vadd.f32 %v2311, %v2364
      %v2366 = vpop.f32.mrf.mxu0
      %v2367 = vadd.f32 %v2313, %v2366
      %2368 = vmatmul.bf16.gmra.mxu0 %v2070
      %v2369 = vpop.f32.mrf.mxu0
      %v2370 = vadd.f32 %v2316, %v2369
      %v2371 = vpop.f32.mrf.mxu0
      %v2372 = vadd.f32 %v2318, %v2371
      %2373 = vmatmul.bf16.gmra.mxu0 %v2072
      %v2374 = vpop.f32.mrf.mxu0
      %v2375 = vadd.f32 %v2321, %v2374
      %v2376 = vpop.f32.mrf.mxu0
      %v2377 = vadd.f32 %v2323, %v2376
      %2378 = vdwg.mxu0
      %2379 = vmatpush.bf16.msra.mxu0 %v2222
      %2380 = vmatpush.bf16.msra.mxu0 %v2220
      %2381 = vmatpush.bf16.msra.mxu0 %v2218
      %2382 = vmatpush.bf16.msra.mxu0 %v2216
      %2383 = vmatpush.bf16.msra.mxu0 %v2214
      %2384 = vmatpush.bf16.msra.mxu0 %v2212
      %2385 = vmatpush.bf16.msra.mxu0 %v2210
      %2386 = vmatpush.bf16.msra.mxu0 %v2208
      %2387 = vmatmul.bf16.gmra.mxu0 %v2055
      %v2388 = vpop.f32.mrf.mxu0
      %v2389 = vadd.f32 %v2108, %v2388
      %v2390 = vpop.f32.mrf.mxu0
      %v2391 = vadd.f32 %v2108, %v2390
      %2392 = vmatmul.bf16.gmra.mxu0 %v2057
      %v2393 = vpop.f32.mrf.mxu0
      %v2394 = vadd.f32 %v2108, %v2393
      %v2395 = vpop.f32.mrf.mxu0
      %v2396 = vadd.f32 %v2108, %v2395
      %2397 = vmatmul.bf16.gmra.mxu0 %v2059
      %v2398 = vpop.f32.mrf.mxu0
      %v2399 = vadd.f32 %v2108, %v2398
      %v2400 = vpop.f32.mrf.mxu0
      %v2401 = vadd.f32 %v2108, %v2400
      %2402 = vmatmul.bf16.gmra.mxu0 %v2061
      %v2403 = vpop.f32.mrf.mxu0
      %v2404 = vadd.f32 %v2108, %v2403
      %v2405 = vpop.f32.mrf.mxu0
      %v2406 = vadd.f32 %v2108, %v2405
      %2407 = vmatmul.bf16.gmra.mxu0 %v2063
      %v2408 = vpop.f32.mrf.mxu0
      %v2409 = vadd.f32 %v2108, %v2408
      %v2410 = vpop.f32.mrf.mxu0
      %v2411 = vadd.f32 %v2108, %v2410
      %2412 = vmatmul.bf16.gmra.mxu0 %v2065
      %v2413 = vpop.f32.mrf.mxu0
      %v2414 = vadd.f32 %v2108, %v2413
      %v2415 = vpop.f32.mrf.mxu0
      %v2416 = vadd.f32 %v2108, %v2415
      %2417 = vmatmul.bf16.gmra.mxu0 %v2067
      %v2418 = vpop.f32.mrf.mxu0
      %v2419 = vadd.f32 %v2108, %v2418
      %v2420 = vpop.f32.mrf.mxu0
      %v2421 = vadd.f32 %v2108, %v2420
      %2422 = vmatmul.bf16.gmra.mxu0 %v2069
      %v2423 = vpop.f32.mrf.mxu0
      %v2424 = vadd.f32 %v2108, %v2423
      %v2425 = vpop.f32.mrf.mxu0
      %v2426 = vadd.f32 %v2108, %v2425
      %2427 = vmatmul.bf16.gmra.mxu0 %v2071
      %v2428 = vpop.f32.mrf.mxu0
      %v2429 = vadd.f32 %v2108, %v2428
      %v2430 = vpop.f32.mrf.mxu0
      %v2431 = vadd.f32 %v2108, %v2430
      %2432 = vdwg.mxu0
      %2433 = vmatpush.bf16.msra.mxu0 %v2238
      %2434 = vmatpush.bf16.msra.mxu0 %v2236
      %2435 = vmatpush.bf16.msra.mxu0 %v2234
      %2436 = vmatpush.bf16.msra.mxu0 %v2232
      %2437 = vmatpush.bf16.msra.mxu0 %v2230
      %2438 = vmatpush.bf16.msra.mxu0 %v2228
      %2439 = vmatpush.bf16.msra.mxu0 %v2226
      %2440 = vmatpush.bf16.msra.mxu0 %v2224
      %2441 = vmatmul.bf16.gmra.mxu0 %v2056
      %v2442 = vpop.f32.mrf.mxu0
      %v2443 = vadd.f32 %v2389, %v2442
      %v2444 = vpop.f32.mrf.mxu0
      %v2445 = vadd.f32 %v2391, %v2444
      %2446 = vmatmul.bf16.gmra.mxu0 %v2058
      %v2447 = vpop.f32.mrf.mxu0
      %v2448 = vadd.f32 %v2394, %v2447
      %v2449 = vpop.f32.mrf.mxu0
      %v2450 = vadd.f32 %v2396, %v2449
      %2451 = vmatmul.bf16.gmra.mxu0 %v2060
      %v2452 = vpop.f32.mrf.mxu0
      %v2453 = vadd.f32 %v2399, %v2452
      %v2454 = vpop.f32.mrf.mxu0
      %v2455 = vadd.f32 %v2401, %v2454
      %2456 = vmatmul.bf16.gmra.mxu0 %v2062
      %v2457 = vpop.f32.mrf.mxu0
      %v2458 = vadd.f32 %v2404, %v2457
      %v2459 = vpop.f32.mrf.mxu0
      %v2460 = vadd.f32 %v2406, %v2459
      %2461 = vmatmul.bf16.gmra.mxu0 %v2064
      %v2462 = vpop.f32.mrf.mxu0
      %v2463 = vadd.f32 %v2409, %v2462
      %v2464 = vpop.f32.mrf.mxu0
      %v2465 = vadd.f32 %v2411, %v2464
      %2466 = vmatmul.bf16.gmra.mxu0 %v2066
      %v2467 = vpop.f32.mrf.mxu0
      %v2468 = vadd.f32 %v2414, %v2467
      %v2469 = vpop.f32.mrf.mxu0
      %v2470 = vadd.f32 %v2416, %v2469
      %2471 = vmatmul.bf16.gmra.mxu0 %v2068
      %v2472 = vpop.f32.mrf.mxu0
      %v2473 = vadd.f32 %v2419, %v2472
      %v2474 = vpop.f32.mrf.mxu0
      %v2475 = vadd.f32 %v2421, %v2474
      %2476 = vmatmul.bf16.gmra.mxu0 %v2070
      %v2477 = vpop.f32.mrf.mxu0
      %v2478 = vadd.f32 %v2424, %v2477
      %v2479 = vpop.f32.mrf.mxu0
      %v2480 = vadd.f32 %v2426, %v2479
      %2481 = vmatmul.bf16.gmra.mxu0 %v2072
      %v2482 = vpop.f32.mrf.mxu0
      %v2483 = vadd.f32 %v2429, %v2482
      %v2484 = vpop.f32.mrf.mxu0
      %v2485 = vadd.f32 %v2431, %v2484
      %2486 = vdwg.mxu0
      %v2487 = vld [vmem:[%s489] sm:$0xff]
      %v2488 = vld [vmem:[%s489 + $0x8] sm:$0xf]
      %v2489 = vld [vmem:[%s489 + $0xc] sm:$0xff]
      %v2490 = vld [vmem:[%s489 + $0x14] sm:$0xf]
      %v2491 = vld [vmem:[%s489 + $0x18] sm:$0xff]
      %v2492 = vld [vmem:[%s489 + $0x20] sm:$0xf]
      %v2493 = vld [vmem:[%s489 + $0x24] sm:$0xff]
      %v2494 = vld [vmem:[%s489 + $0x2c] sm:$0xf]
      %v2495 = vld [vmem:[%s489 + $0x30] sm:$0xff]
      %v2496 = vld [vmem:[%s489 + $0x38] sm:$0xf]
      %v2497 = vld [vmem:[%s489 + $0x3c] sm:$0xff]
      %v2498 = vld [vmem:[%s489 + $0x44] sm:$0xf]
      %v2499 = vld [vmem:[%s489 + $0x48] sm:$0xff]
      %v2500 = vld [vmem:[%s489 + $0x50] sm:$0xf]
      %v2501 = vld [vmem:[%s489 + $0x54] sm:$0xff]
      %v2502 = vld [vmem:[%s489 + $0x5c] sm:$0xf]
      %v2503 = vld [vmem:[%s489 + $0x60] sm:$0xff]
      %v2504 = vld [vmem:[%s489 + $0x68] sm:$0xf]
      %v2505 = vld [vmem:[%s489 + $0x6c] sm:$0xff]
      %v2506 = vld [vmem:[%s489 + $0x74] sm:$0xf]
      %v2507 = vld [vmem:[%s489 + $0x78] sm:$0xff]
      %v2508 = vld [vmem:[%s489 + $0x80] sm:$0xf]
      %v2509 = vld [vmem:[%s489 + $0x84] sm:$0xff]
      %v2510 = vld [vmem:[%s489 + $0x8c] sm:$0xf]
      %v2511 = vld [vmem:[%s489 + $0x90] sm:$0xff]
      %v2512 = vld [vmem:[%s489 + $0x98] sm:$0xf]
      %v2513 = vld [vmem:[%s489 + $0x9c] sm:$0xff]
      %v2514 = vld [vmem:[%s489 + $0xa4] sm:$0xf]
      %v2515 = vld [vmem:[%s489 + $0xa8] sm:$0xff]
      %v2516 = vld [vmem:[%s489 + $0xb0] sm:$0xf]
      %v2517 = vld [vmem:[%s489 + $0xb4] sm:$0xff]
      %v2518 = vld [vmem:[%s489 + $0xbc] sm:$0xf]
      %v2519 = vld [vmem:[%s489 + $0xc0] sm:$0xff]
      %v2520 = vld [vmem:[%s489 + $0xc8] sm:$0xf]
      %v2521 = vld [vmem:[%s489 + $0xcc] sm:$0xff]
      %v2522 = vld [vmem:[%s489 + $0xd4] sm:$0xf]
      %v2523 = vunpack.c.l.bf16 %v2487
      %v2524 = vunpack.c.h.bf16 %v2487
      %v2525 = vunpack.c.l.bf16 %v2488
      %v2526 = vunpack.c.l.bf16 %v2489
      %v2527 = vunpack.c.h.bf16 %v2489
      %v2528 = vunpack.c.l.bf16 %v2490
      %v2529 = vunpack.c.l.bf16 %v2491
      %v2530 = vunpack.c.h.bf16 %v2491
      %v2531 = vunpack.c.l.bf16 %v2492
      %v2532 = vunpack.c.l.bf16 %v2493
      %v2533 = vunpack.c.h.bf16 %v2493
      %v2534 = vunpack.c.l.bf16 %v2494
      %v2535 = vunpack.c.l.bf16 %v2495
      %v2536 = vunpack.c.h.bf16 %v2495
      %v2537 = vunpack.c.l.bf16 %v2496
      %v2538 = vunpack.c.l.bf16 %v2497
      %v2539 = vunpack.c.h.bf16 %v2497
      %v2540 = vunpack.c.l.bf16 %v2498
      %v2541 = vunpack.c.l.bf16 %v2499
      %v2542 = vunpack.c.h.bf16 %v2499
      %v2543 = vunpack.c.l.bf16 %v2500
      %v2544 = vunpack.c.l.bf16 %v2501
      %v2545 = vunpack.c.h.bf16 %v2501
      %v2546 = vunpack.c.l.bf16 %v2502
      %v2547 = vunpack.c.l.bf16 %v2503
      %v2548 = vunpack.c.h.bf16 %v2503
      %v2549 = vunpack.c.l.bf16 %v2504
      %v2550 = vunpack.c.l.bf16 %v2505
      %v2551 = vunpack.c.h.bf16 %v2505
      %v2552 = vunpack.c.l.bf16 %v2506
      %v2553 = vunpack.c.l.bf16 %v2507
      %v2554 = vunpack.c.h.bf16 %v2507
      %v2555 = vunpack.c.l.bf16 %v2508
      %v2556 = vunpack.c.l.bf16 %v2509
      %v2557 = vunpack.c.h.bf16 %v2509
      %v2558 = vunpack.c.l.bf16 %v2510
      %v2559 = vunpack.c.l.bf16 %v2511
      %v2560 = vunpack.c.h.bf16 %v2511
      %v2561 = vunpack.c.l.bf16 %v2512
      %v2562 = vunpack.c.l.bf16 %v2513
      %v2563 = vunpack.c.h.bf16 %v2513
      %v2564 = vunpack.c.l.bf16 %v2514
      %v2565 = vunpack.c.l.bf16 %v2515
      %v2566 = vunpack.c.h.bf16 %v2515
      %v2567 = vunpack.c.l.bf16 %v2516
      %v2568 = vunpack.c.l.bf16 %v2517
      %v2569 = vunpack.c.h.bf16 %v2517
      %v2570 = vunpack.c.l.bf16 %v2518
      %v2571 = vunpack.c.l.bf16 %v2519
      %v2572 = vunpack.c.h.bf16 %v2519
      %v2573 = vunpack.c.l.bf16 %v2520
      %v2574 = vunpack.c.l.bf16 %v2521
      %v2575 = vunpack.c.h.bf16 %v2521
      %v2576 = vunpack.c.l.bf16 %v2522
      %v2577 = vmul.f32 %v2335, %v2335
      %v2578 = vmul.f32 %v2337, %v2337
      %v2579 = vmul.f32 %v2340, %v2340
      %v2580 = vmul.f32 %v2342, %v2342
      %v2581 = vmul.f32 %v2345, %v2345
      %v2582 = vmul.f32 %v2347, %v2347
      %v2583 = vmul.f32 %v2350, %v2350
      %v2584 = vmul.f32 %v2352, %v2352
      %v2585 = vmul.f32 %v2355, %v2355
      %v2586 = vmul.f32 %v2357, %v2357
      %v2587 = vmul.f32 %v2360, %v2360
      %v2588 = vmul.f32 %v2362, %v2362
      %v2589 = vmul.f32 %v2365, %v2365
      %v2590 = vmul.f32 %v2367, %v2367
      %v2591 = vmul.f32 %v2370, %v2370
      %v2592 = vmul.f32 %v2372, %v2372
      %v2593 = vmul.f32 %v2375, %v2375
      %v2594 = vmul.f32 %v2377, %v2377
      %v2595 = vmul.f32 %v2443, %v2443
      %v2596 = vmul.f32 %v2445, %v2445
      %v2597 = vmul.f32 %v2448, %v2448
      %v2598 = vmul.f32 %v2450, %v2450
      %v2599 = vmul.f32 %v2453, %v2453
      %v2600 = vmul.f32 %v2455, %v2455
      %v2601 = vmul.f32 %v2458, %v2458
      %v2602 = vmul.f32 %v2460, %v2460
      %v2603 = vmul.f32 %v2463, %v2463
      %v2604 = vmul.f32 %v2465, %v2465
      %v2605 = vmul.f32 %v2468, %v2468
      %v2606 = vmul.f32 %v2470, %v2470
      %v2607 = vmul.f32 %v2473, %v2473
      %v2608 = vmul.f32 %v2475, %v2475
      %v2609 = vmul.f32 %v2478, %v2478
      %v2610 = vmul.f32 %v2480, %v2480
      %v2611 = vmul.f32 %v2483, %v2483
      %v2612 = vmul.f32 %v2485, %v2485
      %v2613 = vadd.f32 %v2577, %v2595
      %v2614 = vadd.f32 %v2578, %v2596
      %v2615 = vadd.f32 %v2579, %v2597
      %v2616 = vadd.f32 %v2580, %v2598
      %v2617 = vadd.f32 %v2581, %v2599
      %v2618 = vadd.f32 %v2582, %v2600
      %v2619 = vadd.f32 %v2583, %v2601
      %v2620 = vadd.f32 %v2584, %v2602
      %v2621 = vadd.f32 %v2585, %v2603
      %v2622 = vadd.f32 %v2586, %v2604
      %v2623 = vadd.f32 %v2587, %v2605
      %v2624 = vadd.f32 %v2588, %v2606
      %v2625 = vadd.f32 %v2589, %v2607
      %v2626 = vadd.f32 %v2590, %v2608
      %v2627 = vadd.f32 %v2591, %v2609
      %v2628 = vadd.f32 %v2592, %v2610
      %v2629 = vadd.f32 %v2593, %v2611
      %v2630 = vadd.f32 %v2594, %v2612
      %v2631 = vmax.f32 %v2613, 1e-30
      %v2632 = vmax.f32 %v2614, 1e-30
      %v2633 = vmax.f32 %v2615, 1e-30
      %v2634 = vmax.f32 %v2616, 1e-30
      %v2635 = vmax.f32 %v2617, 1e-30
      %v2636 = vmax.f32 %v2618, 1e-30
      %v2637 = vmax.f32 %v2619, 1e-30
      %v2638 = vmax.f32 %v2620, 1e-30
      %v2639 = vmax.f32 %v2621, 1e-30
      %v2640 = vmax.f32 %v2622, 1e-30
      %v2641 = vmax.f32 %v2623, 1e-30
      %v2642 = vmax.f32 %v2624, 1e-30
      %v2643 = vmax.f32 %v2625, 1e-30
      %v2644 = vmax.f32 %v2626, 1e-30
      %v2645 = vmax.f32 %v2627, 1e-30
      %v2646 = vmax.f32 %v2628, 1e-30
      %v2647 = vmax.f32 %v2629, 1e-30
      %v2648 = vmax.f32 %v2630, 1e-30
      %v2649 = vrsqrt.pop %v2631
      %v2650 = vmul.f32 %v2649, %v2631
      %v2651 = vmul.f32 %v2650, %v2649
      %v2652 = vmul.f32 0.5, %v2651
      %v2653 = vsub.f32 1.5, %v2652
      %v2654 = vmul.f32 %v2649, %v2653
      %vm2655 = vweird.f32 %v2631
      %vm2656 = vweird.f32 %v2649
      %vm2657 = vmor %vm2655, %vm2656
      %v2658 = vsel %vm2657, %v2649, %v2654
      %v2659 = vrsqrt.pop %v2632
      %v2660 = vmul.f32 %v2659, %v2632
      %v2661 = vmul.f32 %v2660, %v2659
      %v2662 = vmul.f32 0.5, %v2661
      %v2663 = vsub.f32 1.5, %v2662
      %v2664 = vmul.f32 %v2659, %v2663
      %vm2665 = vweird.f32 %v2632
      %vm2666 = vweird.f32 %v2659
      %vm2667 = vmor %vm2665, %vm2666
      %v2668 = vsel %vm2667, %v2659, %v2664
      %v2669 = vrsqrt.pop %v2633
      %v2670 = vmul.f32 %v2669, %v2633
      %v2671 = vmul.f32 %v2670, %v2669
      %v2672 = vmul.f32 0.5, %v2671
      %v2673 = vsub.f32 1.5, %v2672
      %v2674 = vmul.f32 %v2669, %v2673
      %vm2675 = vweird.f32 %v2633
      %vm2676 = vweird.f32 %v2669
      %vm2677 = vmor %vm2675, %vm2676
      %v2678 = vsel %vm2677, %v2669, %v2674
      %v2679 = vrsqrt.pop %v2634
      %v2680 = vmul.f32 %v2679, %v2634
      %v2681 = vmul.f32 %v2680, %v2679
      %v2682 = vmul.f32 0.5, %v2681
      %v2683 = vsub.f32 1.5, %v2682
      %v2684 = vmul.f32 %v2679, %v2683
      %vm2685 = vweird.f32 %v2634
      %vm2686 = vweird.f32 %v2679
      %vm2687 = vmor %vm2685, %vm2686
      %v2688 = vsel %vm2687, %v2679, %v2684
      %v2689 = vrsqrt.pop %v2635
      %v2690 = vmul.f32 %v2689, %v2635
      %v2691 = vmul.f32 %v2690, %v2689
      %v2692 = vmul.f32 0.5, %v2691
      %v2693 = vsub.f32 1.5, %v2692
      %v2694 = vmul.f32 %v2689, %v2693
      %vm2695 = vweird.f32 %v2635
      %vm2696 = vweird.f32 %v2689
      %vm2697 = vmor %vm2695, %vm2696
      %v2698 = vsel %vm2697, %v2689, %v2694
      %v2699 = vrsqrt.pop %v2636
      %v2700 = vmul.f32 %v2699, %v2636
      %v2701 = vmul.f32 %v2700, %v2699
      %v2702 = vmul.f32 0.5, %v2701
      %v2703 = vsub.f32 1.5, %v2702
      %v2704 = vmul.f32 %v2699, %v2703
      %vm2705 = vweird.f32 %v2636
      %vm2706 = vweird.f32 %v2699
      %vm2707 = vmor %vm2705, %vm2706
      %v2708 = vsel %vm2707, %v2699, %v2704
      %v2709 = vrsqrt.pop %v2637
      %v2710 = vmul.f32 %v2709, %v2637
      %v2711 = vmul.f32 %v2710, %v2709
      %v2712 = vmul.f32 0.5, %v2711
      %v2713 = vsub.f32 1.5, %v2712
      %v2714 = vmul.f32 %v2709, %v2713
      %vm2715 = vweird.f32 %v2637
      %vm2716 = vweird.f32 %v2709
      %vm2717 = vmor %vm2715, %vm2716
      %v2718 = vsel %vm2717, %v2709, %v2714
      %v2719 = vrsqrt.pop %v2638
      %v2720 = vmul.f32 %v2719, %v2638
      %v2721 = vmul.f32 %v2720, %v2719
      %v2722 = vmul.f32 0.5, %v2721
      %v2723 = vsub.f32 1.5, %v2722
      %v2724 = vmul.f32 %v2719, %v2723
      %vm2725 = vweird.f32 %v2638
      %vm2726 = vweird.f32 %v2719
      %vm2727 = vmor %vm2725, %vm2726
      %v2728 = vsel %vm2727, %v2719, %v2724
      %v2729 = vrsqrt.pop %v2639
      %v2730 = vmul.f32 %v2729, %v2639
      %v2731 = vmul.f32 %v2730, %v2729
      %v2732 = vmul.f32 0.5, %v2731
      %v2733 = vsub.f32 1.5, %v2732
      %v2734 = vmul.f32 %v2729, %v2733
      %vm2735 = vweird.f32 %v2639
      %vm2736 = vweird.f32 %v2729
      %vm2737 = vmor %vm2735, %vm2736
      %v2738 = vsel %vm2737, %v2729, %v2734
      %v2739 = vrsqrt.pop %v2640
      %v2740 = vmul.f32 %v2739, %v2640
      %v2741 = vmul.f32 %v2740, %v2739
      %v2742 = vmul.f32 0.5, %v2741
      %v2743 = vsub.f32 1.5, %v2742
      %v2744 = vmul.f32 %v2739, %v2743
      %vm2745 = vweird.f32 %v2640
      %vm2746 = vweird.f32 %v2739
      %vm2747 = vmor %vm2745, %vm2746
      %v2748 = vsel %vm2747, %v2739, %v2744
      %v2749 = vrsqrt.pop %v2641
      %v2750 = vmul.f32 %v2749, %v2641
      %v2751 = vmul.f32 %v2750, %v2749
      %v2752 = vmul.f32 0.5, %v2751
      %v2753 = vsub.f32 1.5, %v2752
      %v2754 = vmul.f32 %v2749, %v2753
      %vm2755 = vweird.f32 %v2641
      %vm2756 = vweird.f32 %v2749
      %vm2757 = vmor %vm2755, %vm2756
      %v2758 = vsel %vm2757, %v2749, %v2754
      %v2759 = vrsqrt.pop %v2642
      %v2760 = vmul.f32 %v2759, %v2642
      %v2761 = vmul.f32 %v2760, %v2759
      %v2762 = vmul.f32 0.5, %v2761
      %v2763 = vsub.f32 1.5, %v2762
      %v2764 = vmul.f32 %v2759, %v2763
      %vm2765 = vweird.f32 %v2642
      %vm2766 = vweird.f32 %v2759
      %vm2767 = vmor %vm2765, %vm2766
      %v2768 = vsel %vm2767, %v2759, %v2764
      %v2769 = vrsqrt.pop %v2643
      %v2770 = vmul.f32 %v2769, %v2643
      %v2771 = vmul.f32 %v2770, %v2769
      %v2772 = vmul.f32 0.5, %v2771
      %v2773 = vsub.f32 1.5, %v2772
      %v2774 = vmul.f32 %v2769, %v2773
      %vm2775 = vweird.f32 %v2643
      %vm2776 = vweird.f32 %v2769
      %vm2777 = vmor %vm2775, %vm2776
      %v2778 = vsel %vm2777, %v2769, %v2774
      %v2779 = vrsqrt.pop %v2644
      %v2780 = vmul.f32 %v2779, %v2644
      %v2781 = vmul.f32 %v2780, %v2779
      %v2782 = vmul.f32 0.5, %v2781
      %v2783 = vsub.f32 1.5, %v2782
      %v2784 = vmul.f32 %v2779, %v2783
      %vm2785 = vweird.f32 %v2644
      %vm2786 = vweird.f32 %v2779
      %vm2787 = vmor %vm2785, %vm2786
      %v2788 = vsel %vm2787, %v2779, %v2784
      %v2789 = vrsqrt.pop %v2645
      %v2790 = vmul.f32 %v2789, %v2645
      %v2791 = vmul.f32 %v2790, %v2789
      %v2792 = vmul.f32 0.5, %v2791
      %v2793 = vsub.f32 1.5, %v2792
      %v2794 = vmul.f32 %v2789, %v2793
      %vm2795 = vweird.f32 %v2645
      %vm2796 = vweird.f32 %v2789
      %vm2797 = vmor %vm2795, %vm2796
      %v2798 = vsel %vm2797, %v2789, %v2794
      %v2799 = vrsqrt.pop %v2646
      %v2800 = vmul.f32 %v2799, %v2646
      %v2801 = vmul.f32 %v2800, %v2799
      %v2802 = vmul.f32 0.5, %v2801
      %v2803 = vsub.f32 1.5, %v2802
      %v2804 = vmul.f32 %v2799, %v2803
      %vm2805 = vweird.f32 %v2646
      %vm2806 = vweird.f32 %v2799
      %vm2807 = vmor %vm2805, %vm2806
      %v2808 = vsel %vm2807, %v2799, %v2804
      %v2809 = vrsqrt.pop %v2647
      %v2810 = vmul.f32 %v2809, %v2647
      %v2811 = vmul.f32 %v2810, %v2809
      %v2812 = vmul.f32 0.5, %v2811
      %v2813 = vsub.f32 1.5, %v2812
      %v2814 = vmul.f32 %v2809, %v2813
      %vm2815 = vweird.f32 %v2647
      %vm2816 = vweird.f32 %v2809
      %vm2817 = vmor %vm2815, %vm2816
      %v2818 = vsel %vm2817, %v2809, %v2814
      %v2819 = vrsqrt.pop %v2648
      %v2820 = vmul.f32 %v2819, %v2648
      %v2821 = vmul.f32 %v2820, %v2819
      %v2822 = vmul.f32 0.5, %v2821
      %v2823 = vsub.f32 1.5, %v2822
      %v2824 = vmul.f32 %v2819, %v2823
      %vm2825 = vweird.f32 %v2648
      %vm2826 = vweird.f32 %v2819
      %vm2827 = vmor %vm2825, %vm2826
      %v2828 = vsel %vm2827, %v2819, %v2824
      %v2829 = vmul.f32 %v2613, %v2658
      %v2830 = vmul.f32 %v2614, %v2668
      %v2831 = vmul.f32 %v2615, %v2678
      %v2832 = vmul.f32 %v2616, %v2688
      %v2833 = vmul.f32 %v2617, %v2698
      %v2834 = vmul.f32 %v2618, %v2708
      %v2835 = vmul.f32 %v2619, %v2718
      %v2836 = vmul.f32 %v2620, %v2728
      %v2837 = vmul.f32 %v2621, %v2738
      %v2838 = vmul.f32 %v2622, %v2748
      %v2839 = vmul.f32 %v2623, %v2758
      %v2840 = vmul.f32 %v2624, %v2768
      %v2841 = vmul.f32 %v2625, %v2778
      %v2842 = vmul.f32 %v2626, %v2788
      %v2843 = vmul.f32 %v2627, %v2798
      %v2844 = vmul.f32 %v2628, %v2808
      %v2845 = vmul.f32 %v2629, %v2818
      %v2846 = vmul.f32 %v2630, %v2828
      %v2847 = vadd.f32 %v2829, %v2523
      %v2848 = vadd.f32 %v2830, %v2526
      %v2849 = vadd.f32 %v2831, %v2529
      %v2850 = vadd.f32 %v2832, %v2532
      %v2851 = vadd.f32 %v2833, %v2535
      %v2852 = vadd.f32 %v2834, %v2538
      %v2853 = vadd.f32 %v2835, %v2541
      %v2854 = vadd.f32 %v2836, %v2544
      %v2855 = vadd.f32 %v2837, %v2547
      %v2856 = vadd.f32 %v2838, %v2550
      %v2857 = vadd.f32 %v2839, %v2553
      %v2858 = vadd.f32 %v2840, %v2556
      %v2859 = vadd.f32 %v2841, %v2559
      %v2860 = vadd.f32 %v2842, %v2562
      %v2861 = vadd.f32 %v2843, %v2565
      %v2862 = vadd.f32 %v2844, %v2568
      %v2863 = vadd.f32 %v2845, %v2571
      %v2864 = vadd.f32 %v2846, %v2574
      %v2865 = vxor.u32 %v2847, 2147483648
      %v2866 = vxor.u32 %v2848, 2147483648
      %v2867 = vxor.u32 %v2849, 2147483648
      %v2868 = vxor.u32 %v2850, 2147483648
      %v2869 = vxor.u32 %v2851, 2147483648
      %v2870 = vxor.u32 %v2852, 2147483648
      %v2871 = vxor.u32 %v2853, 2147483648
      %v2872 = vxor.u32 %v2854, 2147483648
      %v2873 = vxor.u32 %v2855, 2147483648
      %v2874 = vxor.u32 %v2856, 2147483648
      %v2875 = vxor.u32 %v2857, 2147483648
      %v2876 = vxor.u32 %v2858, 2147483648
      %v2877 = vxor.u32 %v2859, 2147483648
      %v2878 = vxor.u32 %v2860, 2147483648
      %v2879 = vxor.u32 %v2861, 2147483648
      %v2880 = vxor.u32 %v2862, 2147483648
      %v2881 = vxor.u32 %v2863, 2147483648
      %v2882 = vxor.u32 %v2864, 2147483648
      %v2883 = vmul.f32 %v2865, 1.442695
      %v2884 = vpow.pop %v2883
      %v2885 = vmul.f32 %v2866, 1.442695
      %v2886 = vpow.pop %v2885
      %v2887 = vmul.f32 %v2867, 1.442695
      %v2888 = vpow.pop %v2887
      %v2889 = vmul.f32 %v2868, 1.442695
      %v2890 = vpow.pop %v2889
      %v2891 = vmul.f32 %v2869, 1.442695
      %v2892 = vpow.pop %v2891
      %v2893 = vmul.f32 %v2870, 1.442695
      %v2894 = vpow.pop %v2893
      %v2895 = vmul.f32 %v2871, 1.442695
      %v2896 = vpow.pop %v2895
      %v2897 = vmul.f32 %v2872, 1.442695
      %v2898 = vpow.pop %v2897
      %v2899 = vmul.f32 %v2873, 1.442695
      %v2900 = vpow.pop %v2899
      %v2901 = vmul.f32 %v2874, 1.442695
      %v2902 = vpow.pop %v2901
      %v2903 = vmul.f32 %v2875, 1.442695
      %v2904 = vpow.pop %v2903
      %v2905 = vmul.f32 %v2876, 1.442695
      %v2906 = vpow.pop %v2905
      %v2907 = vmul.f32 %v2877, 1.442695
      %v2908 = vpow.pop %v2907
      %v2909 = vmul.f32 %v2878, 1.442695
      %v2910 = vpow.pop %v2909
      %v2911 = vmul.f32 %v2879, 1.442695
      %v2912 = vpow.pop %v2911
      %v2913 = vmul.f32 %v2880, 1.442695
      %v2914 = vpow.pop %v2913
      %v2915 = vmul.f32 %v2881, 1.442695
      %v2916 = vpow.pop %v2915
      %v2917 = vmul.f32 %v2882, 1.442695
      %v2918 = vpow.pop %v2917
      %v2919 = vadd.f32 %v2884, 1.0
      %v2920 = vadd.f32 %v2886, 1.0
      %v2921 = vadd.f32 %v2888, 1.0
      %v2922 = vadd.f32 %v2890, 1.0
      %v2923 = vadd.f32 %v2892, 1.0
      %v2924 = vadd.f32 %v2894, 1.0
      %v2925 = vadd.f32 %v2896, 1.0
      %v2926 = vadd.f32 %v2898, 1.0
      %v2927 = vadd.f32 %v2900, 1.0
      %v2928 = vadd.f32 %v2902, 1.0
      %v2929 = vadd.f32 %v2904, 1.0
      %v2930 = vadd.f32 %v2906, 1.0
      %v2931 = vadd.f32 %v2908, 1.0
      %v2932 = vadd.f32 %v2910, 1.0
      %v2933 = vadd.f32 %v2912, 1.0
      %v2934 = vadd.f32 %v2914, 1.0
      %v2935 = vadd.f32 %v2916, 1.0
      %v2936 = vadd.f32 %v2918, 1.0
      %v2937 = vrcp.pop %v2919
      %v2938 = vmul.f32 %v2919, %v2937
      %v2939 = vsub.f32 1.0, %v2938
      %v2940 = vmul.f32 %v2937, %v2939
      %v2941 = vadd.f32 %v2937, %v2940
      %vm2942 = vweird.f32 %v2919
      %vm2943 = vweird.f32 %v2937
      %vm2944 = vmor %vm2942, %vm2943
      %v2945 = vsel %vm2944, %v2937, %v2941
      %v2946 = vand.u32 2147483647, %v2919
      %vm2947 = vcmp.eq.f32.partialorder %v2946, 8.507059e+37
      %v2948 = vand.u32 %v2919, 2147483648
      %v2949 = vor.u32 1.1754944e-38, %v2948
      %v2950 = vsel %vm2947, %v2949, %v2945
      %v2951 = vmul.f32 1.0, %v2950
      %v2952 = vrcp.pop %v2920
      %v2953 = vmul.f32 %v2920, %v2952
      %v2954 = vsub.f32 1.0, %v2953
      %v2955 = vmul.f32 %v2952, %v2954
      %v2956 = vadd.f32 %v2952, %v2955
      %vm2957 = vweird.f32 %v2920
      %vm2958 = vweird.f32 %v2952
      %vm2959 = vmor %vm2957, %vm2958
      %v2960 = vsel %vm2959, %v2952, %v2956
      %v2961 = vand.u32 2147483647, %v2920
      %vm2962 = vcmp.eq.f32.partialorder %v2961, 8.507059e+37
      %v2963 = vand.u32 %v2920, 2147483648
      %v2964 = vor.u32 1.1754944e-38, %v2963
      %v2965 = vsel %vm2962, %v2964, %v2960
      %v2966 = vmul.f32 1.0, %v2965
      %v2967 = vrcp.pop %v2921
      %v2968 = vmul.f32 %v2921, %v2967
      %v2969 = vsub.f32 1.0, %v2968
      %v2970 = vmul.f32 %v2967, %v2969
      %v2971 = vadd.f32 %v2967, %v2970
      %vm2972 = vweird.f32 %v2921
      %vm2973 = vweird.f32 %v2967
      %vm2974 = vmor %vm2972, %vm2973
      %v2975 = vsel %vm2974, %v2967, %v2971
      %v2976 = vand.u32 2147483647, %v2921
      %vm2977 = vcmp.eq.f32.partialorder %v2976, 8.507059e+37
      %v2978 = vand.u32 %v2921, 2147483648
      %v2979 = vor.u32 1.1754944e-38, %v2978
      %v2980 = vsel %vm2977, %v2979, %v2975
      %v2981 = vmul.f32 1.0, %v2980
      %v2982 = vrcp.pop %v2922
      %v2983 = vmul.f32 %v2922, %v2982
      %v2984 = vsub.f32 1.0, %v2983
      %v2985 = vmul.f32 %v2982, %v2984
      %v2986 = vadd.f32 %v2982, %v2985
      %vm2987 = vweird.f32 %v2922
      %vm2988 = vweird.f32 %v2982
      %vm2989 = vmor %vm2987, %vm2988
      %v2990 = vsel %vm2989, %v2982, %v2986
      %v2991 = vand.u32 2147483647, %v2922
      %vm2992 = vcmp.eq.f32.partialorder %v2991, 8.507059e+37
      %v2993 = vand.u32 %v2922, 2147483648
      %v2994 = vor.u32 1.1754944e-38, %v2993
      %v2995 = vsel %vm2992, %v2994, %v2990
      %v2996 = vmul.f32 1.0, %v2995
      %v2997 = vrcp.pop %v2923
      %v2998 = vmul.f32 %v2923, %v2997
      %v2999 = vsub.f32 1.0, %v2998
      %v3000 = vmul.f32 %v2997, %v2999
      %v3001 = vadd.f32 %v2997, %v3000
      %vm3002 = vweird.f32 %v2923
      %vm3003 = vweird.f32 %v2997
      %vm3004 = vmor %vm3002, %vm3003
      %v3005 = vsel %vm3004, %v2997, %v3001
      %v3006 = vand.u32 2147483647, %v2923
      %vm3007 = vcmp.eq.f32.partialorder %v3006, 8.507059e+37
      %v3008 = vand.u32 %v2923, 2147483648
      %v3009 = vor.u32 1.1754944e-38, %v3008
      %v3010 = vsel %vm3007, %v3009, %v3005
      %v3011 = vmul.f32 1.0, %v3010
      %v3012 = vrcp.pop %v2924
      %v3013 = vmul.f32 %v2924, %v3012
      %v3014 = vsub.f32 1.0, %v3013
      %v3015 = vmul.f32 %v3012, %v3014
      %v3016 = vadd.f32 %v3012, %v3015
      %vm3017 = vweird.f32 %v2924
      %vm3018 = vweird.f32 %v3012
      %vm3019 = vmor %vm3017, %vm3018
      %v3020 = vsel %vm3019, %v3012, %v3016
      %v3021 = vand.u32 2147483647, %v2924
      %vm3022 = vcmp.eq.f32.partialorder %v3021, 8.507059e+37
      %v3023 = vand.u32 %v2924, 2147483648
      %v3024 = vor.u32 1.1754944e-38, %v3023
      %v3025 = vsel %vm3022, %v3024, %v3020
      %v3026 = vmul.f32 1.0, %v3025
      %v3027 = vrcp.pop %v2925
      %v3028 = vmul.f32 %v2925, %v3027
      %v3029 = vsub.f32 1.0, %v3028
      %v3030 = vmul.f32 %v3027, %v3029
      %v3031 = vadd.f32 %v3027, %v3030
      %vm3032 = vweird.f32 %v2925
      %vm3033 = vweird.f32 %v3027
      %vm3034 = vmor %vm3032, %vm3033
      %v3035 = vsel %vm3034, %v3027, %v3031
      %v3036 = vand.u32 2147483647, %v2925
      %vm3037 = vcmp.eq.f32.partialorder %v3036, 8.507059e+37
      %v3038 = vand.u32 %v2925, 2147483648
      %v3039 = vor.u32 1.1754944e-38, %v3038
      %v3040 = vsel %vm3037, %v3039, %v3035
      %v3041 = vmul.f32 1.0, %v3040
      %v3042 = vrcp.pop %v2926
      %v3043 = vmul.f32 %v2926, %v3042
      %v3044 = vsub.f32 1.0, %v3043
      %v3045 = vmul.f32 %v3042, %v3044
      %v3046 = vadd.f32 %v3042, %v3045
      %vm3047 = vweird.f32 %v2926
      %vm3048 = vweird.f32 %v3042
      %vm3049 = vmor %vm3047, %vm3048
      %v3050 = vsel %vm3049, %v3042, %v3046
      %v3051 = vand.u32 2147483647, %v2926
      %vm3052 = vcmp.eq.f32.partialorder %v3051, 8.507059e+37
      %v3053 = vand.u32 %v2926, 2147483648
      %v3054 = vor.u32 1.1754944e-38, %v3053
      %v3055 = vsel %vm3052, %v3054, %v3050
      %v3056 = vmul.f32 1.0, %v3055
      %v3057 = vrcp.pop %v2927
      %v3058 = vmul.f32 %v2927, %v3057
      %v3059 = vsub.f32 1.0, %v3058
      %v3060 = vmul.f32 %v3057, %v3059
      %v3061 = vadd.f32 %v3057, %v3060
      %vm3062 = vweird.f32 %v2927
      %vm3063 = vweird.f32 %v3057
      %vm3064 = vmor %vm3062, %vm3063
      %v3065 = vsel %vm3064, %v3057, %v3061
      %v3066 = vand.u32 2147483647, %v2927
      %vm3067 = vcmp.eq.f32.partialorder %v3066, 8.507059e+37
      %v3068 = vand.u32 %v2927, 2147483648
      %v3069 = vor.u32 1.1754944e-38, %v3068
      %v3070 = vsel %vm3067, %v3069, %v3065
      %v3071 = vmul.f32 1.0, %v3070
      %v3072 = vrcp.pop %v2928
      %v3073 = vmul.f32 %v2928, %v3072
      %v3074 = vsub.f32 1.0, %v3073
      %v3075 = vmul.f32 %v3072, %v3074
      %v3076 = vadd.f32 %v3072, %v3075
      %vm3077 = vweird.f32 %v2928
      %vm3078 = vweird.f32 %v3072
      %vm3079 = vmor %vm3077, %vm3078
      %v3080 = vsel %vm3079, %v3072, %v3076
      %v3081 = vand.u32 2147483647, %v2928
      %vm3082 = vcmp.eq.f32.partialorder %v3081, 8.507059e+37
      %v3083 = vand.u32 %v2928, 2147483648
      %v3084 = vor.u32 1.1754944e-38, %v3083
      %v3085 = vsel %vm3082, %v3084, %v3080
      %v3086 = vmul.f32 1.0, %v3085
      %v3087 = vrcp.pop %v2929
      %v3088 = vmul.f32 %v2929, %v3087
      %v3089 = vsub.f32 1.0, %v3088
      %v3090 = vmul.f32 %v3087, %v3089
      %v3091 = vadd.f32 %v3087, %v3090
      %vm3092 = vweird.f32 %v2929
      %vm3093 = vweird.f32 %v3087
      %vm3094 = vmor %vm3092, %vm3093
      %v3095 = vsel %vm3094, %v3087, %v3091
      %v3096 = vand.u32 2147483647, %v2929
      %vm3097 = vcmp.eq.f32.partialorder %v3096, 8.507059e+37
      %v3098 = vand.u32 %v2929, 2147483648
      %v3099 = vor.u32 1.1754944e-38, %v3098
      %v3100 = vsel %vm3097, %v3099, %v3095
      %v3101 = vmul.f32 1.0, %v3100
      %v3102 = vrcp.pop %v2930
      %v3103 = vmul.f32 %v2930, %v3102
      %v3104 = vsub.f32 1.0, %v3103
      %v3105 = vmul.f32 %v3102, %v3104
      %v3106 = vadd.f32 %v3102, %v3105
      %vm3107 = vweird.f32 %v2930
      %vm3108 = vweird.f32 %v3102
      %vm3109 = vmor %vm3107, %vm3108
      %v3110 = vsel %vm3109, %v3102, %v3106
      %v3111 = vand.u32 2147483647, %v2930
      %vm3112 = vcmp.eq.f32.partialorder %v3111, 8.507059e+37
      %v3113 = vand.u32 %v2930, 2147483648
      %v3114 = vor.u32 1.1754944e-38, %v3113
      %v3115 = vsel %vm3112, %v3114, %v3110
      %v3116 = vmul.f32 1.0, %v3115
      %v3117 = vrcp.pop %v2931
      %v3118 = vmul.f32 %v2931, %v3117
      %v3119 = vsub.f32 1.0, %v3118
      %v3120 = vmul.f32 %v3117, %v3119
      %v3121 = vadd.f32 %v3117, %v3120
      %vm3122 = vweird.f32 %v2931
      %vm3123 = vweird.f32 %v3117
      %vm3124 = vmor %vm3122, %vm3123
      %v3125 = vsel %vm3124, %v3117, %v3121
      %v3126 = vand.u32 2147483647, %v2931
      %vm3127 = vcmp.eq.f32.partialorder %v3126, 8.507059e+37
      %v3128 = vand.u32 %v2931, 2147483648
      %v3129 = vor.u32 1.1754944e-38, %v3128
      %v3130 = vsel %vm3127, %v3129, %v3125
      %v3131 = vmul.f32 1.0, %v3130
      %v3132 = vrcp.pop %v2932
      %v3133 = vmul.f32 %v2932, %v3132
      %v3134 = vsub.f32 1.0, %v3133
      %v3135 = vmul.f32 %v3132, %v3134
      %v3136 = vadd.f32 %v3132, %v3135
      %vm3137 = vweird.f32 %v2932
      %vm3138 = vweird.f32 %v3132
      %vm3139 = vmor %vm3137, %vm3138
      %v3140 = vsel %vm3139, %v3132, %v3136
      %v3141 = vand.u32 2147483647, %v2932
      %vm3142 = vcmp.eq.f32.partialorder %v3141, 8.507059e+37
      %v3143 = vand.u32 %v2932, 2147483648
      %v3144 = vor.u32 1.1754944e-38, %v3143
      %v3145 = vsel %vm3142, %v3144, %v3140
      %v3146 = vmul.f32 1.0, %v3145
      %v3147 = vrcp.pop %v2933
      %v3148 = vmul.f32 %v2933, %v3147
      %v3149 = vsub.f32 1.0, %v3148
      %v3150 = vmul.f32 %v3147, %v3149
      %v3151 = vadd.f32 %v3147, %v3150
      %vm3152 = vweird.f32 %v2933
      %vm3153 = vweird.f32 %v3147
      %vm3154 = vmor %vm3152, %vm3153
      %v3155 = vsel %vm3154, %v3147, %v3151
      %v3156 = vand.u32 2147483647, %v2933
      %vm3157 = vcmp.eq.f32.partialorder %v3156, 8.507059e+37
      %v3158 = vand.u32 %v2933, 2147483648
      %v3159 = vor.u32 1.1754944e-38, %v3158
      %v3160 = vsel %vm3157, %v3159, %v3155
      %v3161 = vmul.f32 1.0, %v3160
      %v3162 = vrcp.pop %v2934
      %v3163 = vmul.f32 %v2934, %v3162
      %v3164 = vsub.f32 1.0, %v3163
      %v3165 = vmul.f32 %v3162, %v3164
      %v3166 = vadd.f32 %v3162, %v3165
      %vm3167 = vweird.f32 %v2934
      %vm3168 = vweird.f32 %v3162
      %vm3169 = vmor %vm3167, %vm3168
      %v3170 = vsel %vm3169, %v3162, %v3166
      %v3171 = vand.u32 2147483647, %v2934
      %vm3172 = vcmp.eq.f32.partialorder %v3171, 8.507059e+37
      %v3173 = vand.u32 %v2934, 2147483648
      %v3174 = vor.u32 1.1754944e-38, %v3173
      %v3175 = vsel %vm3172, %v3174, %v3170
      %v3176 = vmul.f32 1.0, %v3175
      %v3177 = vrcp.pop %v2935
      %v3178 = vmul.f32 %v2935, %v3177
      %v3179 = vsub.f32 1.0, %v3178
      %v3180 = vmul.f32 %v3177, %v3179
      %v3181 = vadd.f32 %v3177, %v3180
      %vm3182 = vweird.f32 %v2935
      %vm3183 = vweird.f32 %v3177
      %vm3184 = vmor %vm3182, %vm3183
      %v3185 = vsel %vm3184, %v3177, %v3181
      %v3186 = vand.u32 2147483647, %v2935
      %vm3187 = vcmp.eq.f32.partialorder %v3186, 8.507059e+37
      %v3188 = vand.u32 %v2935, 2147483648
      %v3189 = vor.u32 1.1754944e-38, %v3188
      %v3190 = vsel %vm3187, %v3189, %v3185
      %v3191 = vmul.f32 1.0, %v3190
      %v3192 = vrcp.pop %v2936
      %v3193 = vmul.f32 %v2936, %v3192
      %v3194 = vsub.f32 1.0, %v3193
      %v3195 = vmul.f32 %v3192, %v3194
      %v3196 = vadd.f32 %v3192, %v3195
      %vm3197 = vweird.f32 %v2936
      %vm3198 = vweird.f32 %v3192
      %vm3199 = vmor %vm3197, %vm3198
      %v3200 = vsel %vm3199, %v3192, %v3196
      %v3201 = vand.u32 2147483647, %v2936
      %vm3202 = vcmp.eq.f32.partialorder %v3201, 8.507059e+37
      %v3203 = vand.u32 %v2936, 2147483648
      %v3204 = vor.u32 1.1754944e-38, %v3203
      %v3205 = vsel %vm3202, %v3204, %v3200
      %v3206 = vmul.f32 1.0, %v3205
      %v3207 = vmul.f32 %v2951, %v2658
      %v3208 = vmul.f32 %v2966, %v2668
      %v3209 = vmul.f32 %v2981, %v2678
      %v3210 = vmul.f32 %v2996, %v2688
      %v3211 = vmul.f32 %v3011, %v2698
      %v3212 = vmul.f32 %v3026, %v2708
      %v3213 = vmul.f32 %v3041, %v2718
      %v3214 = vmul.f32 %v3056, %v2728
      %v3215 = vmul.f32 %v3071, %v2738
      %v3216 = vmul.f32 %v3086, %v2748
      %v3217 = vmul.f32 %v3101, %v2758
      %v3218 = vmul.f32 %v3116, %v2768
      %v3219 = vmul.f32 %v3131, %v2778
      %v3220 = vmul.f32 %v3146, %v2788
      %v3221 = vmul.f32 %v3161, %v2798
      %v3222 = vmul.f32 %v3176, %v2808
      %v3223 = vmul.f32 %v3191, %v2818
      %v3224 = vmul.f32 %v3206, %v2828
      %v3225 = vmul.f32 %v3207, %v2335
      %v3226 = vmul.f32 %v3208, %v2337
      %v3227 = vmul.f32 %v3209, %v2340
      %v3228 = vmul.f32 %v3210, %v2342
      %v3229 = vmul.f32 %v3211, %v2345
      %v3230 = vmul.f32 %v3212, %v2347
      %v3231 = vmul.f32 %v3213, %v2350
      %v3232 = vmul.f32 %v3214, %v2352
      %v3233 = vmul.f32 %v3215, %v2355
      %v3234 = vmul.f32 %v3216, %v2357
      %v3235 = vmul.f32 %v3217, %v2360
      %v3236 = vmul.f32 %v3218, %v2362
      %v3237 = vmul.f32 %v3219, %v2365
      %v3238 = vmul.f32 %v3220, %v2367
      %v3239 = vmul.f32 %v3221, %v2370
      %v3240 = vmul.f32 %v3222, %v2372
      %v3241 = vmul.f32 %v3223, %v2375
      %v3242 = vmul.f32 %v3224, %v2377
      %v3243 = vmul.f32 %v3207, %v2443
      %v3244 = vmul.f32 %v3208, %v2445
      %v3245 = vmul.f32 %v3209, %v2448
      %v3246 = vmul.f32 %v3210, %v2450
      %v3247 = vmul.f32 %v3211, %v2453
      %v3248 = vmul.f32 %v3212, %v2455
      %v3249 = vmul.f32 %v3213, %v2458
      %v3250 = vmul.f32 %v3214, %v2460
      %v3251 = vmul.f32 %v3215, %v2463
      %v3252 = vmul.f32 %v3216, %v2465
      %v3253 = vmul.f32 %v3217, %v2468
      %v3254 = vmul.f32 %v3218, %v2470
      %v3255 = vmul.f32 %v3219, %v2473
      %v3256 = vmul.f32 %v3220, %v2475
      %v3257 = vmul.f32 %v3221, %v2478
      %v3258 = vmul.f32 %v3222, %v2480
      %v3259 = vmul.f32 %v3223, %v2483
      %v3260 = vmul.f32 %v3224, %v2485
      %v3261 = vmul.f32 %v3225, %v2524
      %v3262 = vmul.f32 %v3226, %v2527
      %v3263 = vmul.f32 %v3227, %v2530
      %v3264 = vmul.f32 %v3228, %v2533
      %v3265 = vmul.f32 %v3229, %v2536
      %v3266 = vmul.f32 %v3230, %v2539
      %v3267 = vmul.f32 %v3231, %v2542
      %v3268 = vmul.f32 %v3232, %v2545
      %v3269 = vmul.f32 %v3233, %v2548
      %v3270 = vmul.f32 %v3234, %v2551
      %v3271 = vmul.f32 %v3235, %v2554
      %v3272 = vmul.f32 %v3236, %v2557
      %v3273 = vmul.f32 %v3237, %v2560
      %v3274 = vmul.f32 %v3238, %v2563
      %v3275 = vmul.f32 %v3239, %v2566
      %v3276 = vmul.f32 %v3240, %v2569
      %v3277 = vmul.f32 %v3241, %v2572
      %v3278 = vmul.f32 %v3242, %v2575
      %v3279 = vmul.f32 %v3243, %v2525
      %v3280 = vmul.f32 %v3244, %v2528
      %v3281 = vmul.f32 %v3245, %v2531
      %v3282 = vmul.f32 %v3246, %v2534
      %v3283 = vmul.f32 %v3247, %v2537
      %v3284 = vmul.f32 %v3248, %v2540
      %v3285 = vmul.f32 %v3249, %v2543
      %v3286 = vmul.f32 %v3250, %v2546
      %v3287 = vmul.f32 %v3251, %v2549
      %v3288 = vmul.f32 %v3252, %v2552
      %v3289 = vmul.f32 %v3253, %v2555
      %v3290 = vmul.f32 %v3254, %v2558
      %v3291 = vmul.f32 %v3255, %v2561
      %v3292 = vmul.f32 %v3256, %v2564
      %v3293 = vmul.f32 %v3257, %v2567
      %v3294 = vmul.f32 %v3258, %v2570
      %v3295 = vmul.f32 %v3259, %v2573
      %v3296 = vmul.f32 %v3260, %v2576
      %v3297 = vsub.f32 %v3261, %v3279
      %v3298 = vsub.f32 %v3262, %v3280
      %v3299 = vsub.f32 %v3263, %v3281
      %v3300 = vsub.f32 %v3264, %v3282
      %v3301 = vsub.f32 %v3265, %v3283
      %v3302 = vsub.f32 %v3266, %v3284
      %v3303 = vsub.f32 %v3267, %v3285
      %v3304 = vsub.f32 %v3268, %v3286
      %v3305 = vsub.f32 %v3269, %v3287
      %v3306 = vsub.f32 %v3270, %v3288
      %v3307 = vsub.f32 %v3271, %v3289
      %v3308 = vsub.f32 %v3272, %v3290
      %v3309 = vsub.f32 %v3273, %v3291
      %v3310 = vsub.f32 %v3274, %v3292
      %v3311 = vsub.f32 %v3275, %v3293
      %v3312 = vsub.f32 %v3276, %v3294
      %v3313 = vsub.f32 %v3277, %v3295
      %v3314 = vsub.f32 %v3278, %v3296
      %v3315 = vmul.f32 %v3225, %v2525
      %v3316 = vmul.f32 %v3226, %v2528
      %v3317 = vmul.f32 %v3227, %v2531
      %v3318 = vmul.f32 %v3228, %v2534
      %v3319 = vmul.f32 %v3229, %v2537
      %v3320 = vmul.f32 %v3230, %v2540
      %v3321 = vmul.f32 %v3231, %v2543
      %v3322 = vmul.f32 %v3232, %v2546
      %v3323 = vmul.f32 %v3233, %v2549
      %v3324 = vmul.f32 %v3234, %v2552
      %v3325 = vmul.f32 %v3235, %v2555
      %v3326 = vmul.f32 %v3236, %v2558
      %v3327 = vmul.f32 %v3237, %v2561
      %v3328 = vmul.f32 %v3238, %v2564
      %v3329 = vmul.f32 %v3239, %v2567
      %v3330 = vmul.f32 %v3240, %v2570
      %v3331 = vmul.f32 %v3241, %v2573
      %v3332 = vmul.f32 %v3242, %v2576
      %v3333 = vmul.f32 %v3243, %v2524
      %v3334 = vmul.f32 %v3244, %v2527
      %v3335 = vmul.f32 %v3245, %v2530
      %v3336 = vmul.f32 %v3246, %v2533
      %v3337 = vmul.f32 %v3247, %v2536
      %v3338 = vmul.f32 %v3248, %v2539
      %v3339 = vmul.f32 %v3249, %v2542
      %v3340 = vmul.f32 %v3250, %v2545
      %v3341 = vmul.f32 %v3251, %v2548
      %v3342 = vmul.f32 %v3252, %v2551
      %v3343 = vmul.f32 %v3253, %v2554
      %v3344 = vmul.f32 %v3254, %v2557
      %v3345 = vmul.f32 %v3255, %v2560
      %v3346 = vmul.f32 %v3256, %v2563
      %v3347 = vmul.f32 %v3257, %v2566
      %v3348 = vmul.f32 %v3258, %v2569
      %v3349 = vmul.f32 %v3259, %v2572
      %v3350 = vmul.f32 %v3260, %v2575
      %v3351 = vadd.f32 %v3315, %v3333
      %v3352 = vadd.f32 %v3316, %v3334
      %v3353 = vadd.f32 %v3317, %v3335
      %v3354 = vadd.f32 %v3318, %v3336
      %v3355 = vadd.f32 %v3319, %v3337
      %v3356 = vadd.f32 %v3320, %v3338
      %v3357 = vadd.f32 %v3321, %v3339
      %v3358 = vadd.f32 %v3322, %v3340
      %v3359 = vadd.f32 %v3323, %v3341
      %v3360 = vadd.f32 %v3324, %v3342
      %v3361 = vadd.f32 %v3325, %v3343
      %v3362 = vadd.f32 %v3326, %v3344
      %v3363 = vadd.f32 %v3327, %v3345
      %v3364 = vadd.f32 %v3328, %v3346
      %v3365 = vadd.f32 %v3329, %v3347
      %v3366 = vadd.f32 %v3330, %v3348
      %v3367 = vadd.f32 %v3331, %v3349
      %v3368 = vadd.f32 %v3332, %v3350
      %v3369 = vmul.f32 %v511, %v3297
      %v3370 = vmul.f32 %v512, %v3298
      %v3371 = vmul.f32 %v513, %v3299
      %v3372 = vmul.f32 %v514, %v3300
      %v3373 = vmul.f32 %v515, %v3301
      %v3374 = vmul.f32 %v516, %v3302
      %v3375 = vmul.f32 %v517, %v3303
      %v3376 = vmul.f32 %v518, %v3304
      %v3377 = vmul.f32 %v519, %v3305
      %v3378 = vmul.f32 %v520, %v3306
      %v3379 = vmul.f32 %v521, %v3307
      %v3380 = vmul.f32 %v522, %v3308
      %v3381 = vmul.f32 %v523, %v3309
      %v3382 = vmul.f32 %v524, %v3310
      %v3383 = vmul.f32 %v525, %v3311
      %v3384 = vmul.f32 %v526, %v3312
      %v3385 = vmul.f32 %v527, %v3313
      %v3386 = vmul.f32 %v528, %v3314
      %v3387 = vmul.f32 %v529, %v3351
      %v3388 = vmul.f32 %v530, %v3352
      %v3389 = vmul.f32 %v531, %v3353
      %v3390 = vmul.f32 %v532, %v3354
      %v3391 = vmul.f32 %v533, %v3355
      %v3392 = vmul.f32 %v534, %v3356
      %v3393 = vmul.f32 %v535, %v3357
      %v3394 = vmul.f32 %v536, %v3358
      %v3395 = vmul.f32 %v537, %v3359
      %v3396 = vmul.f32 %v538, %v3360
      %v3397 = vmul.f32 %v539, %v3361
      %v3398 = vmul.f32 %v540, %v3362
      %v3399 = vmul.f32 %v541, %v3363
      %v3400 = vmul.f32 %v542, %v3364
      %v3401 = vmul.f32 %v543, %v3365
      %v3402 = vmul.f32 %v544, %v3366
      %v3403 = vmul.f32 %v545, %v3367
      %v3404 = vmul.f32 %v546, %v3368
      %v3405 = vsub.f32 %v3369, %v3387
      %v3406 = vsub.f32 %v3370, %v3388
      %v3407 = vsub.f32 %v3371, %v3389
      %v3408 = vsub.f32 %v3372, %v3390
      %v3409 = vsub.f32 %v3373, %v3391
      %v3410 = vsub.f32 %v3374, %v3392
      %v3411 = vsub.f32 %v3375, %v3393
      %v3412 = vsub.f32 %v3376, %v3394
      %v3413 = vsub.f32 %v3377, %v3395
      %v3414 = vsub.f32 %v3378, %v3396
      %v3415 = vsub.f32 %v3379, %v3397
      %v3416 = vsub.f32 %v3380, %v3398
      %v3417 = vsub.f32 %v3381, %v3399
      %v3418 = vsub.f32 %v3382, %v3400
      %v3419 = vsub.f32 %v3383, %v3401
      %v3420 = vsub.f32 %v3384, %v3402
      %v3421 = vsub.f32 %v3385, %v3403
      %v3422 = vsub.f32 %v3386, %v3404
      %3423 = vst [vmem:[%s499] sm:$0xff] %v3405
      %3424 = vst [vmem:[%s499 + $0x8] sm:$0xff] %v3406
      %3425 = vst [vmem:[%s499 + $0x10] sm:$0xff] %v3407
      %3426 = vst [vmem:[%s499 + $0x18] sm:$0xff] %v3408
      %3427 = vst [vmem:[%s499 + $0x20] sm:$0xff] %v3409
      %3428 = vst [vmem:[%s499 + $0x28] sm:$0xff] %v3410
      %3429 = vst [vmem:[%s499 + $0x30] sm:$0xff] %v3411
      %3430 = vst [vmem:[%s499 + $0x38] sm:$0xff] %v3412
      %3431 = vst [vmem:[%s499 + $0x40] sm:$0xff] %v3413
      %3432 = vst [vmem:[%s499 + $0x48] sm:$0xff] %v3414
      %3433 = vst [vmem:[%s499 + $0x50] sm:$0xff] %v3415
      %3434 = vst [vmem:[%s499 + $0x58] sm:$0xff] %v3416
      %3435 = vst [vmem:[%s499 + $0x60] sm:$0xff] %v3417
      %3436 = vst [vmem:[%s499 + $0x68] sm:$0xff] %v3418
      %3437 = vst [vmem:[%s499 + $0x70] sm:$0xff] %v3419
      %3438 = vst [vmem:[%s499 + $0x78] sm:$0xff] %v3420
      %3439 = vst [vmem:[%s499 + $0x80] sm:$0xff] %v3421
      %3440 = vst [vmem:[%s499 + $0x88] sm:$0xff] %v3422
      %v3441 = vmul.f32 %v511, %v3351
      %v3442 = vmul.f32 %v512, %v3352
      %v3443 = vmul.f32 %v513, %v3353
      %v3444 = vmul.f32 %v514, %v3354
      %v3445 = vmul.f32 %v515, %v3355
      %v3446 = vmul.f32 %v516, %v3356
      %v3447 = vmul.f32 %v517, %v3357
      %v3448 = vmul.f32 %v518, %v3358
      %v3449 = vmul.f32 %v519, %v3359
      %v3450 = vmul.f32 %v520, %v3360
      %v3451 = vmul.f32 %v521, %v3361
      %v3452 = vmul.f32 %v522, %v3362
      %v3453 = vmul.f32 %v523, %v3363
      %v3454 = vmul.f32 %v524, %v3364
      %v3455 = vmul.f32 %v525, %v3365
      %v3456 = vmul.f32 %v526, %v3366
      %v3457 = vmul.f32 %v527, %v3367
      %v3458 = vmul.f32 %v528, %v3368
      %v3459 = vmul.f32 %v529, %v3297
      %v3460 = vmul.f32 %v530, %v3298
      %v3461 = vmul.f32 %v531, %v3299
      %v3462 = vmul.f32 %v532, %v3300
      %v3463 = vmul.f32 %v533, %v3301
      %v3464 = vmul.f32 %v534, %v3302
      %v3465 = vmul.f32 %v535, %v3303
      %v3466 = vmul.f32 %v536, %v3304
      %v3467 = vmul.f32 %v537, %v3305
      %v3468 = vmul.f32 %v538, %v3306
      %v3469 = vmul.f32 %v539, %v3307
      %v3470 = vmul.f32 %v540, %v3308
      %v3471 = vmul.f32 %v541, %v3309
      %v3472 = vmul.f32 %v542, %v3310
      %v3473 = vmul.f32 %v543, %v3311
      %v3474 = vmul.f32 %v544, %v3312
      %v3475 = vmul.f32 %v545, %v3313
      %v3476 = vmul.f32 %v546, %v3314
      %v3477 = vadd.f32 %v3441, %v3459
      %v3478 = vadd.f32 %v3442, %v3460
      %v3479 = vadd.f32 %v3443, %v3461
      %v3480 = vadd.f32 %v3444, %v3462
      %v3481 = vadd.f32 %v3445, %v3463
      %v3482 = vadd.f32 %v3446, %v3464
      %v3483 = vadd.f32 %v3447, %v3465
      %v3484 = vadd.f32 %v3448, %v3466
      %v3485 = vadd.f32 %v3449, %v3467
      %v3486 = vadd.f32 %v3450, %v3468
      %v3487 = vadd.f32 %v3451, %v3469
      %v3488 = vadd.f32 %v3452, %v3470
      %v3489 = vadd.f32 %v3453, %v3471
      %v3490 = vadd.f32 %v3454, %v3472
      %v3491 = vadd.f32 %v3455, %v3473
      %v3492 = vadd.f32 %v3456, %v3474
      %v3493 = vadd.f32 %v3457, %v3475
      %v3494 = vadd.f32 %v3458, %v3476
      %3495 = vst [vmem:[%s509] sm:$0xff] %v3477
      %3496 = vst [vmem:[%s509 + $0x8] sm:$0xff] %v3478
      %3497 = vst [vmem:[%s509 + $0x10] sm:$0xff] %v3479
      %3498 = vst [vmem:[%s509 + $0x18] sm:$0xff] %v3480
      %3499 = vst [vmem:[%s509 + $0x20] sm:$0xff] %v3481
      %3500 = vst [vmem:[%s509 + $0x28] sm:$0xff] %v3482
      %3501 = vst [vmem:[%s509 + $0x30] sm:$0xff] %v3483
      %3502 = vst [vmem:[%s509 + $0x38] sm:$0xff] %v3484
      %3503 = vst [vmem:[%s509 + $0x40] sm:$0xff] %v3485
      %3504 = vst [vmem:[%s509 + $0x48] sm:$0xff] %v3486
      %3505 = vst [vmem:[%s509 + $0x50] sm:$0xff] %v3487
      %3506 = vst [vmem:[%s509 + $0x58] sm:$0xff] %v3488
      %3507 = vst [vmem:[%s509 + $0x60] sm:$0xff] %v3489
      %3508 = vst [vmem:[%s509 + $0x68] sm:$0xff] %v3490
      %3509 = vst [vmem:[%s509 + $0x70] sm:$0xff] %v3491
      %3510 = vst [vmem:[%s509 + $0x78] sm:$0xff] %v3492
      %3511 = vst [vmem:[%s509 + $0x80] sm:$0xff] %v3493
      %3512 = vst [vmem:[%s509 + $0x88] sm:$0xff] %v3494
      %s3513 = smul.u32 18, %s27
      %p3514 = scmp.lt.s32.totalorder %s28, 1
      %s3515 = scalar_select %p3514, %s28, 1
      %p3516 = scmp.lt.s32.totalorder %s3513, 17
      %s3517 = scalar_select %p3516, %s3513, 17
      %s3518 = smul.addr %s3515, 18
      %s3519 = sadd.s32 %s3517, %s3518
      %s3520 = smul.addr %s3519, 8
      %s3521 = scalar_lea.vmem %s10, %s3520
      %s3522 = smul.u32 18, %s27
      %p3523 = scmp.lt.s32.totalorder %s28, 1
      %s3524 = scalar_select %p3523, %s28, 1
      %p3525 = scmp.lt.s32.totalorder %s3522, 17
      %s3526 = scalar_select %p3525, %s3522, 17
      %s3527 = smul.addr %s3524, 18
      %s3528 = sadd.s32 %s3526, %s3527
      %s3529 = smul.addr %s3528, 8
      %s3530 = scalar_lea.vmem %s11, %s3529
      // Predicated region
      $region61: #{_lambda_.2} parent=59 // pred_check
        %p3531 = pneg %p284
      $region62: #{_lambda_.2} parent=59 // pred_check_branch
        %3533 = sbr.rel (%p3531) target = $region64
      $region63: #{_lambda_.2} parent=59 // pred_region
        %s3534 = smul.u32 18, %s27
      $region64: #{_lambda_.2} parent=59 // pred_fallthru
        _
      // Predicated region
      $region65: #{_lambda_.2} parent=59 // pred_check
        %p3535 = pneg %p312
      $region66: #{_lambda_.2} parent=59 // pred_check_branch
        %3537 = sbr.rel (%p3535) target = $region68
      $region67: #{_lambda_.2} parent=59 // pred_region
        %s3538 = smul.u32 18, %s27
      $region68: #{_lambda_.2} parent=59 // pred_fallthru
        _
    $region60: #{_lambda_.2} parent=5 // pred_fallthru
      _
    %p3539 = scmp.le.s32.totalorder 2, %s18
    // Predicated region
    $region69: #{_lambda_.2} parent=5 // pred_check
      %p3540 = pneg %p3539
    $region70: #{_lambda_.2} parent=5 // pred_check_branch
      %3542 = sbr.rel (%p3540) target = $region72
    $region71: #{_lambda_.2} parent=5 // pred_region
      %s3543 = ssub.s32 %s18, 2
      // Predicated region
      $region73: #{_lambda_.2} parent=71 // pred_check
        %p3544 = pneg %p290
      $region74: #{_lambda_.2} parent=71 // pred_check_branch
        %3546 = sbr.rel (%p3544) target = $region76
      $region75: #{_lambda_.2} parent=71 // pred_region
        %s3547 = smul.u32 18, %s29
        %p3548 = scmp.lt.s32.totalorder %s30, 1
        %s3549 = scalar_select %p3548, %s30, 1
        %p3550 = scmp.lt.s32.totalorder %s3547, 17
        %s3551 = scalar_select %p3550, %s3547, 17
        %s3552 = smul.addr %s3549, 18
        %s3553 = sadd.s32 %s3551, %s3552
        %s3554 = smul.addr %s3553, 8
        %s3555 = scalar_lea.vmem %s10, %s3554
      $region76: #{_lambda_.2} parent=71 // pred_fallthru
        _
      // Predicated region
      $region77: #{_lambda_.2} parent=71 // pred_check
        %p3556 = pneg %p318
      $region78: #{_lambda_.2} parent=71 // pred_check_branch
        %3558 = sbr.rel (%p3556) target = $region80
      $region79: #{_lambda_.2} parent=71 // pred_region
        %s3559 = smul.u32 18, %s29
        %p3560 = scmp.lt.s32.totalorder %s30, 1
        %s3561 = scalar_select %p3560, %s30, 1
        %p3562 = scmp.lt.s32.totalorder %s3559, 17
        %s3563 = scalar_select %p3562, %s3559, 17
        %s3564 = smul.addr %s3561, 18
        %s3565 = sadd.s32 %s3563, %s3564
        %s3566 = smul.addr %s3565, 8
        %s3567 = scalar_lea.vmem %s11, %s3566
      $region80: #{_lambda_.2} parent=71 // pred_fallthru
        _
    $region72: #{_lambda_.2} parent=5 // pred_fallthru
      _
  $region6: #{_lambda_.2} parent=0 // loop_footer
    %s22 = sadd.s32 1, %s18
  $region7: #{_lambda_.2} parent=0 // loop_footer_branch
    %17 = sbr.rel target = $region3
  $region8: #{_lambda_.2} parent=0 // loop_exit
    _

// kernel: _lambda_.3
$region0: #{_lambda_.3}
  #allocation0 [shape = 'u32[]', space=smem, size = 0x4, offset = 0x4, fixed_abs, tag = 'smem constant byte address 0x4 - core index']
  #allocation1 [shape = 'u32[72,128]{1,0:T(1,128)}', space=vmem, size = 0x9000, scoped, tag = 'internal scratch']
  %s0 = inlined_call_operand.vmem [shape: f32[512,128], index: 0, kind: input, shape index: {}]
  %s1 = inlined_call_operand.vmem [shape: bf16[128,128], index: 1, kind: input, shape index: {}]
  %s2 = inlined_call_operand.vmem [shape: f32[1,128], index: 2, kind: input, shape index: {}]
  %s3 = inlined_call_operand.hbm [shape: f32[512,128], index: 3, kind: output, shape index: {}]
  %s4 = sld [smem:[#allocation0]]
  $region22: #{_lambda_.3} parent=0
    _
  %s6 = ssub.s32 1, %s4
  %s7 = scalar_select 0, %s6, %s4
  $region1: #{_lambda_.3} parent=0
    #allocation2 [shape = 'u8[262144]{0}', space=vmem, size = 0x40000, scoped, tag = 'output window, operand 0, single buffered']
    #allocation3 [shape = 's32[1]{0}', space=sflag, size = 0x4, scoped, tag = 'scoped memory for _lambda_.3']
    %8 = vsyncpa [#allocation3], 0
    // Predicated region
    $region2: #{_lambda_.3} parent=1 // pred_check
      _
    $region3: #{_lambda_.3} parent=1 // pred_check_branch
      %10 = sbr.rel (0) target = $region5
    $region4: #{_lambda_.3} parent=1 // pred_region
      _
    $region5: #{_lambda_.3} parent=1 // pred_fallthru
      _
    // Predicated region
    $region6: #{_lambda_.3} parent=1 // pred_check
      _
    $region7: #{_lambda_.3} parent=1 // pred_check_branch
      %12 = sbr.rel (0) target = $region9
    $region8: #{_lambda_.3} parent=1 // pred_region
      _
    $region9: #{_lambda_.3} parent=1 // pred_fallthru
      _
    // Predicated region
    $region10: #{_lambda_.3} parent=1 // pred_check
      _
    $region11: #{_lambda_.3} parent=1 // pred_check_branch
      %14 = sbr.rel (0) target = $region13
    $region12: #{_lambda_.3} parent=1 // pred_region
      _
    $region13: #{_lambda_.3} parent=1 // pred_fallthru
      _
    %v15 = vld [vmem:[%s0] sm:$0xff]
    %v16 = vld [vmem:[%s0 + $0x8] sm:$0xff]
    %v17 = vld [vmem:[%s0 + $0x10] sm:$0xff]
    %v18 = vld [vmem:[%s0 + $0x18] sm:$0xff]
    %v19 = vld [vmem:[%s0 + $0x20] sm:$0xff]
    %v20 = vld [vmem:[%s0 + $0x28] sm:$0xff]
    %v21 = vld [vmem:[%s0 + $0x30] sm:$0xff]
    %v22 = vld [vmem:[%s0 + $0x38] sm:$0xff]
    %v23 = vld [vmem:[%s0 + $0x40] sm:$0xff]
    %v24 = vld [vmem:[%s0 + $0x48] sm:$0xff]
    %v25 = vld [vmem:[%s0 + $0x50] sm:$0xff]
    %v26 = vld [vmem:[%s0 + $0x58] sm:$0xff]
    %v27 = vld [vmem:[%s0 + $0x60] sm:$0xff]
    %v28 = vld [vmem:[%s0 + $0x68] sm:$0xff]
    %v29 = vld [vmem:[%s0 + $0x70] sm:$0xff]
    %v30 = vld [vmem:[%s0 + $0x78] sm:$0xff]
    %v31 = vld [vmem:[%s0 + $0x80] sm:$0xff]
    %v32 = vld [vmem:[%s0 + $0x88] sm:$0xff]
    %v33 = vld [vmem:[%s0 + $0x90] sm:$0xff]
    %v34 = vld [vmem:[%s0 + $0x98] sm:$0xff]
    %v35 = vld [vmem:[%s0 + $0xa0] sm:$0xff]
    %v36 = vld [vmem:[%s0 + $0xa8] sm:$0xff]
    %v37 = vld [vmem:[%s0 + $0xb0] sm:$0xff]
    %v38 = vld [vmem:[%s0 + $0xb8] sm:$0xff]
    %v39 = vld [vmem:[%s0 + $0xc0] sm:$0xff]
    %v40 = vld [vmem:[%s0 + $0xc8] sm:$0xff]
    %v41 = vld [vmem:[%s0 + $0xd0] sm:$0xff]
    %v42 = vld [vmem:[%s0 + $0xd8] sm:$0xff]
    %v43 = vld [vmem:[%s0 + $0xe0] sm:$0xff]
    %v44 = vld [vmem:[%s0 + $0xe8] sm:$0xff]
    %v45 = vld [vmem:[%s0 + $0xf0] sm:$0xff]
    %v46 = vld [vmem:[%s0 + $0xf8] sm:$0xff]
    %v47 = vld [vmem:[%s0 + $0x100] sm:$0xff]
    %v48 = vld [vmem:[%s0 + $0x108] sm:$0xff]
    %v49 = vld [vmem:[%s0 + $0x110] sm:$0xff]
    %v50 = vld [vmem:[%s0 + $0x118] sm:$0xff]
    %v51 = vld [vmem:[%s0 + $0x120] sm:$0xff]
    %v52 = vld [vmem:[%s0 + $0x128] sm:$0xff]
    %v53 = vld [vmem:[%s0 + $0x130] sm:$0xff]
    %v54 = vld [vmem:[%s0 + $0x138] sm:$0xff]
    %v55 = vld [vmem:[%s0 + $0x140] sm:$0xff]
    %v56 = vld [vmem:[%s0 + $0x148] sm:$0xff]
    %v57 = vld [vmem:[%s0 + $0x150] sm:$0xff]
    %v58 = vld [vmem:[%s0 + $0x158] sm:$0xff]
    %v59 = vld [vmem:[%s0 + $0x160] sm:$0xff]
    %v60 = vld [vmem:[%s0 + $0x168] sm:$0xff]
    %v61 = vld [vmem:[%s0 + $0x170] sm:$0xff]
    %v62 = vld [vmem:[%s0 + $0x178] sm:$0xff]
    %v63 = vld [vmem:[%s0 + $0x180] sm:$0xff]
    %v64 = vld [vmem:[%s0 + $0x188] sm:$0xff]
    %v65 = vld [vmem:[%s0 + $0x190] sm:$0xff]
    %v66 = vld [vmem:[%s0 + $0x198] sm:$0xff]
    %v67 = vld [vmem:[%s0 + $0x1a0] sm:$0xff]
    %v68 = vld [vmem:[%s0 + $0x1a8] sm:$0xff]
    %v69 = vld [vmem:[%s0 + $0x1b0] sm:$0xff]
    %v70 = vld [vmem:[%s0 + $0x1b8] sm:$0xff]
    %v71 = vld [vmem:[%s0 + $0x1c0] sm:$0xff]
    %v72 = vld [vmem:[%s0 + $0x1c8] sm:$0xff]
    %v73 = vld [vmem:[%s0 + $0x1d0] sm:$0xff]
    %v74 = vld [vmem:[%s0 + $0x1d8] sm:$0xff]
    %v75 = vld [vmem:[%s0 + $0x1e0] sm:$0xff]
    %v76 = vld [vmem:[%s0 + $0x1e8] sm:$0xff]
    %v77 = vld [vmem:[%s0 + $0x1f0] sm:$0xff]
    %v78 = vld [vmem:[%s0 + $0x1f8] sm:$0xff]
    %v79 = vpack.c.bf16 %v16, %v15
    %v80 = vpack.c.bf16 %v18, %v17
    %v81 = vpack.c.bf16 %v20, %v19
    %v82 = vpack.c.bf16 %v22, %v21
    %v83 = vpack.c.bf16 %v24, %v23
    %v84 = vpack.c.bf16 %v26, %v25
    %v85 = vpack.c.bf16 %v28, %v27
    %v86 = vpack.c.bf16 %v30, %v29
    %v87 = vpack.c.bf16 %v32, %v31
    %v88 = vpack.c.bf16 %v34, %v33
    %v89 = vpack.c.bf16 %v36, %v35
    %v90 = vpack.c.bf16 %v38, %v37
    %v91 = vpack.c.bf16 %v40, %v39
    %v92 = vpack.c.bf16 %v42, %v41
    %v93 = vpack.c.bf16 %v44, %v43
    %v94 = vpack.c.bf16 %v46, %v45
    %v95 = vpack.c.bf16 %v48, %v47
    %v96 = vpack.c.bf16 %v50, %v49
    %v97 = vpack.c.bf16 %v52, %v51
    %v98 = vpack.c.bf16 %v54, %v53
    %v99 = vpack.c.bf16 %v56, %v55
    %v100 = vpack.c.bf16 %v58, %v57
    %v101 = vpack.c.bf16 %v60, %v59
    %v102 = vpack.c.bf16 %v62, %v61
    %v103 = vpack.c.bf16 %v64, %v63
    %v104 = vpack.c.bf16 %v66, %v65
    %v105 = vpack.c.bf16 %v68, %v67
    %v106 = vpack.c.bf16 %v70, %v69
    %v107 = vpack.c.bf16 %v72, %v71
    %v108 = vpack.c.bf16 %v74, %v73
    %v109 = vpack.c.bf16 %v76, %v75
    %v110 = vpack.c.bf16 %v78, %v77
    %v111 = vld [vmem:[%s1] sm:$0xf]
    %v112 = vld [vmem:[%s1 + $0x4] sm:$0xf]
    %v113 = vld [vmem:[%s1 + $0x8] sm:$0xf]
    %v114 = vld [vmem:[%s1 + $0xc] sm:$0xf]
    %v115 = vld [vmem:[%s1 + $0x10] sm:$0xf]
    %v116 = vld [vmem:[%s1 + $0x14] sm:$0xf]
    %v117 = vld [vmem:[%s1 + $0x18] sm:$0xf]
    %v118 = vld [vmem:[%s1 + $0x1c] sm:$0xf]
    %v119 = vld [vmem:[%s1 + $0x20] sm:$0xf]
    %v120 = vld [vmem:[%s1 + $0x24] sm:$0xf]
    %v121 = vld [vmem:[%s1 + $0x28] sm:$0xf]
    %v122 = vld [vmem:[%s1 + $0x2c] sm:$0xf]
    %v123 = vld [vmem:[%s1 + $0x30] sm:$0xf]
    %v124 = vld [vmem:[%s1 + $0x34] sm:$0xf]
    %v125 = vld [vmem:[%s1 + $0x38] sm:$0xf]
    %v126 = vld [vmem:[%s1 + $0x3c] sm:$0xf]
    %v127 = vld [vmem:[%s2] sm:$0x1]
    %v129 = vperm.slane %v127, 0
    %v147 = vunpack.c.l.b16 %v111
    %v148 = vunpack.c.l.b16 %v112
    %v149 = vunpack.c.l.b16 %v113
    %v150 = vunpack.c.l.b16 %v114
    %v151 = vunpack.c.l.b16 %v115
    %v152 = vunpack.c.l.b16 %v116
    %v153 = vunpack.c.l.b16 %v117
    %v154 = vunpack.c.l.b16 %v118
    %v155 = vunpack.c.l.b16 %v119
    %v156 = vunpack.c.l.b16 %v120
    %v157 = vunpack.c.l.b16 %v121
    %v158 = vunpack.c.l.b16 %v122
    %v159 = vunpack.c.l.b16 %v123
    %v160 = vunpack.c.l.b16 %v124
    %v161 = vunpack.c.l.b16 %v125
    %v162 = vunpack.c.l.b16 %v126
    %v163 = vpack.c.b16 %v148, %v147
    %v164 = vpack.c.b16 %v150, %v149
    %v165 = vpack.c.b16 %v152, %v151
    %v166 = vpack.c.b16 %v154, %v153
    %v167 = vpack.c.b16 %v156, %v155
    %v168 = vpack.c.b16 %v158, %v157
    %v169 = vpack.c.b16 %v160, %v159
    %v170 = vpack.c.b16 %v162, %v161
    %179 = vmatpush.bf16.msra.mxu0 %v170
    %180 = vmatpush.bf16.msra.mxu0 %v169
    %181 = vmatpush.bf16.msra.mxu0 %v168
    %182 = vmatpush.bf16.msra.mxu0 %v167
    %183 = vmatpush.bf16.msra.mxu0 %v166
    %184 = vmatpush.bf16.msra.mxu0 %v165
    %185 = vmatpush.bf16.msra.mxu0 %v164
    %186 = vmatpush.bf16.msra.mxu0 %v163
    %187 = vmatmul.bf16.gmra.mxu0 %v79
    %v188 = vpop.f32.mrf.mxu0
    %v189 = vadd.f32 %v129, %v188
    %v190 = vpop.f32.mrf.mxu0
    %v191 = vadd.f32 %v129, %v190
    %192 = vmatmul.bf16.gmra.mxu0 %v80
    %v193 = vpop.f32.mrf.mxu0
    %v194 = vadd.f32 %v129, %v193
    %v195 = vpop.f32.mrf.mxu0
    %v196 = vadd.f32 %v129, %v195
    %197 = vmatmul.bf16.gmra.mxu0 %v81
    %v198 = vpop.f32.mrf.mxu0
    %v199 = vadd.f32 %v129, %v198
    %v200 = vpop.f32.mrf.mxu0
    %v201 = vadd.f32 %v129, %v200
    %202 = vmatmul.bf16.gmra.mxu0 %v82
    %v203 = vpop.f32.mrf.mxu0
    %v204 = vadd.f32 %v129, %v203
    %v205 = vpop.f32.mrf.mxu0
    %v206 = vadd.f32 %v129, %v205
    %207 = vmatmul.bf16.gmra.mxu0 %v83
    %v208 = vpop.f32.mrf.mxu0
    %v209 = vadd.f32 %v129, %v208
    %v210 = vpop.f32.mrf.mxu0
    %v211 = vadd.f32 %v129, %v210
    %212 = vmatmul.bf16.gmra.mxu0 %v84
    %v213 = vpop.f32.mrf.mxu0
    %v214 = vadd.f32 %v129, %v213
    %v215 = vpop.f32.mrf.mxu0
    %v216 = vadd.f32 %v129, %v215
    %217 = vmatmul.bf16.gmra.mxu0 %v85
    %v218 = vpop.f32.mrf.mxu0
    %v219 = vadd.f32 %v129, %v218
    %v220 = vpop.f32.mrf.mxu0
    %v221 = vadd.f32 %v129, %v220
    %222 = vmatmul.bf16.gmra.mxu0 %v86
    %v223 = vpop.f32.mrf.mxu0
    %v224 = vadd.f32 %v129, %v223
    %v225 = vpop.f32.mrf.mxu0
    %v226 = vadd.f32 %v129, %v225
    %227 = vmatmul.bf16.gmra.mxu0 %v87
    %v228 = vpop.f32.mrf.mxu0
    %v229 = vadd.f32 %v129, %v228
    %v230 = vpop.f32.mrf.mxu0
    %v231 = vadd.f32 %v129, %v230
    %232 = vmatmul.bf16.gmra.mxu0 %v88
    %v233 = vpop.f32.mrf.mxu0
    %v234 = vadd.f32 %v129, %v233
    %v235 = vpop.f32.mrf.mxu0
    %v236 = vadd.f32 %v129, %v235
    %237 = vmatmul.bf16.gmra.mxu0 %v89
    %v238 = vpop.f32.mrf.mxu0
    %v239 = vadd.f32 %v129, %v238
    %v240 = vpop.f32.mrf.mxu0
    %v241 = vadd.f32 %v129, %v240
    %242 = vmatmul.bf16.gmra.mxu0 %v90
    %v243 = vpop.f32.mrf.mxu0
    %v244 = vadd.f32 %v129, %v243
    %v245 = vpop.f32.mrf.mxu0
    %v246 = vadd.f32 %v129, %v245
    %247 = vmatmul.bf16.gmra.mxu0 %v91
    %v248 = vpop.f32.mrf.mxu0
    %v249 = vadd.f32 %v129, %v248
    %v250 = vpop.f32.mrf.mxu0
    %v251 = vadd.f32 %v129, %v250
    %252 = vmatmul.bf16.gmra.mxu0 %v92
    %v253 = vpop.f32.mrf.mxu0
    %v254 = vadd.f32 %v129, %v253
    %v255 = vpop.f32.mrf.mxu0
    %v256 = vadd.f32 %v129, %v255
    %257 = vmatmul.bf16.gmra.mxu0 %v93
    %v258 = vpop.f32.mrf.mxu0
    %v259 = vadd.f32 %v129, %v258
    %v260 = vpop.f32.mrf.mxu0
    %v261 = vadd.f32 %v129, %v260
    %262 = vmatmul.bf16.gmra.mxu0 %v94
    %v263 = vpop.f32.mrf.mxu0
    %v264 = vadd.f32 %v129, %v263
    %v265 = vpop.f32.mrf.mxu0
    %v266 = vadd.f32 %v129, %v265
    %267 = vmatmul.bf16.gmra.mxu0 %v95
    %v268 = vpop.f32.mrf.mxu0
    %v269 = vadd.f32 %v129, %v268
    %v270 = vpop.f32.mrf.mxu0
    %v271 = vadd.f32 %v129, %v270
    %272 = vmatmul.bf16.gmra.mxu0 %v96
    %v273 = vpop.f32.mrf.mxu0
    %v274 = vadd.f32 %v129, %v273
    %v275 = vpop.f32.mrf.mxu0
    %v276 = vadd.f32 %v129, %v275
    %277 = vmatmul.bf16.gmra.mxu0 %v97
    %v278 = vpop.f32.mrf.mxu0
    %v279 = vadd.f32 %v129, %v278
    %v280 = vpop.f32.mrf.mxu0
    %v281 = vadd.f32 %v129, %v280
    %282 = vmatmul.bf16.gmra.mxu0 %v98
    %v283 = vpop.f32.mrf.mxu0
    %v284 = vadd.f32 %v129, %v283
    %v285 = vpop.f32.mrf.mxu0
    %v286 = vadd.f32 %v129, %v285
    %287 = vmatmul.bf16.gmra.mxu0 %v99
    %v288 = vpop.f32.mrf.mxu0
    %v289 = vadd.f32 %v129, %v288
    %v290 = vpop.f32.mrf.mxu0
    %v291 = vadd.f32 %v129, %v290
    %292 = vmatmul.bf16.gmra.mxu0 %v100
    %v293 = vpop.f32.mrf.mxu0
    %v294 = vadd.f32 %v129, %v293
    %v295 = vpop.f32.mrf.mxu0
    %v296 = vadd.f32 %v129, %v295
    %297 = vmatmul.bf16.gmra.mxu0 %v101
    %v298 = vpop.f32.mrf.mxu0
    %v299 = vadd.f32 %v129, %v298
    %v300 = vpop.f32.mrf.mxu0
    %v301 = vadd.f32 %v129, %v300
    %302 = vmatmul.bf16.gmra.mxu0 %v102
    %v303 = vpop.f32.mrf.mxu0
    %v304 = vadd.f32 %v129, %v303
    %v305 = vpop.f32.mrf.mxu0
    %v306 = vadd.f32 %v129, %v305
    %307 = vmatmul.bf16.gmra.mxu0 %v103
    %v308 = vpop.f32.mrf.mxu0
    %v309 = vadd.f32 %v129, %v308
    %v310 = vpop.f32.mrf.mxu0
    %v311 = vadd.f32 %v129, %v310
    %312 = vmatmul.bf16.gmra.mxu0 %v104
    %v313 = vpop.f32.mrf.mxu0
    %v314 = vadd.f32 %v129, %v313
    %v315 = vpop.f32.mrf.mxu0
    %v316 = vadd.f32 %v129, %v315
    %317 = vmatmul.bf16.gmra.mxu0 %v105
    %v318 = vpop.f32.mrf.mxu0
    %v319 = vadd.f32 %v129, %v318
    %v320 = vpop.f32.mrf.mxu0
    %v321 = vadd.f32 %v129, %v320
    %322 = vmatmul.bf16.gmra.mxu0 %v106
    %v323 = vpop.f32.mrf.mxu0
    %v324 = vadd.f32 %v129, %v323
    %v325 = vpop.f32.mrf.mxu0
    %v326 = vadd.f32 %v129, %v325
    %327 = vmatmul.bf16.gmra.mxu0 %v107
    %v328 = vpop.f32.mrf.mxu0
    %v329 = vadd.f32 %v129, %v328
    %v330 = vpop.f32.mrf.mxu0
    %v331 = vadd.f32 %v129, %v330
    %332 = vmatmul.bf16.gmra.mxu0 %v108
    %v333 = vpop.f32.mrf.mxu0
    %v334 = vadd.f32 %v129, %v333
    %v335 = vpop.f32.mrf.mxu0
    %v336 = vadd.f32 %v129, %v335
    %337 = vmatmul.bf16.gmra.mxu0 %v109
    %v338 = vpop.f32.mrf.mxu0
    %v339 = vadd.f32 %v129, %v338
    %v340 = vpop.f32.mrf.mxu0
    %v341 = vadd.f32 %v129, %v340
    %342 = vmatmul.bf16.gmra.mxu0 %v110
    %v343 = vpop.f32.mrf.mxu0
    %v344 = vadd.f32 %v129, %v343
    %v345 = vpop.f32.mrf.mxu0
    %v346 = vadd.f32 %v129, %v345
    %347 = vdwg.mxu0
    %348 = vst [vmem:[#allocation2] sm:$0xff] %v189
    %349 = vst [vmem:[#allocation2 + $0x8] sm:$0xff] %v191
    %350 = vst [vmem:[#allocation2 + $0x10] sm:$0xff] %v194
    %351 = vst [vmem:[#allocation2 + $0x18] sm:$0xff] %v196
    %352 = vst [vmem:[#allocation2 + $0x20] sm:$0xff] %v199
    %353 = vst [vmem:[#allocation2 + $0x28] sm:$0xff] %v201
    %354 = vst [vmem:[#allocation2 + $0x30] sm:$0xff] %v204
    %355 = vst [vmem:[#allocation2 + $0x38] sm:$0xff] %v206
    %356 = vst [vmem:[#allocation2 + $0x40] sm:$0xff] %v209
    %357 = vst [vmem:[#allocation2 + $0x48] sm:$0xff] %v211
    %358 = vst [vmem:[#allocation2 + $0x50] sm:$0xff] %v214
    %359 = vst [vmem:[#allocation2 + $0x58] sm:$0xff] %v216
    %360 = vst [vmem:[#allocation2 + $0x60] sm:$0xff] %v219
    %361 = vst [vmem:[#allocation2 + $0x68] sm:$0xff] %v221
    %362 = vst [vmem:[#allocation2 + $0x70] sm:$0xff] %v224
    %363 = vst [vmem:[#allocation2 + $0x78] sm:$0xff] %v226
    %364 = vst [vmem:[#allocation2 + $0x80] sm:$0xff] %v229
    %365 = vst [vmem:[#allocation2 + $0x88] sm:$0xff] %v231
    %366 = vst [vmem:[#allocation2 + $0x90] sm:$0xff] %v234
    %367 = vst [vmem:[#allocation2 + $0x98] sm:$0xff] %v236
    %368 = vst [vmem:[#allocation2 + $0xa0] sm:$0xff] %v239
    %369 = vst [vmem:[#allocation2 + $0xa8] sm:$0xff] %v241
    %370 = vst [vmem:[#allocation2 + $0xb0] sm:$0xff] %v244
    %371 = vst [vmem:[#allocation2 + $0xb8] sm:$0xff] %v246
    %372 = vst [vmem:[#allocation2 + $0xc0] sm:$0xff] %v249
    %373 = vst [vmem:[#allocation2 + $0xc8] sm:$0xff] %v251
    %374 = vst [vmem:[#allocation2 + $0xd0] sm:$0xff] %v254
    %375 = vst [vmem:[#allocation2 + $0xd8] sm:$0xff] %v256
    %376 = vst [vmem:[#allocation2 + $0xe0] sm:$0xff] %v259
    %377 = vst [vmem:[#allocation2 + $0xe8] sm:$0xff] %v261
    %378 = vst [vmem:[#allocation2 + $0xf0] sm:$0xff] %v264
    %379 = vst [vmem:[#allocation2 + $0xf8] sm:$0xff] %v266
    %380 = vst [vmem:[#allocation2 + $0x100] sm:$0xff] %v269
    %381 = vst [vmem:[#allocation2 + $0x108] sm:$0xff] %v271
    %382 = vst [vmem:[#allocation2 + $0x110] sm:$0xff] %v274
    %383 = vst [vmem:[#allocation2 + $0x118] sm:$0xff] %v276
    %384 = vst [vmem:[#allocation2 + $0x120] sm:$0xff] %v279
    %385 = vst [vmem:[#allocation2 + $0x128] sm:$0xff] %v281
    %386 = vst [vmem:[#allocation2 + $0x130] sm:$0xff] %v284
    %387 = vst [vmem:[#allocation2 + $0x138] sm:$0xff] %v286
    %388 = vst [vmem:[#allocation2 + $0x140] sm:$0xff] %v289
    %389 = vst [vmem:[#allocation2 + $0x148] sm:$0xff] %v291
    %390 = vst [vmem:[#allocation2 + $0x150] sm:$0xff] %v294
    %391 = vst [vmem:[#allocation2 + $0x158] sm:$0xff] %v296
    %392 = vst [vmem:[#allocation2 + $0x160] sm:$0xff] %v299
    %393 = vst [vmem:[#allocation2 + $0x168] sm:$0xff] %v301
    %394 = vst [vmem:[#allocation2 + $0x170] sm:$0xff] %v304
    %395 = vst [vmem:[#allocation2 + $0x178] sm:$0xff] %v306
    %396 = vst [vmem:[#allocation2 + $0x180] sm:$0xff] %v309
    %397 = vst [vmem:[#allocation2 + $0x188] sm:$0xff] %v311
    %398 = vst [vmem:[#allocation2 + $0x190] sm:$0xff] %v314
    %399 = vst [vmem:[#allocation2 + $0x198] sm:$0xff] %v316
    %400 = vst [vmem:[#allocation2 + $0x1a0] sm:$0xff] %v319
    %401 = vst [vmem:[#allocation2 + $0x1a8] sm:$0xff] %v321
    %402 = vst [vmem:[#allocation2 + $0x1b0] sm:$0xff] %v324
    %403 = vst [vmem:[#allocation2 + $0x1b8] sm:$0xff] %v326
    %404 = vst [vmem:[#allocation2 + $0x1c0] sm:$0xff] %v329
    %405 = vst [vmem:[#allocation2 + $0x1c8] sm:$0xff] %v331
    %406 = vst [vmem:[#allocation2 + $0x1d0] sm:$0xff] %v334
    %407 = vst [vmem:[#allocation2 + $0x1d8] sm:$0xff] %v336
    %408 = vst [vmem:[#allocation2 + $0x1e0] sm:$0xff] %v339
    %409 = vst [vmem:[#allocation2 + $0x1e8] sm:$0xff] %v341
    %410 = vst [vmem:[#allocation2 + $0x1f0] sm:$0xff] %v344
    %411 = vst [vmem:[#allocation2 + $0x1f8] sm:$0xff] %v346
    // Predicated region
    $region14: #{_lambda_.3} parent=1 // pred_check
      _
    $region15: #{_lambda_.3} parent=1 // pred_check_branch
      %413 = sbr.rel (0) target = $region17
    $region16: #{_lambda_.3} parent=1 // pred_region
      %415 = vsyncadd [#allocation3], 0
      %s416 = sshll.u32 [#allocation2], 4
      %s417 = int_to_ptr.vmem [resolvable:$true] %s416
      %s418 = sshll.u32 %s3, 4
      %s419 = int_to_ptr.hbm [resolvable:$true] %s418
      %424 = dma.vmem_to_hbm [thread:$0]  %s417, 8192, %s419, [#allocation3], 128, 128, 8
    $region17: #{_lambda_.3} parent=1 // pred_fallthru
      _
    // Predicated region
    $region18: #{_lambda_.3} parent=1 // pred_check
      _
    $region19: #{_lambda_.3} parent=1 // pred_check_branch
      %426 = sbr.rel (0) target = $region21
    $region20: #{_lambda_.3} parent=1 // pred_region
      %428 = dma.done [#allocation3], 8192
    $region21: #{_lambda_.3} parent=1 // pred_fallthru
      _
    %429 = vsyncpa [#allocation3], 1

</llo_original>
